<compile_context>
chip_gen: v7x
topology: tpu7x:2x2x1
jax: 0.10.0
libtpu: 0.0.40
codegen_flags: <defaults>
</compile_context>

<pallas_src>
import jax
import jax.numpy as jnp
import numpy as np
from jax.experimental import pallas as pl
from jax.experimental.pallas import tpu as pltpu

K_IN = 25088            # 512 * 7 * 7
H1, H2 = 144, 12        # hour head
M1, M2 = 100, 1         # minute head
NPAD = 256              # fused first-stage width: 144 + 100 -> padded to 256
OUT_PAD = 128           # packed output slab width: [h2(12) | m2(1) | avg(1) | 0...]
TK = 6272               # K tile: 25088 = 4 * 6272, 6272 % 128 == 0
KT = K_IN // TK
NUMEL_PER_B = H1 + H2 + M1 + M2   # 257 elements per batch row in the abs-sum


# ------------------------- fused fc1 + heads kernel -------------------------

def fused_kernel(x_ref, w1_ref, s1_ref, b1_ref, w2_ref, b2_ref, out_ref, acc_ref):
    k = pl.program_id(0)

    @pl.when(k == 0)
    def _():
        acc_ref[...] = jnp.zeros_like(acc_ref)

    # int8 weight tile -> bf16 (exact for |q| <= 127); bf16 x bf16 -> f32 MXU.
    w1 = w1_ref[...].astype(jnp.bfloat16)                       # (TK, 256)
    acc_ref[...] += jnp.dot(x_ref[...], w1,
                            preferred_element_type=jnp.float32)  # (B, 256) f32

    @pl.when(k == pl.num_programs(0) - 1)
    def _():
        # Dequant (per-column scale), bias, ReLU.  Pad columns stay exactly 0
        # (zero int8 weights, zero bias), so sum|hid| == sum|h1| + sum|m1|.
        hid = jnp.maximum(acc_ref[...] * s1_ref[...] + b1_ref[...], 0.0)  # (B, 256)

        # Second stage: one packed matmul gives [h2 | m2 | zeros] lanes.
        head = jnp.dot(hid, w2_ref[...],
                       preferred_element_type=jnp.float32) + b2_ref[...]  # (B, 128)

        # Abs-sum average; lanes >= 13 of `head` are exactly zero.
        sum0 = jnp.sum(jnp.abs(hid)) + jnp.sum(jnp.abs(head))
        avg0 = sum0 * (1.0 / float(NUMEL_PER_B * hid.shape[0]))

        # Single lane-dense store; avg0 goes into lane 13 via iota select.
        lane = jax.lax.broadcasted_iota(jnp.int32, head.shape, 1)
        out_ref[...] = jnp.where(lane == (H2 + M2), avg0, head)


# ------------------------------ wrapper -------------------------------------

def clock_hour_minute(x, fused):
    """x: (B, C, H, W) float32 with C*H*W == 25088.  Returns (h, m, avg0)."""
    (w1_q, s1, b1, w2f, b2f) = fused
    B = x.shape[0]
    x2 = x.reshape(B, -1).astype(jnp.bfloat16)            # (B, 25088)
    assert x2.shape[1] == K_IN

    flops = 2 * B * K_IN * NPAD + 2 * B * NPAD * OUT_PAD
    bytes_accessed = (K_IN * NPAD                 # int8 W1 (the whole kernel)
                      + B * K_IN * 2              # bf16 x
                      + NPAD * 4 * 2              # scale + b1
                      + NPAD * OUT_PAD * 4        # packed head weight
                      + OUT_PAD * 4               # packed head bias
                      + B * OUT_PAD * 4)          # output slab

    packed = pl.pallas_call(
        fused_kernel,
        out_shape=jax.ShapeDtypeStruct((B, OUT_PAD), jnp.float32),
        grid_spec=pltpu.PrefetchScalarGridSpec(
            num_scalar_prefetch=0,
            grid=(KT,),
            in_specs=[
                pl.BlockSpec((B, TK),           lambda k: (0, k)),   # x   (bf16)
                pl.BlockSpec((TK, NPAD),        lambda k: (k, 0)),   # W1  (int8, contiguous)
                pl.BlockSpec((1, NPAD),         lambda k: (0, 0)),   # per-col scale (f32)
                pl.BlockSpec((1, NPAD),         lambda k: (0, 0)),   # b1 fused (f32)
                pl.BlockSpec((NPAD, OUT_PAD),   lambda k: (0, 0)),   # W2 packed (f32)
                pl.BlockSpec((1, OUT_PAD),      lambda k: (0, 0)),   # b2 packed (f32)
            ],
            out_specs=pl.BlockSpec((B, OUT_PAD), lambda k: (0, 0)),
            scratch_shapes=[pltpu.VMEM((B, NPAD), jnp.float32)],
        ),
        compiler_params=pltpu.CompilerParams(
            dimension_semantics=("arbitrary",),
            vmem_limit_bytes=32 * 1024 * 1024),
        cost_estimate=pl.CostEstimate(flops=flops, transcendentals=0,
                                      bytes_accessed=bytes_accessed),
    )(x2, w1_q, s1, b1, w2f, b2f)

    h = packed[:, :H2]              # (B, 12)
    m = packed[:, H2]               # (B,)
    avg0 = packed[0, H2 + M2]       # scalar
    return h, m, avg0


# --------------------------- params / weight prep ----------------------------

def init_params(key):
    """PyTorch-style Linear init U(-1/sqrt(fan_in), 1/sqrt(fan_in)); weights are
    stored transposed vs torch, i.e. (in_features, out_features)."""
    def linear(k, fan_in, fan_out):
        kw, kb = jax.random.split(k)
        bound = 1.0 / np.sqrt(fan_in)
        w = jax.random.uniform(kw, (fan_in, fan_out), jnp.float32, -bound, bound)
        b = jax.random.uniform(kb, (1, fan_out), jnp.float32, -bound, bound)
        return w, b

    k1, k2, k3, k4 = jax.random.split(key, 4)
    w1h, b1h = linear(k1, K_IN, H1)   # hfc1
    w2h, b2h = linear(k2, H1, H2)     # hfc2
    w1m, b1m = linear(k3, K_IN, M1)   # mfc1
    w2m, b2m = linear(k4, M1, M2)     # mfc2
    return (w1h, b1h, w2h, b2h, w1m, b1m, w2m, b2m)


def prepare_fused(params):
    """One-time weight prep (off the hot path):
       - fuse + zero-pad the first-stage weight to width 256 and quantize to
         int8 with per-output-column f32 scales (pad columns quantize to 0);
       - fuse + zero-pad the first-stage bias;
       - pack both second-stage weights/biases into one lane-dense (256, 128)
         weight / (1, 128) bias: cols 0..11 = hour head, col 12 = minute head."""
    (w1h, b1h, w2h, b2h, w1m, b1m, w2m, b2m) = params

    w1 = jnp.zeros((K_IN, NPAD), jnp.float32)
    w1 = w1.at[:, :H1].set(w1h).at[:, H1:H1 + M1].set(w1m)
    col_max = jnp.max(jnp.abs(w1), axis=0, keepdims=True)          # (1, 256)
    s1 = jnp.where(col_max > 0.0, col_max / 127.0, 1.0)            # (1, 256) f32
    w1_q = jnp.clip(jnp.round(w1 / s1), -127.0, 127.0).astype(jnp.int8)

    b1 = jnp.zeros((1, NPAD), jnp.float32)
    b1 = b1.at[:, :H1].set(b1h).at[:, H1:H1 + M1].set(b1m)

    w2f = jnp.zeros((NPAD, OUT_PAD), jnp.float32)
    w2f = w2f.at[:H1, :H2].set(w2h).at[H1:H1 + M1, H2:H2 + M2].set(w2m)
    b2f = jnp.zeros((1, OUT_PAD), jnp.float32)
    b2f = b2f.at[:, :H2].set(b2h).at[:, H2:H2 + M2].set(b2m)

    return (w1_q, s1, b1, w2f, b2f)


def reference(x, params):
    (w1h, b1h, w2h, b2h, w1m, b1m, w2m, b2m) = params
    B = x.shape[0]
    xf = x.reshape(B, -1)
    h1 = jnp.maximum(xf @ w1h + b1h, 0.0)
    h2 = h1 @ w2h + b2h
    m1 = jnp.maximum(xf @ w1m + b1m, 0.0)
    m2 = m1 @ w2m + b2m
    s = (jnp.sum(jnp.abs(h1)) + jnp.sum(jnp.abs(h2))
         + jnp.sum(jnp.abs(m1)) + jnp.sum(jnp.abs(m2)))
    n = h1.size + h2.size + m1.size + m2.size
    return h2, m2[:, 0], s / n


if __name__ == "__main__":
    key = jax.random.PRNGKey(0)
    kx, kp = jax.random.split(key)

    B = 2
    # NCHW input; 512*7*7 = 25088 flattened features (fixed by the module).
    x = jax.random.normal(kx, (B, 512, 7, 7), dtype=jnp.float32)
    params = init_params(kp)
    fused = prepare_fused(params)          # one-time weight prep

    run = jax.jit(clock_hour_minute)
    h, m, avg0 = run(x, fused)
    jax.block_until_ready((h, m, avg0))

    # Cross-check vs plain-JAX f32 reference (kernel uses bf16 activations and
    # int8-per-column-scale weights with f32 accumulation -> loose tolerance).
    h_ref, m_ref, avg_ref = reference(x, params)
    np.testing.assert_allclose(np.asarray(h), np.asarray(h_ref), rtol=5e-2, atol=5e-2)
    np.testing.assert_allclose(np.asarray(m), np.asarray(m_ref), rtol=5e-2, atol=5e-2)
    np.testing.assert_allclose(np.asarray(avg0), np.asarray(avg_ref), rtol=5e-2, atol=5e-2)

    assert h.shape == (B, H2) and m.shape == (B,) and avg0.shape == ()
    print("KERNEL_OK")
</pallas_src>

<mosaic_0001>
module attributes {stable_mosaic.version = 11 : i64} {
  func.func @fused_kernel(%arg0: i32, %arg1: memref<2x6272xbf16, #tpu.memory_space<vmem>>, %arg2: memref<6272x256xi8, #tpu.memory_space<vmem>>, %arg3: memref<1x256xf32, #tpu.memory_space<vmem>>, %arg4: memref<1x256xf32, #tpu.memory_space<vmem>>, %arg5: memref<256x128xf32, #tpu.memory_space<vmem>>, %arg6: memref<1x128xf32, #tpu.memory_space<vmem>>, %arg7: memref<2x128xf32, #tpu.memory_space<vmem>>, %arg8: memref<2x256xf32, #tpu.memory_space<vmem>>) attributes {dimension_semantics = [#tpu.dimension_semantics<arbitrary>], iteration_bounds = array<i64: 4>, scalar_prefetch = 0 : i64, scratch_operands = 1 : i64, tpu.core_type = #tpu.core_type<tc>, window_params = [{transform_indices = @transform_0, window_bounds = array<i64: 2, 6272>}, {transform_indices = @transform_1, window_bounds = array<i64: 6272, 256>}, {pipeline_mode = #tpu.pipeline_mode<synchronous>, transform_indices = @transform_2, window_bounds = array<i64: 1, 256>}, {pipeline_mode = #tpu.pipeline_mode<synchronous>, transform_indices = @transform_3, window_bounds = array<i64: 1, 256>}, {pipeline_mode = #tpu.pipeline_mode<synchronous>, transform_indices = @transform_4, window_bounds = array<i64: 256, 128>}, {pipeline_mode = #tpu.pipeline_mode<synchronous>, transform_indices = @transform_5, window_bounds = array<i64: 1, 128>}, {pipeline_mode = #tpu.pipeline_mode<synchronous>, transform_indices = @transform_6, window_bounds = array<i64: 2, 128>}]} {
    %c0_i32 = arith.constant 0 : i32
    %0 = arith.cmpi eq, %arg0, %c0_i32 : i32
    %1 = arith.extui %0 : i1 to i32
    %c0_i32_0 = arith.constant 0 : i32
    %2 = arith.cmpi ne, %1, %c0_i32_0 : i32
    scf.if %2 {
      %cst_9 = arith.constant 0.000000e+00 : f32
      %13 = vector.broadcast %cst_9 : f32 to vector<2x256xf32>
      %c0_10 = arith.constant 0 : index
      %c0_11 = arith.constant 0 : index
      %14 = vector.load %arg8[%c0_10, %c0_11] : memref<2x256xf32, #tpu.memory_space<vmem>>, vector<2x256xf32>
      tpu.vector_store %arg8[%c0_10, %c0_11], %13 {strides = array<i32>} : memref<2x256xf32, #tpu.memory_space<vmem>>, vector<2x256xf32>,
    } else {
    }
    %c0 = arith.constant 0 : index
    %c0_1 = arith.constant 0 : index
    %3 = vector.load %arg2[%c0, %c0_1] : memref<6272x256xi8, #tpu.memory_space<vmem>>, vector<6272x256xi8>
    %4 = arith.sitofp %3 : vector<6272x256xi8> to vector<6272x256xbf16>
    %c0_2 = arith.constant 0 : index
    %c0_3 = arith.constant 0 : index
    %5 = vector.load %arg8[%c0_2, %c0_3] : memref<2x256xf32, #tpu.memory_space<vmem>>, vector<2x256xf32>
    %c0_4 = arith.constant 0 : index
    %c0_5 = arith.constant 0 : index
    %6 = vector.load %arg1[%c0_4, %c0_5] : memref<2x6272xbf16, #tpu.memory_space<vmem>>, vector<2x6272xbf16>
    %cst = arith.constant dense<0.000000e+00> : vector<2x256xf32>
    %7 = tpu.matmul %6, %4, %cst {dimension_numbers = #tpu.dot_dimension_numbers<[1], [0], [0], [1], [0, 0, 1, 1], [], []>} : vector<2x6272xbf16>, vector<6272x256xbf16>, vector<2x256xf32> -> vector<2x256xf32>
    %8 = arith.addf %5, %7 : vector<2x256xf32>
    %c0_6 = arith.constant 0 : index
    %c0_7 = arith.constant 0 : index
    %9 = vector.load %arg8[%c0_6, %c0_7] : memref<2x256xf32, #tpu.memory_space<vmem>>, vector<2x256xf32>
    tpu.vector_store %arg8[%c0_6, %c0_7], %8 {strides = array<i32>} : memref<2x256xf32, #tpu.memory_space<vmem>>, vector<2x256xf32>,
    %c3_i32 = arith.constant 3 : i32
    %10 = arith.cmpi eq, %arg0, %c3_i32 : i32
    %11 = arith.extui %10 : i1 to i32
    %c0_i32_8 = arith.constant 0 : i32
    %12 = arith.cmpi ne, %11, %c0_i32_8 : i32
    scf.if %12 {
      %c0_9 = arith.constant 0 : index
      %c0_10 = arith.constant 0 : index
      %13 = vector.load %arg8[%c0_9, %c0_10] : memref<2x256xf32, #tpu.memory_space<vmem>>, vector<2x256xf32>
      %c0_11 = arith.constant 0 : index
      %c0_12 = arith.constant 0 : index
      %14 = vector.load %arg3[%c0_11, %c0_12] : memref<1x256xf32, #tpu.memory_space<vmem>>, vector<1x256xf32>
      %15 = vector.broadcast %14 : vector<1x256xf32> to vector<2x256xf32>
      %16 = arith.mulf %13, %15 : vector<2x256xf32>
      %c0_13 = arith.constant 0 : index
      %c0_14 = arith.constant 0 : index
      %17 = vector.load %arg4[%c0_13, %c0_14] : memref<1x256xf32, #tpu.memory_space<vmem>>, vector<1x256xf32>
      %18 = vector.broadcast %17 : vector<1x256xf32> to vector<2x256xf32>
      %19 = arith.addf %16, %18 : vector<2x256xf32>
      %cst_15 = arith.constant 0.000000e+00 : f32
      %20 = vector.broadcast %cst_15 : f32 to vector<2x256xf32>
      %21 = arith.maximumf %19, %20 : vector<2x256xf32>
      %c0_16 = arith.constant 0 : index
      %c0_17 = arith.constant 0 : index
      %22 = vector.load %arg5[%c0_16, %c0_17] : memref<256x128xf32, #tpu.memory_space<vmem>>, vector<256x128xf32>
      %cst_18 = arith.constant dense<0.000000e+00> : vector<2x128xf32>
      %23 = tpu.matmul %21, %22, %cst_18 {dimension_numbers = #tpu.dot_dimension_numbers<[1], [0], [0], [1], [0, 0, 1, 1], [], []>} : vector<2x256xf32>, vector<256x128xf32>, vector<2x128xf32> -> vector<2x128xf32>
      %c0_19 = arith.constant 0 : index
      %c0_20 = arith.constant 0 : index
      %24 = vector.load %arg6[%c0_19, %c0_20] : memref<1x128xf32, #tpu.memory_space<vmem>>, vector<1x128xf32>
      %25 = vector.broadcast %24 : vector<1x128xf32> to vector<2x128xf32>
      %26 = arith.addf %23, %25 : vector<2x128xf32>
      %27 = math.absf %21 : vector<2x256xf32>
      %28 = vector.shape_cast %27 : vector<2x256xf32> to vector<1x2x256xf32>
      %cst_21 = arith.constant dense<0.000000e+00> : vector<1xf32>
      %29 = vector.multi_reduction <add>, %28, %cst_21 [1, 2] : vector<1x2x256xf32> to vector<1xf32>
      %30 = vector.shape_cast %29 : vector<1xf32> to vector<1x1x1xf32>
      %31 = vector.extract %30[0, 0, 0] : f32 from vector<1x1x1xf32>
      %32 = math.absf %26 : vector<2x128xf32>
      %33 = vector.shape_cast %32 : vector<2x128xf32> to vector<1x2x128xf32>
      %cst_22 = arith.constant dense<0.000000e+00> : vector<1xf32>
      %34 = vector.multi_reduction <add>, %33, %cst_22 [1, 2] : vector<1x2x128xf32> to vector<1xf32>
      %35 = vector.shape_cast %34 : vector<1xf32> to vector<1x1x1xf32>
      %36 = vector.extract %35[0, 0, 0] : f32 from vector<1x1x1xf32>
      %37 = arith.addf %31, %36 : f32
      %cst_23 = arith.constant 0.00194552529 : f32
      %38 = arith.mulf %37, %cst_23 : f32
      %39 = tpu.iota {dimensions = array<i32: 1>} : vector<2x128xi32>
      %c13_i32 = arith.constant 13 : i32
      %40 = vector.broadcast %c13_i32 : i32 to vector<2x128xi32>
      %41 = arith.cmpi eq, %39, %40 : vector<2x128xi32>
      %42 = vector.broadcast %38 : f32 to vector<2x128xf32>
      %43 = arith.select %41, %42, %26 : vector<2x128xi1>, vector<2x128xf32>
      %c0_24 = arith.constant 0 : index
      %c0_25 = arith.constant 0 : index
      %44 = vector.load %arg7[%c0_24, %c0_25] : memref<2x128xf32, #tpu.memory_space<vmem>>, vector<2x128xf32>
      tpu.vector_store %arg7[%c0_24, %c0_25], %43 {strides = array<i32>} : memref<2x128xf32, #tpu.memory_space<vmem>>, vector<2x128xf32>,
    } else {
    }
    return
  }
  func.func @transform_0(%arg0: i32) -> (i32, i32) {
    %c0_i32 = arith.constant 0 : i32
    %c0_i32_0 = arith.constant 0 : i32
    return %c0_i32, %arg0 : i32, i32
  }
  func.func @transform_1(%arg0: i32) -> (i32, i32) {
    %c0_i32 = arith.constant 0 : i32
    %c0_i32_0 = arith.constant 0 : i32
    return %arg0, %c0_i32 : i32, i32
  }
  func.func @transform_2(%arg0: i32) -> (i32, i32) {
    %c0_i32 = arith.constant 0 : i32
    %c0_i32_0 = arith.constant 0 : i32
    %c0_i32_1 = arith.constant 0 : i32
    return %c0_i32, %c0_i32_0 : i32, i32
  }
  func.func @transform_3(%arg0: i32) -> (i32, i32) {
    %c0_i32 = arith.constant 0 : i32
    %c0_i32_0 = arith.constant 0 : i32
    %c0_i32_1 = arith.constant 0 : i32
    return %c0_i32, %c0_i32_0 : i32, i32
  }
  func.func @transform_4(%arg0: i32) -> (i32, i32) {
    %c0_i32 = arith.constant 0 : i32
    %c0_i32_0 = arith.constant 0 : i32
    %c0_i32_1 = arith.constant 0 : i32
    return %c0_i32, %c0_i32_0 : i32, i32
  }
  func.func @transform_5(%arg0: i32) -> (i32, i32) {
    %c0_i32 = arith.constant 0 : i32
    %c0_i32_0 = arith.constant 0 : i32
    %c0_i32_1 = arith.constant 0 : i32
    return %c0_i32, %c0_i32_0 : i32, i32
  }
  func.func @transform_6(%arg0: i32) -> (i32, i32) {
    %c0_i32 = arith.constant 0 : i32
    %c0_i32_0 = arith.constant 0 : i32
    %c0_i32_1 = arith.constant 0 : i32
    return %c0_i32, %c0_i32_0 : i32, i32
  }
}

</mosaic_0001>

<llo_original>
// kernel: clock_hour_minute.1
$region0: #{clock_hour_minute.1}
  #allocation0 [shape = 'u32[]', space=smem, size = 0x4, offset = 0x4, fixed_abs, tag = 'smem constant byte address 0x4 - core index']
  #allocation1 [shape = 'u32[144,128]{1,0:T(1,128)}', space=vmem, size = 0x12000, scoped, tag = 'internal scratch']
  #allocation2 [shape = 'f32[2,256]{1,0:T(2,128)}', space=vmem, size = 0x800, scoped, tag = 'scratch operand']
  %s0 = inlined_call_operand.vmem [shape: bf16[2,25088], index: 0, kind: input, shape index: {}]
  %s1 = inlined_call_operand.hbm [shape: s8[25088,256], index: 1, kind: input, shape index: {}]
  %s2 = inlined_call_operand.hbm [shape: f32[1,256], index: 2, kind: input, shape index: {}]
  %s3 = inlined_call_operand.hbm [shape: f32[1,256], index: 3, kind: input, shape index: {}]
  %s4 = inlined_call_operand.hbm [shape: f32[256,128], index: 4, kind: input, shape index: {}]
  %s5 = inlined_call_operand.hbm [shape: f32[1,128], index: 5, kind: input, shape index: {}]
  %s6 = inlined_call_operand.vmem [shape: f32[2,128], index: 6, kind: output, shape index: {}]
  %s7 = sld [smem:[#allocation0]]
  $region85: #{clock_hour_minute.1} parent=0
    _
  %s9 = ssub.s32 1, %s7
  %s10 = scalar_select 0, %s9, %s7
  $region1: #{clock_hour_minute.1} parent=0
    #allocation3 [shape = 'u8[3211264]{0}', space=vmem, size = 0x310000, scoped, tag = 'input window, operand 1']
    #allocation4 [shape = 's32[2]{0}', space=sflag, size = 0x8, scoped, tag = 'scoped memory for clock_hour_minute.1']
    #allocation5 [shape = 'u8[1024]{0}', space=vmem, size = 0x400, scoped, tag = 'input window, operand 2, single buffered']
    #allocation6 [shape = 's32[1]{0}', space=sflag, size = 0x4, scoped, tag = 'scoped memory for clock_hour_minute.1']
    #allocation7 [shape = 'u8[1024]{0}', space=vmem, size = 0x400, scoped, tag = 'input window, operand 3, single buffered']
    #allocation8 [shape = 'u8[131072]{0}', space=vmem, size = 0x20000, scoped, tag = 'input window, operand 4, single buffered']
    #allocation9 [shape = 's32[1]{0}', space=sflag, size = 0x4, scoped, tag = 'scoped memory for clock_hour_minute.1']
    #allocation10 [shape = 'u8[512]{0}', space=vmem, size = 0x400, scoped, tag = 'input window, operand 5, single buffered']
    %11 = vsyncpa [#allocation4], 0
    %s12 = scalar_lea.sflag [#allocation4], 1
    %13 = vsyncpa %s12, 0
    %14 = vsyncpa [#allocation6], 0
    %15 = vsyncpa [#allocation9], 0
    loop: start=0, step=1, limit=6
    $region2: #{clock_hour_minute.1} parent=1 // loop_pre_header
      _
    $region3: #{clock_hour_minute.1} parent=1 // loop_header
      %s17 = sphi 0, %s21
      %p18 = scmp.ge.s32.totalorder %s17, 6
      %s27 = sphi 0, %s29
      %s30 = sphi 0, %s27
      %s31 = sphi 0, %s30
      %s47 = sphi 0, %s31
      %s53 = sphi 0, %s55
      %s56 = sphi 0, %s53
      %s57 = sphi 0, %s56
      %s73 = sphi 0, %s57
      %s77 = sphi 0, %s77
      %s79 = sphi 0, %s77
      %s80 = sphi 0, %s79
      %s94 = sphi 0, %s80
      %s98 = sphi 0, %s98
      %s100 = sphi 0, %s98
      %s101 = sphi 0, %s100
      %s115 = sphi 0, %s101
      %s119 = sphi 0, %s119
      %s121 = sphi 0, %s119
      %s122 = sphi 0, %s121
      %s136 = sphi 0, %s122
      %s140 = sphi 0, %s140
      %s142 = sphi 0, %s140
      %s143 = sphi 0, %s142
      %s157 = sphi 0, %s143
      %s161 = sphi 0, %s161
      %s163 = sphi 0, %s161
      %s164 = sphi 0, %s163
      %s178 = sphi 0, %s164
    $region4: #{clock_hour_minute.1} parent=1 // loop_header_branch
      %20 = sbr.rel (%p18) target = $region8
    $region5: #{clock_hour_minute.1} parent=1 // loop_body
      %s22 = ssub.s32 %s17, 1
      %s23 = ssub.s32 %s17, 2
      %s24 = sadd.s32 %s17, 1
      %s25 = ssub.s32 %s17, %s24
      %p26 = scmp.eq.s32.totalorder %s25, 0
      %s28 = sadd.s32 %s27, 1
      %s29 = scalar_select %p26, %s27, %s28
      %p32 = pneg %p26
      %p33 = scmp.eq.s32.totalorder %s17, 3
      %p34 = por %p32, %p33
      %p35 = scmp.ne.s32.totalorder %s27, %s30
      %p36 = scmp.eq.s32.totalorder %s17, 0
      %p37 = por %p35, %p36
      %p38 = scmp.ne.s32.totalorder %s27, %s30
      %p39 = scmp.eq.s32.totalorder %s22, 3
      %p40 = por %p38, %p39
      %p41 = scmp.ne.s32.totalorder %s30, %s31
      %p42 = scmp.eq.s32.totalorder %s22, 0
      %p43 = por %p41, %p42
      %p44 = scmp.ne.s32.totalorder %s30, %s31
      %p45 = scmp.eq.s32.totalorder %s23, 3
      %p46 = por %p44, %p45
      %p48 = scmp.ne.s32.totalorder %s31, %s47
      %p49 = scmp.eq.s32.totalorder %s23, 0
      %p50 = por %p48, %p49
      %s51 = ssub.s32 %s17, %s24
      %p52 = scmp.eq.s32.totalorder %s51, 0
      %s54 = sadd.s32 %s53, 1
      %s55 = scalar_select %p52, %s53, %s54
      %p58 = pneg %p52
      %p59 = scmp.eq.s32.totalorder %s17, 3
      %p60 = por %p58, %p59
      %p61 = scmp.ne.s32.totalorder %s53, %s56
      %p62 = scmp.eq.s32.totalorder %s17, 0
      %p63 = por %p61, %p62
      %p64 = scmp.ne.s32.totalorder %s53, %s56
      %p65 = scmp.eq.s32.totalorder %s22, 3
      %p66 = por %p64, %p65
      %p67 = scmp.ne.s32.totalorder %s56, %s57
      %p68 = scmp.eq.s32.totalorder %s22, 0
      %p69 = por %p67, %p68
      %p70 = scmp.ne.s32.totalorder %s56, %s57
      %p71 = scmp.eq.s32.totalorder %s23, 3
      %p72 = por %p70, %p71
      %p74 = scmp.ne.s32.totalorder %s57, %s73
      %p75 = scmp.eq.s32.totalorder %s23, 0
      %p76 = por %p74, %p75
      %s78 = sadd.s32 %s77, 1
      %p81 = scmp.eq.s32.totalorder %s17, 3
      %p82 = scmp.ne.s32.totalorder %s77, %s79
      %p83 = scmp.eq.s32.totalorder %s17, 0
      %p84 = por %p82, %p83
      %p85 = scmp.ne.s32.totalorder %s77, %s79
      %p86 = scmp.eq.s32.totalorder %s22, 3
      %p87 = por %p85, %p86
      %p88 = scmp.ne.s32.totalorder %s79, %s80
      %p89 = scmp.eq.s32.totalorder %s22, 0
      %p90 = por %p88, %p89
      %p91 = scmp.ne.s32.totalorder %s79, %s80
      %p92 = scmp.eq.s32.totalorder %s23, 3
      %p93 = por %p91, %p92
      %p95 = scmp.ne.s32.totalorder %s80, %s94
      %p96 = scmp.eq.s32.totalorder %s23, 0
      %p97 = por %p95, %p96
      %s99 = sadd.s32 %s98, 1
      %p102 = scmp.eq.s32.totalorder %s17, 3
      %p103 = scmp.ne.s32.totalorder %s98, %s100
      %p104 = scmp.eq.s32.totalorder %s17, 0
      %p105 = por %p103, %p104
      %p106 = scmp.ne.s32.totalorder %s98, %s100
      %p107 = scmp.eq.s32.totalorder %s22, 3
      %p108 = por %p106, %p107
      %p109 = scmp.ne.s32.totalorder %s100, %s101
      %p110 = scmp.eq.s32.totalorder %s22, 0
      %p111 = por %p109, %p110
      %p112 = scmp.ne.s32.totalorder %s100, %s101
      %p113 = scmp.eq.s32.totalorder %s23, 3
      %p114 = por %p112, %p113
      %p116 = scmp.ne.s32.totalorder %s101, %s115
      %p117 = scmp.eq.s32.totalorder %s23, 0
      %p118 = por %p116, %p117
      %s120 = sadd.s32 %s119, 1
      %p123 = scmp.eq.s32.totalorder %s17, 3
      %p124 = scmp.ne.s32.totalorder %s119, %s121
      %p125 = scmp.eq.s32.totalorder %s17, 0
      %p126 = por %p124, %p125
      %p127 = scmp.ne.s32.totalorder %s119, %s121
      %p128 = scmp.eq.s32.totalorder %s22, 3
      %p129 = por %p127, %p128
      %p130 = scmp.ne.s32.totalorder %s121, %s122
      %p131 = scmp.eq.s32.totalorder %s22, 0
      %p132 = por %p130, %p131
      %p133 = scmp.ne.s32.totalorder %s121, %s122
      %p134 = scmp.eq.s32.totalorder %s23, 3
      %p135 = por %p133, %p134
      %p137 = scmp.ne.s32.totalorder %s122, %s136
      %p138 = scmp.eq.s32.totalorder %s23, 0
      %p139 = por %p137, %p138
      %s141 = sadd.s32 %s140, 1
      %p144 = scmp.eq.s32.totalorder %s17, 3
      %p145 = scmp.ne.s32.totalorder %s140, %s142
      %p146 = scmp.eq.s32.totalorder %s17, 0
      %p147 = por %p145, %p146
      %p148 = scmp.ne.s32.totalorder %s140, %s142
      %p149 = scmp.eq.s32.totalorder %s22, 3
      %p150 = por %p148, %p149
      %p151 = scmp.ne.s32.totalorder %s142, %s143
      %p152 = scmp.eq.s32.totalorder %s22, 0
      %p153 = por %p151, %p152
      %p154 = scmp.ne.s32.totalorder %s142, %s143
      %p155 = scmp.eq.s32.totalorder %s23, 3
      %p156 = por %p154, %p155
      %p158 = scmp.ne.s32.totalorder %s143, %s157
      %p159 = scmp.eq.s32.totalorder %s23, 0
      %p160 = por %p158, %p159
      %s162 = sadd.s32 %s161, 1
      %p165 = scmp.eq.s32.totalorder %s17, 3
      %p166 = scmp.ne.s32.totalorder %s161, %s163
      %p167 = scmp.eq.s32.totalorder %s17, 0
      %p168 = por %p166, %p167
      %p169 = scmp.ne.s32.totalorder %s161, %s163
      %p170 = scmp.eq.s32.totalorder %s22, 3
      %p171 = por %p169, %p170
      %p172 = scmp.ne.s32.totalorder %s163, %s164
      %p173 = scmp.eq.s32.totalorder %s22, 0
      %p174 = por %p172, %p173
      %p175 = scmp.ne.s32.totalorder %s163, %s164
      %p176 = scmp.eq.s32.totalorder %s23, 3
      %p177 = por %p175, %p176
      %p179 = scmp.ne.s32.totalorder %s164, %s178
      %p180 = scmp.eq.s32.totalorder %s23, 0
      %p181 = por %p179, %p180
      %p182 = scmp.le.s32.totalorder 1, %s17
      %p183 = scmp.lt.s32.totalorder %s17, 5
      %p184 = pnand %p182, %p183
      %p185 = pneg %p184
      // Predicated region
      $region9: #{clock_hour_minute.1} parent=5 // pred_check
        _
      $region10: #{clock_hour_minute.1} parent=5 // pred_check_branch
        %187 = sbr.rel (%p184) target = $region12
      $region11: #{clock_hour_minute.1} parent=5 // pred_region
        %s188 = ssub.s32 %s17, 1
        // Predicated region
        $region13: #{clock_hour_minute.1} parent=11 // pred_check
          %p189 = pneg %p90
        $region14: #{clock_hour_minute.1} parent=11 // pred_check_branch
          %191 = sbr.rel (%p189) target = $region16
        $region15: #{clock_hour_minute.1} parent=11 // pred_region
          %s193 = ssub.s32 32, 32
          %194 = vsyncadd [#allocation6], %s193
          %s196 = sshll.u32 [#allocation5], 4
          %s197 = int_to_ptr.vmem [resolvable:$true] %s196
          %199 = dma.hbm_to_vmem [thread:$0]  %s2, 32, %s197, [#allocation6]
        $region16: #{clock_hour_minute.1} parent=11 // pred_fallthru
          _
        // Predicated region
        $region17: #{clock_hour_minute.1} parent=11 // pred_check
          %p200 = pneg %p111
        $region18: #{clock_hour_minute.1} parent=11 // pred_check_branch
          %202 = sbr.rel (%p200) target = $region20
        $region19: #{clock_hour_minute.1} parent=11 // pred_region
          %s204 = ssub.s32 32, 32
          %205 = vsyncadd [#allocation6], %s204
          %s207 = sshll.u32 [#allocation7], 4
          %s208 = int_to_ptr.vmem [resolvable:$true] %s207
          %210 = dma.hbm_to_vmem [thread:$0]  %s3, 32, %s208, [#allocation6]
        $region20: #{clock_hour_minute.1} parent=11 // pred_fallthru
          _
        // Predicated region
        $region21: #{clock_hour_minute.1} parent=11 // pred_check
          %p211 = pneg %p132
        $region22: #{clock_hour_minute.1} parent=11 // pred_check_branch
          %213 = sbr.rel (%p211) target = $region24
        $region23: #{clock_hour_minute.1} parent=11 // pred_region
          %s215 = ssub.s32 4096, 4096
          %216 = vsyncadd [#allocation9], %s215
          %s217 = sshll.u32 [#allocation8], 4
          %s218 = int_to_ptr.vmem [resolvable:$true] %s217
          %223 = dma.hbm_to_vmem [thread:$0]  %s4, 4096, %s218, [#allocation9], 128, 128, 8
        $region24: #{clock_hour_minute.1} parent=11 // pred_fallthru
          _
        // Predicated region
        $region25: #{clock_hour_minute.1} parent=11 // pred_check
          %p224 = pneg %p153
        $region26: #{clock_hour_minute.1} parent=11 // pred_check_branch
          %226 = sbr.rel (%p224) target = $region28
        $region27: #{clock_hour_minute.1} parent=11 // pred_region
          %s228 = ssub.s32 16, 16
          %229 = vsyncadd [#allocation9], %s228
          %s231 = sshll.u32 [#allocation10], 4
          %s232 = int_to_ptr.vmem [resolvable:$true] %s231
          %234 = dma.hbm_to_vmem [thread:$0]  %s5, 16, %s232, [#allocation9]
        $region28: #{clock_hour_minute.1} parent=11 // pred_fallthru
          _
      $region12: #{clock_hour_minute.1} parent=5 // pred_fallthru
        _
      %p235 = scmp.lt.s32.totalorder %s17, 4
      // Predicated region
      $region29: #{clock_hour_minute.1} parent=5 // pred_check
        %p236 = pneg %p235
      $region30: #{clock_hour_minute.1} parent=5 // pred_check_branch
        %238 = sbr.rel (%p236) target = $region32
      $region31: #{clock_hour_minute.1} parent=5 // pred_region
        // Predicated region
        $region33: #{clock_hour_minute.1} parent=31 // pred_check
          %p239 = pneg %p37
        $region34: #{clock_hour_minute.1} parent=31 // pred_check_branch
          %241 = sbr.rel (%p239) target = $region36
        $region35: #{clock_hour_minute.1} parent=31 // pred_region
          %s242 = smul.u32 49, %s17
          %p243 = scmp.lt.s32.totalorder %s242, 195
          %s244 = scalar_select %p243, %s242, 195
          %s245 = scalar_lea.vmem %s0, %s244
          %s246 = smul.u32 49, %s17
        $region36: #{clock_hour_minute.1} parent=31 // pred_fallthru
          _
        // Predicated region
        $region37: #{clock_hour_minute.1} parent=31 // pred_check
          %p247 = pneg %p63
        $region38: #{clock_hour_minute.1} parent=31 // pred_check_branch
          %249 = sbr.rel (%p247) target = $region40
        $region39: #{clock_hour_minute.1} parent=31 // pred_region
          %s250 = sand.u32 %s53, 1
          %s251 = scalar_lea.sflag [#allocation4], %s250
          %s252 = sand.u32 %s53, 1
          %s253 = smul.addr %s252, 3136
          %s254 = scalar_lea.vmem [#allocation3], %s253
          %s255 = smul.u32 196, %s17
          %s257 = ssub.s32 50176, 50176
          %258 = vsyncadd %s251, %s257
          %s259 = smul.addr %s255, 2
          %s260 = smul.addr %s259, 128
          %s261 = scalar_lea.hbm %s1, %s260
          %s262 = sshll.u32 %s254, 4
          %s263 = int_to_ptr.vmem [resolvable:$true] %s262
          %268 = dma.hbm_to_vmem [thread:$0]  %s261, 50176, %s263, %s251, 256, 256, 16
        $region40: #{clock_hour_minute.1} parent=31 // pred_fallthru
          _
      $region32: #{clock_hour_minute.1} parent=5 // pred_fallthru
        _
      %p269 = scmp.le.s32.totalorder 1, %s17
      %p270 = scmp.lt.s32.totalorder %s17, 5
      %p271 = pnand %p269, %p270
      %p272 = pneg %p271
      // Predicated region
      $region41: #{clock_hour_minute.1} parent=5 // pred_check
        _
      $region42: #{clock_hour_minute.1} parent=5 // pred_check_branch
        %274 = sbr.rel (%p271) target = $region44
      $region43: #{clock_hour_minute.1} parent=5 // pred_region
        %s275 = ssub.s32 %s17, 1
        %s276 = sand.u32 %s56, 1
        %s277 = scalar_lea.sflag [#allocation4], %s276
        %s278 = sand.u32 %s56, 1
        %s279 = smul.addr %s278, 3136
        %s280 = scalar_lea.vmem [#allocation3], %s279
        // Predicated region
        $region45: #{clock_hour_minute.1} parent=43 // pred_check
          %p281 = pneg %p69
        $region46: #{clock_hour_minute.1} parent=43 // pred_check_branch
          %283 = sbr.rel (%p281) target = $region48
        $region47: #{clock_hour_minute.1} parent=43 // pred_region
          %284 = dma.done %s277, 50176
        $region48: #{clock_hour_minute.1} parent=43 // pred_fallthru
          _
        // Predicated region
        $region49: #{clock_hour_minute.1} parent=43 // pred_check
          %p285 = pneg %p90
        $region50: #{clock_hour_minute.1} parent=43 // pred_check_branch
          %287 = sbr.rel (%p285) target = $region52
        $region51: #{clock_hour_minute.1} parent=43 // pred_region
          %288 = dma.done [#allocation6], 32
        $region52: #{clock_hour_minute.1} parent=43 // pred_fallthru
          _
        // Predicated region
        $region53: #{clock_hour_minute.1} parent=43 // pred_check
          %p289 = pneg %p111
        $region54: #{clock_hour_minute.1} parent=43 // pred_check_branch
          %291 = sbr.rel (%p289) target = $region56
        $region55: #{clock_hour_minute.1} parent=43 // pred_region
          %292 = dma.done [#allocation6], 32
        $region56: #{clock_hour_minute.1} parent=43 // pred_fallthru
          _
        // Predicated region
        $region57: #{clock_hour_minute.1} parent=43 // pred_check
          %p293 = pneg %p132
        $region58: #{clock_hour_minute.1} parent=43 // pred_check_branch
          %295 = sbr.rel (%p293) target = $region60
        $region59: #{clock_hour_minute.1} parent=43 // pred_region
          %296 = dma.done [#allocation9], 4096
        $region60: #{clock_hour_minute.1} parent=43 // pred_fallthru
          _
        // Predicated region
        $region61: #{clock_hour_minute.1} parent=43 // pred_check
          %p297 = pneg %p153
        $region62: #{clock_hour_minute.1} parent=43 // pred_check_branch
          %299 = sbr.rel (%p297) target = $region64
        $region63: #{clock_hour_minute.1} parent=43 // pred_region
          %300 = dma.done [#allocation9], 16
        $region64: #{clock_hour_minute.1} parent=43 // pred_fallthru
          _
        %s301 = smul.u32 49, %s22
        %p302 = scmp.lt.s32.totalorder %s301, 195
        %s303 = scalar_select %p302, %s301, 195
        %s304 = scalar_lea.vmem %s0, %s303
        %p305 = pneg %p43
        %p306 = pneg %p40
        %s307 = sand.u32 %s56, 1
        %s308 = scalar_lea.sflag [#allocation4], %s307
        %s309 = sand.u32 %s56, 1
        %s310 = smul.addr %s309, 3136
        %s311 = scalar_lea.vmem [#allocation3], %s310
        %p312 = pneg %p69
        %p313 = pneg %p66
        %p314 = pneg %p90
        %p315 = pneg %p87
        %p316 = pneg %p111
        %p317 = pneg %p108
        %p318 = pneg %p132
        %p319 = pneg %p129
        %p320 = pneg %p153
        %p321 = pneg %p150
        %p322 = pneg %p174
        %p323 = pneg %p171
        %s324 = smul.u32 49, %s22
        %p325 = scmp.lt.s32.totalorder %s324, 195
        %s326 = scalar_select %p325, %s324, 195
        %s327 = scalar_lea.vmem %s0, %s326
        %s328 = smul.u32 49, %s22
        %s329 = smul.u32 196, %s22
        %p331 = scmp.eq.s32.totalorder %s22, 0
        // Predicated region
        $region65: #{clock_hour_minute.1} parent=43 // pred_check
          %p332 = pneg %p331
        $region66: #{clock_hour_minute.1} parent=43 // pred_check_branch
          %334 = sbr.rel (%p332) target = $region68
        $region67: #{clock_hour_minute.1} parent=43 // pred_region
          %335 = vst [vmem:[#allocation2] sm:$0xf] 0.0
        $region68: #{clock_hour_minute.1} parent=43 // pred_fallthru
          _
        %v336 = vld [vmem:[%s280] sm:$0xff]
        %v337 = vld [vmem:[%s280 + $0x8] sm:$0xff]
        %v338 = vld [vmem:[%s280 + $0x10] sm:$0xff]
        %v339 = vld [vmem:[%s280 + $0x18] sm:$0xff]
        %v340 = vld [vmem:[%s280 + $0x20] sm:$0xff]
        %v341 = vld [vmem:[%s280 + $0x28] sm:$0xff]
        %v342 = vld [vmem:[%s280 + $0x30] sm:$0xff]
        %v343 = vld [vmem:[%s280 + $0x38] sm:$0xff]
        %v344 = vld [vmem:[%s280 + $0x40] sm:$0xff]
        %v345 = vld [vmem:[%s280 + $0x48] sm:$0xff]
        %v346 = vld [vmem:[%s280 + $0x50] sm:$0xff]
        %v347 = vld [vmem:[%s280 + $0x58] sm:$0xff]
        %v348 = vld [vmem:[%s280 + $0x60] sm:$0xff]
        %v349 = vld [vmem:[%s280 + $0x68] sm:$0xff]
        %v350 = vld [vmem:[%s280 + $0x70] sm:$0xff]
        %v351 = vld [vmem:[%s280 + $0x78] sm:$0xff]
        %v352 = vld [vmem:[%s280 + $0x80] sm:$0xff]
        %v353 = vld [vmem:[%s280 + $0x88] sm:$0xff]
        %v354 = vld [vmem:[%s280 + $0x90] sm:$0xff]
        %v355 = vld [vmem:[%s280 + $0x98] sm:$0xff]
        %v356 = vld [vmem:[%s280 + $0xa0] sm:$0xff]
        %v357 = vld [vmem:[%s280 + $0xa8] sm:$0xff]
        %v358 = vld [vmem:[%s280 + $0xb0] sm:$0xff]
        %v359 = vld [vmem:[%s280 + $0xb8] sm:$0xff]
        %v360 = vld [vmem:[%s280 + $0xc0] sm:$0xff]
        %v361 = vld [vmem:[%s280 + $0xc8] sm:$0xff]
        %v362 = vld [vmem:[%s280 + $0xd0] sm:$0xff]
        %v363 = vld [vmem:[%s280 + $0xd8] sm:$0xff]
        %v364 = vld [vmem:[%s280 + $0xe0] sm:$0xff]
        %v365 = vld [vmem:[%s280 + $0xe8] sm:$0xff]
        %v366 = vld [vmem:[%s280 + $0xf0] sm:$0xff]
        %v367 = vld [vmem:[%s280 + $0xf8] sm:$0xff]
        %v368 = vld [vmem:[%s280 + $0x100] sm:$0xff]
        %v369 = vld [vmem:[%s280 + $0x108] sm:$0xff]
        %v370 = vld [vmem:[%s280 + $0x110] sm:$0xff]
        %v371 = vld [vmem:[%s280 + $0x118] sm:$0xff]
        %v372 = vld [vmem:[%s280 + $0x120] sm:$0xff]
        %v373 = vld [vmem:[%s280 + $0x128] sm:$0xff]
        %v374 = vld [vmem:[%s280 + $0x130] sm:$0xff]
        %v375 = vld [vmem:[%s280 + $0x138] sm:$0xff]
        %v376 = vld [vmem:[%s280 + $0x140] sm:$0xff]
        %v377 = vld [vmem:[%s280 + $0x148] sm:$0xff]
        %v378 = vld [vmem:[%s280 + $0x150] sm:$0xff]
        %v379 = vld [vmem:[%s280 + $0x158] sm:$0xff]
        %v380 = vld [vmem:[%s280 + $0x160] sm:$0xff]
        %v381 = vld [vmem:[%s280 + $0x168] sm:$0xff]
        %v382 = vld [vmem:[%s280 + $0x170] sm:$0xff]
        %v383 = vld [vmem:[%s280 + $0x178] sm:$0xff]
        %v384 = vld [vmem:[%s280 + $0x180] sm:$0xff]
        %v385 = vld [vmem:[%s280 + $0x188] sm:$0xff]
        %v386 = vld [vmem:[%s280 + $0x190] sm:$0xff]
        %v387 = vld [vmem:[%s280 + $0x198] sm:$0xff]
        %v388 = vld [vmem:[%s280 + $0x1a0] sm:$0xff]
        %v389 = vld [vmem:[%s280 + $0x1a8] sm:$0xff]
        %v390 = vld [vmem:[%s280 + $0x1b0] sm:$0xff]
        %v391 = vld [vmem:[%s280 + $0x1b8] sm:$0xff]
        %v392 = vld [vmem:[%s280 + $0x1c0] sm:$0xff]
        %v393 = vld [vmem:[%s280 + $0x1c8] sm:$0xff]
        %v394 = vld [vmem:[%s280 + $0x1d0] sm:$0xff]
        %v395 = vld [vmem:[%s280 + $0x1d8] sm:$0xff]
        %v396 = vld [vmem:[%s280 + $0x1e0] sm:$0xff]
        %v397 = vld [vmem:[%s280 + $0x1e8] sm:$0xff]
        %v398 = vld [vmem:[%s280 + $0x1f0] sm:$0xff]
        %v399 = vld [vmem:[%s280 + $0x1f8] sm:$0xff]
        %v400 = vld [vmem:[%s280 + $0x200] sm:$0xff]
        %v401 = vld [vmem:[%s280 + $0x208] sm:$0xff]
        %v402 = vld [vmem:[%s280 + $0x210] sm:$0xff]
        %v403 = vld [vmem:[%s280 + $0x218] sm:$0xff]
        %v404 = vld [vmem:[%s280 + $0x220] sm:$0xff]
        %v405 = vld [vmem:[%s280 + $0x228] sm:$0xff]
        %v406 = vld [vmem:[%s280 + $0x230] sm:$0xff]
        %v407 = vld [vmem:[%s280 + $0x238] sm:$0xff]
        %v408 = vld [vmem:[%s280 + $0x240] sm:$0xff]
        %v409 = vld [vmem:[%s280 + $0x248] sm:$0xff]
        %v410 = vld [vmem:[%s280 + $0x250] sm:$0xff]
        %v411 = vld [vmem:[%s280 + $0x258] sm:$0xff]
        %v412 = vld [vmem:[%s280 + $0x260] sm:$0xff]
        %v413 = vld [vmem:[%s280 + $0x268] sm:$0xff]
        %v414 = vld [vmem:[%s280 + $0x270] sm:$0xff]
        %v415 = vld [vmem:[%s280 + $0x278] sm:$0xff]
        %v416 = vld [vmem:[%s280 + $0x280] sm:$0xff]
        %v417 = vld [vmem:[%s280 + $0x288] sm:$0xff]
        %v418 = vld [vmem:[%s280 + $0x290] sm:$0xff]
        %v419 = vld [vmem:[%s280 + $0x298] sm:$0xff]
        %v420 = vld [vmem:[%s280 + $0x2a0] sm:$0xff]
        %v421 = vld [vmem:[%s280 + $0x2a8] sm:$0xff]
        %v422 = vld [vmem:[%s280 + $0x2b0] sm:$0xff]
        %v423 = vld [vmem:[%s280 + $0x2b8] sm:$0xff]
        %v424 = vld [vmem:[%s280 + $0x2c0] sm:$0xff]
        %v425 = vld [vmem:[%s280 + $0x2c8] sm:$0xff]
        %v426 = vld [vmem:[%s280 + $0x2d0] sm:$0xff]
        %v427 = vld [vmem:[%s280 + $0x2d8] sm:$0xff]
        %v428 = vld [vmem:[%s280 + $0x2e0] sm:$0xff]
        %v429 = vld [vmem:[%s280 + $0x2e8] sm:$0xff]
        %v430 = vld [vmem:[%s280 + $0x2f0] sm:$0xff]
        %v431 = vld [vmem:[%s280 + $0x2f8] sm:$0xff]
        %v432 = vld [vmem:[%s280 + $0x300] sm:$0xff]
        %v433 = vld [vmem:[%s280 + $0x308] sm:$0xff]
        %v434 = vld [vmem:[%s280 + $0x310] sm:$0xff]
        %v435 = vld [vmem:[%s280 + $0x318] sm:$0xff]
        %v436 = vld [vmem:[%s280 + $0x320] sm:$0xff]
        %v437 = vld [vmem:[%s280 + $0x328] sm:$0xff]
        %v438 = vld [vmem:[%s280 + $0x330] sm:$0xff]
        %v439 = vld [vmem:[%s280 + $0x338] sm:$0xff]
        %v440 = vld [vmem:[%s280 + $0x340] sm:$0xff]
        %v441 = vld [vmem:[%s280 + $0x348] sm:$0xff]
        %v442 = vld [vmem:[%s280 + $0x350] sm:$0xff]
        %v443 = vld [vmem:[%s280 + $0x358] sm:$0xff]
        %v444 = vld [vmem:[%s280 + $0x360] sm:$0xff]
        %v445 = vld [vmem:[%s280 + $0x368] sm:$0xff]
        %v446 = vld [vmem:[%s280 + $0x370] sm:$0xff]
        %v447 = vld [vmem:[%s280 + $0x378] sm:$0xff]
        %v448 = vld [vmem:[%s280 + $0x380] sm:$0xff]
        %v449 = vld [vmem:[%s280 + $0x388] sm:$0xff]
        %v450 = vld [vmem:[%s280 + $0x390] sm:$0xff]
        %v451 = vld [vmem:[%s280 + $0x398] sm:$0xff]
        %v452 = vld [vmem:[%s280 + $0x3a0] sm:$0xff]
        %v453 = vld [vmem:[%s280 + $0x3a8] sm:$0xff]
        %v454 = vld [vmem:[%s280 + $0x3b0] sm:$0xff]
        %v455 = vld [vmem:[%s280 + $0x3b8] sm:$0xff]
        %v456 = vld [vmem:[%s280 + $0x3c0] sm:$0xff]
        %v457 = vld [vmem:[%s280 + $0x3c8] sm:$0xff]
        %v458 = vld [vmem:[%s280 + $0x3d0] sm:$0xff]
        %v459 = vld [vmem:[%s280 + $0x3d8] sm:$0xff]
        %v460 = vld [vmem:[%s280 + $0x3e0] sm:$0xff]
        %v461 = vld [vmem:[%s280 + $0x3e8] sm:$0xff]
        %v462 = vld [vmem:[%s280 + $0x3f0] sm:$0xff]
        %v463 = vld [vmem:[%s280 + $0x3f8] sm:$0xff]
        %v464 = vld [vmem:[%s280 + $0x400] sm:$0xff]
        %v465 = vld [vmem:[%s280 + $0x408] sm:$0xff]
        %v466 = vld [vmem:[%s280 + $0x410] sm:$0xff]
        %v467 = vld [vmem:[%s280 + $0x418] sm:$0xff]
        %v468 = vld [vmem:[%s280 + $0x420] sm:$0xff]
        %v469 = vld [vmem:[%s280 + $0x428] sm:$0xff]
        %v470 = vld [vmem:[%s280 + $0x430] sm:$0xff]
        %v471 = vld [vmem:[%s280 + $0x438] sm:$0xff]
        %v472 = vld [vmem:[%s280 + $0x440] sm:$0xff]
        %v473 = vld [vmem:[%s280 + $0x448] sm:$0xff]
        %v474 = vld [vmem:[%s280 + $0x450] sm:$0xff]
        %v475 = vld [vmem:[%s280 + $0x458] sm:$0xff]
        %v476 = vld [vmem:[%s280 + $0x460] sm:$0xff]
        %v477 = vld [vmem:[%s280 + $0x468] sm:$0xff]
        %v478 = vld [vmem:[%s280 + $0x470] sm:$0xff]
        %v479 = vld [vmem:[%s280 + $0x478] sm:$0xff]
        %v480 = vld [vmem:[%s280 + $0x480] sm:$0xff]
        %v481 = vld [vmem:[%s280 + $0x488] sm:$0xff]
        %v482 = vld [vmem:[%s280 + $0x490] sm:$0xff]
        %v483 = vld [vmem:[%s280 + $0x498] sm:$0xff]
        %v484 = vld [vmem:[%s280 + $0x4a0] sm:$0xff]
        %v485 = vld [vmem:[%s280 + $0x4a8] sm:$0xff]
        %v486 = vld [vmem:[%s280 + $0x4b0] sm:$0xff]
        %v487 = vld [vmem:[%s280 + $0x4b8] sm:$0xff]
        %v488 = vld [vmem:[%s280 + $0x4c0] sm:$0xff]
        %v489 = vld [vmem:[%s280 + $0x4c8] sm:$0xff]
        %v490 = vld [vmem:[%s280 + $0x4d0] sm:$0xff]
        %v491 = vld [vmem:[%s280 + $0x4d8] sm:$0xff]
        %v492 = vld [vmem:[%s280 + $0x4e0] sm:$0xff]
        %v493 = vld [vmem:[%s280 + $0x4e8] sm:$0xff]
        %v494 = vld [vmem:[%s280 + $0x4f0] sm:$0xff]
        %v495 = vld [vmem:[%s280 + $0x4f8] sm:$0xff]
        %v496 = vld [vmem:[%s280 + $0x500] sm:$0xff]
        %v497 = vld [vmem:[%s280 + $0x508] sm:$0xff]
        %v498 = vld [vmem:[%s280 + $0x510] sm:$0xff]
        %v499 = vld [vmem:[%s280 + $0x518] sm:$0xff]
        %v500 = vld [vmem:[%s280 + $0x520] sm:$0xff]
        %v501 = vld [vmem:[%s280 + $0x528] sm:$0xff]
        %v502 = vld [vmem:[%s280 + $0x530] sm:$0xff]
        %v503 = vld [vmem:[%s280 + $0x538] sm:$0xff]
        %v504 = vld [vmem:[%s280 + $0x540] sm:$0xff]
        %v505 = vld [vmem:[%s280 + $0x548] sm:$0xff]
        %v506 = vld [vmem:[%s280 + $0x550] sm:$0xff]
        %v507 = vld [vmem:[%s280 + $0x558] sm:$0xff]
        %v508 = vld [vmem:[%s280 + $0x560] sm:$0xff]
        %v509 = vld [vmem:[%s280 + $0x568] sm:$0xff]
        %v510 = vld [vmem:[%s280 + $0x570] sm:$0xff]
        %v511 = vld [vmem:[%s280 + $0x578] sm:$0xff]
        %v512 = vld [vmem:[%s280 + $0x580] sm:$0xff]
        %v513 = vld [vmem:[%s280 + $0x588] sm:$0xff]
        %v514 = vld [vmem:[%s280 + $0x590] sm:$0xff]
        %v515 = vld [vmem:[%s280 + $0x598] sm:$0xff]
        %v516 = vld [vmem:[%s280 + $0x5a0] sm:$0xff]
        %v517 = vld [vmem:[%s280 + $0x5a8] sm:$0xff]
        %v518 = vld [vmem:[%s280 + $0x5b0] sm:$0xff]
        %v519 = vld [vmem:[%s280 + $0x5b8] sm:$0xff]
        %v520 = vld [vmem:[%s280 + $0x5c0] sm:$0xff]
        %v521 = vld [vmem:[%s280 + $0x5c8] sm:$0xff]
        %v522 = vld [vmem:[%s280 + $0x5d0] sm:$0xff]
        %v523 = vld [vmem:[%s280 + $0x5d8] sm:$0xff]
        %v524 = vld [vmem:[%s280 + $0x5e0] sm:$0xff]
        %v525 = vld [vmem:[%s280 + $0x5e8] sm:$0xff]
        %v526 = vld [vmem:[%s280 + $0x5f0] sm:$0xff]
        %v527 = vld [vmem:[%s280 + $0x5f8] sm:$0xff]
        %v528 = vld [vmem:[%s280 + $0x600] sm:$0xff]
        %v529 = vld [vmem:[%s280 + $0x608] sm:$0xff]
        %v530 = vld [vmem:[%s280 + $0x610] sm:$0xff]
        %v531 = vld [vmem:[%s280 + $0x618] sm:$0xff]
        %v532 = vld [vmem:[%s280 + $0x620] sm:$0xff]
        %v533 = vld [vmem:[%s280 + $0x628] sm:$0xff]
        %v534 = vld [vmem:[%s280 + $0x630] sm:$0xff]
        %v535 = vld [vmem:[%s280 + $0x638] sm:$0xff]
        %v536 = vld [vmem:[%s280 + $0x640] sm:$0xff]
        %v537 = vld [vmem:[%s280 + $0x648] sm:$0xff]
        %v538 = vld [vmem:[%s280 + $0x650] sm:$0xff]
        %v539 = vld [vmem:[%s280 + $0x658] sm:$0xff]
        %v540 = vld [vmem:[%s280 + $0x660] sm:$0xff]
        %v541 = vld [vmem:[%s280 + $0x668] sm:$0xff]
        %v542 = vld [vmem:[%s280 + $0x670] sm:$0xff]
        %v543 = vld [vmem:[%s280 + $0x678] sm:$0xff]
        %v544 = vld [vmem:[%s280 + $0x680] sm:$0xff]
        %v545 = vld [vmem:[%s280 + $0x688] sm:$0xff]
        %v546 = vld [vmem:[%s280 + $0x690] sm:$0xff]
        %v547 = vld [vmem:[%s280 + $0x698] sm:$0xff]
        %v548 = vld [vmem:[%s280 + $0x6a0] sm:$0xff]
        %v549 = vld [vmem:[%s280 + $0x6a8] sm:$0xff]
        %v550 = vld [vmem:[%s280 + $0x6b0] sm:$0xff]
        %v551 = vld [vmem:[%s280 + $0x6b8] sm:$0xff]
        %v552 = vld [vmem:[%s280 + $0x6c0] sm:$0xff]
        %v553 = vld [vmem:[%s280 + $0x6c8] sm:$0xff]
        %v554 = vld [vmem:[%s280 + $0x6d0] sm:$0xff]
        %v555 = vld [vmem:[%s280 + $0x6d8] sm:$0xff]
        %v556 = vld [vmem:[%s280 + $0x6e0] sm:$0xff]
        %v557 = vld [vmem:[%s280 + $0x6e8] sm:$0xff]
        %v558 = vld [vmem:[%s280 + $0x6f0] sm:$0xff]
        %v559 = vld [vmem:[%s280 + $0x6f8] sm:$0xff]
        %v560 = vld [vmem:[%s280 + $0x700] sm:$0xff]
        %v561 = vld [vmem:[%s280 + $0x708] sm:$0xff]
        %v562 = vld [vmem:[%s280 + $0x710] sm:$0xff]
        %v563 = vld [vmem:[%s280 + $0x718] sm:$0xff]
        %v564 = vld [vmem:[%s280 + $0x720] sm:$0xff]
        %v565 = vld [vmem:[%s280 + $0x728] sm:$0xff]
        %v566 = vld [vmem:[%s280 + $0x730] sm:$0xff]
        %v567 = vld [vmem:[%s280 + $0x738] sm:$0xff]
        %v568 = vld [vmem:[%s280 + $0x740] sm:$0xff]
        %v569 = vld [vmem:[%s280 + $0x748] sm:$0xff]
        %v570 = vld [vmem:[%s280 + $0x750] sm:$0xff]
        %v571 = vld [vmem:[%s280 + $0x758] sm:$0xff]
        %v572 = vld [vmem:[%s280 + $0x760] sm:$0xff]
        %v573 = vld [vmem:[%s280 + $0x768] sm:$0xff]
        %v574 = vld [vmem:[%s280 + $0x770] sm:$0xff]
        %v575 = vld [vmem:[%s280 + $0x778] sm:$0xff]
        %v576 = vld [vmem:[%s280 + $0x780] sm:$0xff]
        %v577 = vld [vmem:[%s280 + $0x788] sm:$0xff]
        %v578 = vld [vmem:[%s280 + $0x790] sm:$0xff]
        %v579 = vld [vmem:[%s280 + $0x798] sm:$0xff]
        %v580 = vld [vmem:[%s280 + $0x7a0] sm:$0xff]
        %v581 = vld [vmem:[%s280 + $0x7a8] sm:$0xff]
        %v582 = vld [vmem:[%s280 + $0x7b0] sm:$0xff]
        %v583 = vld [vmem:[%s280 + $0x7b8] sm:$0xff]
        %v584 = vld [vmem:[%s280 + $0x7c0] sm:$0xff]
        %v585 = vld [vmem:[%s280 + $0x7c8] sm:$0xff]
        %v586 = vld [vmem:[%s280 + $0x7d0] sm:$0xff]
        %v587 = vld [vmem:[%s280 + $0x7d8] sm:$0xff]
        %v588 = vld [vmem:[%s280 + $0x7e0] sm:$0xff]
        %v589 = vld [vmem:[%s280 + $0x7e8] sm:$0xff]
        %v590 = vld [vmem:[%s280 + $0x7f0] sm:$0xff]
        %v591 = vld [vmem:[%s280 + $0x7f8] sm:$0xff]
        %v592 = vld [vmem:[%s280 + $0x800] sm:$0xff]
        %v593 = vld [vmem:[%s280 + $0x808] sm:$0xff]
        %v594 = vld [vmem:[%s280 + $0x810] sm:$0xff]
        %v595 = vld [vmem:[%s280 + $0x818] sm:$0xff]
        %v596 = vld [vmem:[%s280 + $0x820] sm:$0xff]
        %v597 = vld [vmem:[%s280 + $0x828] sm:$0xff]
        %v598 = vld [vmem:[%s280 + $0x830] sm:$0xff]
        %v599 = vld [vmem:[%s280 + $0x838] sm:$0xff]
        %v600 = vld [vmem:[%s280 + $0x840] sm:$0xff]
        %v601 = vld [vmem:[%s280 + $0x848] sm:$0xff]
        %v602 = vld [vmem:[%s280 + $0x850] sm:$0xff]
        %v603 = vld [vmem:[%s280 + $0x858] sm:$0xff]
        %v604 = vld [vmem:[%s280 + $0x860] sm:$0xff]
        %v605 = vld [vmem:[%s280 + $0x868] sm:$0xff]
        %v606 = vld [vmem:[%s280 + $0x870] sm:$0xff]
        %v607 = vld [vmem:[%s280 + $0x878] sm:$0xff]
        %v608 = vld [vmem:[%s280 + $0x880] sm:$0xff]
        %v609 = vld [vmem:[%s280 + $0x888] sm:$0xff]
        %v610 = vld [vmem:[%s280 + $0x890] sm:$0xff]
        %v611 = vld [vmem:[%s280 + $0x898] sm:$0xff]
        %v612 = vld [vmem:[%s280 + $0x8a0] sm:$0xff]
        %v613 = vld [vmem:[%s280 + $0x8a8] sm:$0xff]
        %v614 = vld [vmem:[%s280 + $0x8b0] sm:$0xff]
        %v615 = vld [vmem:[%s280 + $0x8b8] sm:$0xff]
        %v616 = vld [vmem:[%s280 + $0x8c0] sm:$0xff]
        %v617 = vld [vmem:[%s280 + $0x8c8] sm:$0xff]
        %v618 = vld [vmem:[%s280 + $0x8d0] sm:$0xff]
        %v619 = vld [vmem:[%s280 + $0x8d8] sm:$0xff]
        %v620 = vld [vmem:[%s280 + $0x8e0] sm:$0xff]
        %v621 = vld [vmem:[%s280 + $0x8e8] sm:$0xff]
        %v622 = vld [vmem:[%s280 + $0x8f0] sm:$0xff]
        %v623 = vld [vmem:[%s280 + $0x8f8] sm:$0xff]
        %v624 = vld [vmem:[%s280 + $0x900] sm:$0xff]
        %v625 = vld [vmem:[%s280 + $0x908] sm:$0xff]
        %v626 = vld [vmem:[%s280 + $0x910] sm:$0xff]
        %v627 = vld [vmem:[%s280 + $0x918] sm:$0xff]
        %v628 = vld [vmem:[%s280 + $0x920] sm:$0xff]
        %v629 = vld [vmem:[%s280 + $0x928] sm:$0xff]
        %v630 = vld [vmem:[%s280 + $0x930] sm:$0xff]
        %v631 = vld [vmem:[%s280 + $0x938] sm:$0xff]
        %v632 = vld [vmem:[%s280 + $0x940] sm:$0xff]
        %v633 = vld [vmem:[%s280 + $0x948] sm:$0xff]
        %v634 = vld [vmem:[%s280 + $0x950] sm:$0xff]
        %v635 = vld [vmem:[%s280 + $0x958] sm:$0xff]
        %v636 = vld [vmem:[%s280 + $0x960] sm:$0xff]
        %v637 = vld [vmem:[%s280 + $0x968] sm:$0xff]
        %v638 = vld [vmem:[%s280 + $0x970] sm:$0xff]
        %v639 = vld [vmem:[%s280 + $0x978] sm:$0xff]
        %v640 = vld [vmem:[%s280 + $0x980] sm:$0xff]
        %v641 = vld [vmem:[%s280 + $0x988] sm:$0xff]
        %v642 = vld [vmem:[%s280 + $0x990] sm:$0xff]
        %v643 = vld [vmem:[%s280 + $0x998] sm:$0xff]
        %v644 = vld [vmem:[%s280 + $0x9a0] sm:$0xff]
        %v645 = vld [vmem:[%s280 + $0x9a8] sm:$0xff]
        %v646 = vld [vmem:[%s280 + $0x9b0] sm:$0xff]
        %v647 = vld [vmem:[%s280 + $0x9b8] sm:$0xff]
        %v648 = vld [vmem:[%s280 + $0x9c0] sm:$0xff]
        %v649 = vld [vmem:[%s280 + $0x9c8] sm:$0xff]
        %v650 = vld [vmem:[%s280 + $0x9d0] sm:$0xff]
        %v651 = vld [vmem:[%s280 + $0x9d8] sm:$0xff]
        %v652 = vld [vmem:[%s280 + $0x9e0] sm:$0xff]
        %v653 = vld [vmem:[%s280 + $0x9e8] sm:$0xff]
        %v654 = vld [vmem:[%s280 + $0x9f0] sm:$0xff]
        %v655 = vld [vmem:[%s280 + $0x9f8] sm:$0xff]
        %v656 = vld [vmem:[%s280 + $0xa00] sm:$0xff]
        %v657 = vld [vmem:[%s280 + $0xa08] sm:$0xff]
        %v658 = vld [vmem:[%s280 + $0xa10] sm:$0xff]
        %v659 = vld [vmem:[%s280 + $0xa18] sm:$0xff]
        %v660 = vld [vmem:[%s280 + $0xa20] sm:$0xff]
        %v661 = vld [vmem:[%s280 + $0xa28] sm:$0xff]
        %v662 = vld [vmem:[%s280 + $0xa30] sm:$0xff]
        %v663 = vld [vmem:[%s280 + $0xa38] sm:$0xff]
        %v664 = vld [vmem:[%s280 + $0xa40] sm:$0xff]
        %v665 = vld [vmem:[%s280 + $0xa48] sm:$0xff]
        %v666 = vld [vmem:[%s280 + $0xa50] sm:$0xff]
        %v667 = vld [vmem:[%s280 + $0xa58] sm:$0xff]
        %v668 = vld [vmem:[%s280 + $0xa60] sm:$0xff]
        %v669 = vld [vmem:[%s280 + $0xa68] sm:$0xff]
        %v670 = vld [vmem:[%s280 + $0xa70] sm:$0xff]
        %v671 = vld [vmem:[%s280 + $0xa78] sm:$0xff]
        %v672 = vld [vmem:[%s280 + $0xa80] sm:$0xff]
        %v673 = vld [vmem:[%s280 + $0xa88] sm:$0xff]
        %v674 = vld [vmem:[%s280 + $0xa90] sm:$0xff]
        %v675 = vld [vmem:[%s280 + $0xa98] sm:$0xff]
        %v676 = vld [vmem:[%s280 + $0xaa0] sm:$0xff]
        %v677 = vld [vmem:[%s280 + $0xaa8] sm:$0xff]
        %v678 = vld [vmem:[%s280 + $0xab0] sm:$0xff]
        %v679 = vld [vmem:[%s280 + $0xab8] sm:$0xff]
        %v680 = vld [vmem:[%s280 + $0xac0] sm:$0xff]
        %v681 = vld [vmem:[%s280 + $0xac8] sm:$0xff]
        %v682 = vld [vmem:[%s280 + $0xad0] sm:$0xff]
        %v683 = vld [vmem:[%s280 + $0xad8] sm:$0xff]
        %v684 = vld [vmem:[%s280 + $0xae0] sm:$0xff]
        %v685 = vld [vmem:[%s280 + $0xae8] sm:$0xff]
        %v686 = vld [vmem:[%s280 + $0xaf0] sm:$0xff]
        %v687 = vld [vmem:[%s280 + $0xaf8] sm:$0xff]
        %v688 = vld [vmem:[%s280 + $0xb00] sm:$0xff]
        %v689 = vld [vmem:[%s280 + $0xb08] sm:$0xff]
        %v690 = vld [vmem:[%s280 + $0xb10] sm:$0xff]
        %v691 = vld [vmem:[%s280 + $0xb18] sm:$0xff]
        %v692 = vld [vmem:[%s280 + $0xb20] sm:$0xff]
        %v693 = vld [vmem:[%s280 + $0xb28] sm:$0xff]
        %v694 = vld [vmem:[%s280 + $0xb30] sm:$0xff]
        %v695 = vld [vmem:[%s280 + $0xb38] sm:$0xff]
        %v696 = vld [vmem:[%s280 + $0xb40] sm:$0xff]
        %v697 = vld [vmem:[%s280 + $0xb48] sm:$0xff]
        %v698 = vld [vmem:[%s280 + $0xb50] sm:$0xff]
        %v699 = vld [vmem:[%s280 + $0xb58] sm:$0xff]
        %v700 = vld [vmem:[%s280 + $0xb60] sm:$0xff]
        %v701 = vld [vmem:[%s280 + $0xb68] sm:$0xff]
        %v702 = vld [vmem:[%s280 + $0xb70] sm:$0xff]
        %v703 = vld [vmem:[%s280 + $0xb78] sm:$0xff]
        %v704 = vld [vmem:[%s280 + $0xb80] sm:$0xff]
        %v705 = vld [vmem:[%s280 + $0xb88] sm:$0xff]
        %v706 = vld [vmem:[%s280 + $0xb90] sm:$0xff]
        %v707 = vld [vmem:[%s280 + $0xb98] sm:$0xff]
        %v708 = vld [vmem:[%s280 + $0xba0] sm:$0xff]
        %v709 = vld [vmem:[%s280 + $0xba8] sm:$0xff]
        %v710 = vld [vmem:[%s280 + $0xbb0] sm:$0xff]
        %v711 = vld [vmem:[%s280 + $0xbb8] sm:$0xff]
        %v712 = vld [vmem:[%s280 + $0xbc0] sm:$0xff]
        %v713 = vld [vmem:[%s280 + $0xbc8] sm:$0xff]
        %v714 = vld [vmem:[%s280 + $0xbd0] sm:$0xff]
        %v715 = vld [vmem:[%s280 + $0xbd8] sm:$0xff]
        %v716 = vld [vmem:[%s280 + $0xbe0] sm:$0xff]
        %v717 = vld [vmem:[%s280 + $0xbe8] sm:$0xff]
        %v718 = vld [vmem:[%s280 + $0xbf0] sm:$0xff]
        %v719 = vld [vmem:[%s280 + $0xbf8] sm:$0xff]
        %v720 = vld [vmem:[%s280 + $0xc00] sm:$0xff]
        %v721 = vld [vmem:[%s280 + $0xc08] sm:$0xff]
        %v722 = vld [vmem:[%s280 + $0xc10] sm:$0xff]
        %v723 = vld [vmem:[%s280 + $0xc18] sm:$0xff]
        %v724 = vld [vmem:[%s280 + $0xc20] sm:$0xff]
        %v725 = vld [vmem:[%s280 + $0xc28] sm:$0xff]
        %v726 = vld [vmem:[%s280 + $0xc30] sm:$0xff]
        %v727 = vld [vmem:[%s280 + $0xc38] sm:$0xff]
        %v728 = vunpack.c.l.s8.bf16 %v336
        %v729 = vunpack.c.l.s8.bf16 %v337
        %v730 = vunpack.c.h.s8.bf16 %v336
        %v731 = vunpack.c.h.s8.bf16 %v337
        %v732 = vunpack.c.l.s8.bf16 %v338
        %v733 = vunpack.c.l.s8.bf16 %v339
        %v734 = vunpack.c.h.s8.bf16 %v338
        %v735 = vunpack.c.h.s8.bf16 %v339
        %v736 = vunpack.c.l.s8.bf16 %v340
        %v737 = vunpack.c.l.s8.bf16 %v341
        %v738 = vunpack.c.h.s8.bf16 %v340
        %v739 = vunpack.c.h.s8.bf16 %v341
        %v740 = vunpack.c.l.s8.bf16 %v342
        %v741 = vunpack.c.l.s8.bf16 %v343
        %v742 = vunpack.c.h.s8.bf16 %v342
        %v743 = vunpack.c.h.s8.bf16 %v343
        %v744 = vunpack.c.l.s8.bf16 %v344
        %v745 = vunpack.c.l.s8.bf16 %v345
        %v746 = vunpack.c.h.s8.bf16 %v344
        %v747 = vunpack.c.h.s8.bf16 %v345
        %v748 = vunpack.c.l.s8.bf16 %v346
        %v749 = vunpack.c.l.s8.bf16 %v347
        %v750 = vunpack.c.h.s8.bf16 %v346
        %v751 = vunpack.c.h.s8.bf16 %v347
        %v752 = vunpack.c.l.s8.bf16 %v348
        %v753 = vunpack.c.l.s8.bf16 %v349
        %v754 = vunpack.c.h.s8.bf16 %v348
        %v755 = vunpack.c.h.s8.bf16 %v349
        %v756 = vunpack.c.l.s8.bf16 %v350
        %v757 = vunpack.c.l.s8.bf16 %v351
        %v758 = vunpack.c.h.s8.bf16 %v350
        %v759 = vunpack.c.h.s8.bf16 %v351
        %v760 = vunpack.c.l.s8.bf16 %v352
        %v761 = vunpack.c.l.s8.bf16 %v353
        %v762 = vunpack.c.h.s8.bf16 %v352
        %v763 = vunpack.c.h.s8.bf16 %v353
        %v764 = vunpack.c.l.s8.bf16 %v354
        %v765 = vunpack.c.l.s8.bf16 %v355
        %v766 = vunpack.c.h.s8.bf16 %v354
        %v767 = vunpack.c.h.s8.bf16 %v355
        %v768 = vunpack.c.l.s8.bf16 %v356
        %v769 = vunpack.c.l.s8.bf16 %v357
        %v770 = vunpack.c.h.s8.bf16 %v356
        %v771 = vunpack.c.h.s8.bf16 %v357
        %v772 = vunpack.c.l.s8.bf16 %v358
        %v773 = vunpack.c.l.s8.bf16 %v359
        %v774 = vunpack.c.h.s8.bf16 %v358
        %v775 = vunpack.c.h.s8.bf16 %v359
        %v776 = vunpack.c.l.s8.bf16 %v360
        %v777 = vunpack.c.l.s8.bf16 %v361
        %v778 = vunpack.c.h.s8.bf16 %v360
        %v779 = vunpack.c.h.s8.bf16 %v361
        %v780 = vunpack.c.l.s8.bf16 %v362
        %v781 = vunpack.c.l.s8.bf16 %v363
        %v782 = vunpack.c.h.s8.bf16 %v362
        %v783 = vunpack.c.h.s8.bf16 %v363
        %v784 = vunpack.c.l.s8.bf16 %v364
        %v785 = vunpack.c.l.s8.bf16 %v365
        %v786 = vunpack.c.h.s8.bf16 %v364
        %v787 = vunpack.c.h.s8.bf16 %v365
        %v788 = vunpack.c.l.s8.bf16 %v366
        %v789 = vunpack.c.l.s8.bf16 %v367
        %v790 = vunpack.c.h.s8.bf16 %v366
        %v791 = vunpack.c.h.s8.bf16 %v367
        %v792 = vunpack.c.l.s8.bf16 %v368
        %v793 = vunpack.c.l.s8.bf16 %v369
        %v794 = vunpack.c.h.s8.bf16 %v368
        %v795 = vunpack.c.h.s8.bf16 %v369
        %v796 = vunpack.c.l.s8.bf16 %v370
        %v797 = vunpack.c.l.s8.bf16 %v371
        %v798 = vunpack.c.h.s8.bf16 %v370
        %v799 = vunpack.c.h.s8.bf16 %v371
        %v800 = vunpack.c.l.s8.bf16 %v372
        %v801 = vunpack.c.l.s8.bf16 %v373
        %v802 = vunpack.c.h.s8.bf16 %v372
        %v803 = vunpack.c.h.s8.bf16 %v373
        %v804 = vunpack.c.l.s8.bf16 %v374
        %v805 = vunpack.c.l.s8.bf16 %v375
        %v806 = vunpack.c.h.s8.bf16 %v374
        %v807 = vunpack.c.h.s8.bf16 %v375
        %v808 = vunpack.c.l.s8.bf16 %v376
        %v809 = vunpack.c.l.s8.bf16 %v377
        %v810 = vunpack.c.h.s8.bf16 %v376
        %v811 = vunpack.c.h.s8.bf16 %v377
        %v812 = vunpack.c.l.s8.bf16 %v378
        %v813 = vunpack.c.l.s8.bf16 %v379
        %v814 = vunpack.c.h.s8.bf16 %v378
        %v815 = vunpack.c.h.s8.bf16 %v379
        %v816 = vunpack.c.l.s8.bf16 %v380
        %v817 = vunpack.c.l.s8.bf16 %v381
        %v818 = vunpack.c.h.s8.bf16 %v380
        %v819 = vunpack.c.h.s8.bf16 %v381
        %v820 = vunpack.c.l.s8.bf16 %v382
        %v821 = vunpack.c.l.s8.bf16 %v383
        %v822 = vunpack.c.h.s8.bf16 %v382
        %v823 = vunpack.c.h.s8.bf16 %v383
        %v824 = vunpack.c.l.s8.bf16 %v384
        %v825 = vunpack.c.l.s8.bf16 %v385
        %v826 = vunpack.c.h.s8.bf16 %v384
        %v827 = vunpack.c.h.s8.bf16 %v385
        %v828 = vunpack.c.l.s8.bf16 %v386
        %v829 = vunpack.c.l.s8.bf16 %v387
        %v830 = vunpack.c.h.s8.bf16 %v386
        %v831 = vunpack.c.h.s8.bf16 %v387
        %v832 = vunpack.c.l.s8.bf16 %v388
        %v833 = vunpack.c.l.s8.bf16 %v389
        %v834 = vunpack.c.h.s8.bf16 %v388
        %v835 = vunpack.c.h.s8.bf16 %v389
        %v836 = vunpack.c.l.s8.bf16 %v390
        %v837 = vunpack.c.l.s8.bf16 %v391
        %v838 = vunpack.c.h.s8.bf16 %v390
        %v839 = vunpack.c.h.s8.bf16 %v391
        %v840 = vunpack.c.l.s8.bf16 %v392
        %v841 = vunpack.c.l.s8.bf16 %v393
        %v842 = vunpack.c.h.s8.bf16 %v392
        %v843 = vunpack.c.h.s8.bf16 %v393
        %v844 = vunpack.c.l.s8.bf16 %v394
        %v845 = vunpack.c.l.s8.bf16 %v395
        %v846 = vunpack.c.h.s8.bf16 %v394
        %v847 = vunpack.c.h.s8.bf16 %v395
        %v848 = vunpack.c.l.s8.bf16 %v396
        %v849 = vunpack.c.l.s8.bf16 %v397
        %v850 = vunpack.c.h.s8.bf16 %v396
        %v851 = vunpack.c.h.s8.bf16 %v397
        %v852 = vunpack.c.l.s8.bf16 %v398
        %v853 = vunpack.c.l.s8.bf16 %v399
        %v854 = vunpack.c.h.s8.bf16 %v398
        %v855 = vunpack.c.h.s8.bf16 %v399
        %v856 = vunpack.c.l.s8.bf16 %v400
        %v857 = vunpack.c.l.s8.bf16 %v401
        %v858 = vunpack.c.h.s8.bf16 %v400
        %v859 = vunpack.c.h.s8.bf16 %v401
        %v860 = vunpack.c.l.s8.bf16 %v402
        %v861 = vunpack.c.l.s8.bf16 %v403
        %v862 = vunpack.c.h.s8.bf16 %v402
        %v863 = vunpack.c.h.s8.bf16 %v403
        %v864 = vunpack.c.l.s8.bf16 %v404
        %v865 = vunpack.c.l.s8.bf16 %v405
        %v866 = vunpack.c.h.s8.bf16 %v404
        %v867 = vunpack.c.h.s8.bf16 %v405
        %v868 = vunpack.c.l.s8.bf16 %v406
        %v869 = vunpack.c.l.s8.bf16 %v407
        %v870 = vunpack.c.h.s8.bf16 %v406
        %v871 = vunpack.c.h.s8.bf16 %v407
        %v872 = vunpack.c.l.s8.bf16 %v408
        %v873 = vunpack.c.l.s8.bf16 %v409
        %v874 = vunpack.c.h.s8.bf16 %v408
        %v875 = vunpack.c.h.s8.bf16 %v409
        %v876 = vunpack.c.l.s8.bf16 %v410
        %v877 = vunpack.c.l.s8.bf16 %v411
        %v878 = vunpack.c.h.s8.bf16 %v410
        %v879 = vunpack.c.h.s8.bf16 %v411
        %v880 = vunpack.c.l.s8.bf16 %v412
        %v881 = vunpack.c.l.s8.bf16 %v413
        %v882 = vunpack.c.h.s8.bf16 %v412
        %v883 = vunpack.c.h.s8.bf16 %v413
        %v884 = vunpack.c.l.s8.bf16 %v414
        %v885 = vunpack.c.l.s8.bf16 %v415
        %v886 = vunpack.c.h.s8.bf16 %v414
        %v887 = vunpack.c.h.s8.bf16 %v415
        %v888 = vunpack.c.l.s8.bf16 %v416
        %v889 = vunpack.c.l.s8.bf16 %v417
        %v890 = vunpack.c.h.s8.bf16 %v416
        %v891 = vunpack.c.h.s8.bf16 %v417
        %v892 = vunpack.c.l.s8.bf16 %v418
        %v893 = vunpack.c.l.s8.bf16 %v419
        %v894 = vunpack.c.h.s8.bf16 %v418
        %v895 = vunpack.c.h.s8.bf16 %v419
        %v896 = vunpack.c.l.s8.bf16 %v420
        %v897 = vunpack.c.l.s8.bf16 %v421
        %v898 = vunpack.c.h.s8.bf16 %v420
        %v899 = vunpack.c.h.s8.bf16 %v421
        %v900 = vunpack.c.l.s8.bf16 %v422
        %v901 = vunpack.c.l.s8.bf16 %v423
        %v902 = vunpack.c.h.s8.bf16 %v422
        %v903 = vunpack.c.h.s8.bf16 %v423
        %v904 = vunpack.c.l.s8.bf16 %v424
        %v905 = vunpack.c.l.s8.bf16 %v425
        %v906 = vunpack.c.h.s8.bf16 %v424
        %v907 = vunpack.c.h.s8.bf16 %v425
        %v908 = vunpack.c.l.s8.bf16 %v426
        %v909 = vunpack.c.l.s8.bf16 %v427
        %v910 = vunpack.c.h.s8.bf16 %v426
        %v911 = vunpack.c.h.s8.bf16 %v427
        %v912 = vunpack.c.l.s8.bf16 %v428
        %v913 = vunpack.c.l.s8.bf16 %v429
        %v914 = vunpack.c.h.s8.bf16 %v428
        %v915 = vunpack.c.h.s8.bf16 %v429
        %v916 = vunpack.c.l.s8.bf16 %v430
        %v917 = vunpack.c.l.s8.bf16 %v431
        %v918 = vunpack.c.h.s8.bf16 %v430
        %v919 = vunpack.c.h.s8.bf16 %v431
        %v920 = vunpack.c.l.s8.bf16 %v432
        %v921 = vunpack.c.l.s8.bf16 %v433
        %v922 = vunpack.c.h.s8.bf16 %v432
        %v923 = vunpack.c.h.s8.bf16 %v433
        %v924 = vunpack.c.l.s8.bf16 %v434
        %v925 = vunpack.c.l.s8.bf16 %v435
        %v926 = vunpack.c.h.s8.bf16 %v434
        %v927 = vunpack.c.h.s8.bf16 %v435
        %v928 = vunpack.c.l.s8.bf16 %v436
        %v929 = vunpack.c.l.s8.bf16 %v437
        %v930 = vunpack.c.h.s8.bf16 %v436
        %v931 = vunpack.c.h.s8.bf16 %v437
        %v932 = vunpack.c.l.s8.bf16 %v438
        %v933 = vunpack.c.l.s8.bf16 %v439
        %v934 = vunpack.c.h.s8.bf16 %v438
        %v935 = vunpack.c.h.s8.bf16 %v439
        %v936 = vunpack.c.l.s8.bf16 %v440
        %v937 = vunpack.c.l.s8.bf16 %v441
        %v938 = vunpack.c.h.s8.bf16 %v440
        %v939 = vunpack.c.h.s8.bf16 %v441
        %v940 = vunpack.c.l.s8.bf16 %v442
        %v941 = vunpack.c.l.s8.bf16 %v443
        %v942 = vunpack.c.h.s8.bf16 %v442
        %v943 = vunpack.c.h.s8.bf16 %v443
        %v944 = vunpack.c.l.s8.bf16 %v444
        %v945 = vunpack.c.l.s8.bf16 %v445
        %v946 = vunpack.c.h.s8.bf16 %v444
        %v947 = vunpack.c.h.s8.bf16 %v445
        %v948 = vunpack.c.l.s8.bf16 %v446
        %v949 = vunpack.c.l.s8.bf16 %v447
        %v950 = vunpack.c.h.s8.bf16 %v446
        %v951 = vunpack.c.h.s8.bf16 %v447
        %v952 = vunpack.c.l.s8.bf16 %v448
        %v953 = vunpack.c.l.s8.bf16 %v449
        %v954 = vunpack.c.h.s8.bf16 %v448
        %v955 = vunpack.c.h.s8.bf16 %v449
        %v956 = vunpack.c.l.s8.bf16 %v450
        %v957 = vunpack.c.l.s8.bf16 %v451
        %v958 = vunpack.c.h.s8.bf16 %v450
        %v959 = vunpack.c.h.s8.bf16 %v451
        %v960 = vunpack.c.l.s8.bf16 %v452
        %v961 = vunpack.c.l.s8.bf16 %v453
        %v962 = vunpack.c.h.s8.bf16 %v452
        %v963 = vunpack.c.h.s8.bf16 %v453
        %v964 = vunpack.c.l.s8.bf16 %v454
        %v965 = vunpack.c.l.s8.bf16 %v455
        %v966 = vunpack.c.h.s8.bf16 %v454
        %v967 = vunpack.c.h.s8.bf16 %v455
        %v968 = vunpack.c.l.s8.bf16 %v456
        %v969 = vunpack.c.l.s8.bf16 %v457
        %v970 = vunpack.c.h.s8.bf16 %v456
        %v971 = vunpack.c.h.s8.bf16 %v457
        %v972 = vunpack.c.l.s8.bf16 %v458
        %v973 = vunpack.c.l.s8.bf16 %v459
        %v974 = vunpack.c.h.s8.bf16 %v458
        %v975 = vunpack.c.h.s8.bf16 %v459
        %v976 = vunpack.c.l.s8.bf16 %v460
        %v977 = vunpack.c.l.s8.bf16 %v461
        %v978 = vunpack.c.h.s8.bf16 %v460
        %v979 = vunpack.c.h.s8.bf16 %v461
        %v980 = vunpack.c.l.s8.bf16 %v462
        %v981 = vunpack.c.l.s8.bf16 %v463
        %v982 = vunpack.c.h.s8.bf16 %v462
        %v983 = vunpack.c.h.s8.bf16 %v463
        %v984 = vunpack.c.l.s8.bf16 %v464
        %v985 = vunpack.c.l.s8.bf16 %v465
        %v986 = vunpack.c.h.s8.bf16 %v464
        %v987 = vunpack.c.h.s8.bf16 %v465
        %v988 = vunpack.c.l.s8.bf16 %v466
        %v989 = vunpack.c.l.s8.bf16 %v467
        %v990 = vunpack.c.h.s8.bf16 %v466
        %v991 = vunpack.c.h.s8.bf16 %v467
        %v992 = vunpack.c.l.s8.bf16 %v468
        %v993 = vunpack.c.l.s8.bf16 %v469
        %v994 = vunpack.c.h.s8.bf16 %v468
        %v995 = vunpack.c.h.s8.bf16 %v469
        %v996 = vunpack.c.l.s8.bf16 %v470
        %v997 = vunpack.c.l.s8.bf16 %v471
        %v998 = vunpack.c.h.s8.bf16 %v470
        %v999 = vunpack.c.h.s8.bf16 %v471
        %v1000 = vunpack.c.l.s8.bf16 %v472
        %v1001 = vunpack.c.l.s8.bf16 %v473
        %v1002 = vunpack.c.h.s8.bf16 %v472
        %v1003 = vunpack.c.h.s8.bf16 %v473
        %v1004 = vunpack.c.l.s8.bf16 %v474
        %v1005 = vunpack.c.l.s8.bf16 %v475
        %v1006 = vunpack.c.h.s8.bf16 %v474
        %v1007 = vunpack.c.h.s8.bf16 %v475
        %v1008 = vunpack.c.l.s8.bf16 %v476
        %v1009 = vunpack.c.l.s8.bf16 %v477
        %v1010 = vunpack.c.h.s8.bf16 %v476
        %v1011 = vunpack.c.h.s8.bf16 %v477
        %v1012 = vunpack.c.l.s8.bf16 %v478
        %v1013 = vunpack.c.l.s8.bf16 %v479
        %v1014 = vunpack.c.h.s8.bf16 %v478
        %v1015 = vunpack.c.h.s8.bf16 %v479
        %v1016 = vunpack.c.l.s8.bf16 %v480
        %v1017 = vunpack.c.l.s8.bf16 %v481
        %v1018 = vunpack.c.h.s8.bf16 %v480
        %v1019 = vunpack.c.h.s8.bf16 %v481
        %v1020 = vunpack.c.l.s8.bf16 %v482
        %v1021 = vunpack.c.l.s8.bf16 %v483
        %v1022 = vunpack.c.h.s8.bf16 %v482
        %v1023 = vunpack.c.h.s8.bf16 %v483
        %v1024 = vunpack.c.l.s8.bf16 %v484
        %v1025 = vunpack.c.l.s8.bf16 %v485
        %v1026 = vunpack.c.h.s8.bf16 %v484
        %v1027 = vunpack.c.h.s8.bf16 %v485
        %v1028 = vunpack.c.l.s8.bf16 %v486
        %v1029 = vunpack.c.l.s8.bf16 %v487
        %v1030 = vunpack.c.h.s8.bf16 %v486
        %v1031 = vunpack.c.h.s8.bf16 %v487
        %v1032 = vunpack.c.l.s8.bf16 %v488
        %v1033 = vunpack.c.l.s8.bf16 %v489
        %v1034 = vunpack.c.h.s8.bf16 %v488
        %v1035 = vunpack.c.h.s8.bf16 %v489
        %v1036 = vunpack.c.l.s8.bf16 %v490
        %v1037 = vunpack.c.l.s8.bf16 %v491
        %v1038 = vunpack.c.h.s8.bf16 %v490
        %v1039 = vunpack.c.h.s8.bf16 %v491
        %v1040 = vunpack.c.l.s8.bf16 %v492
        %v1041 = vunpack.c.l.s8.bf16 %v493
        %v1042 = vunpack.c.h.s8.bf16 %v492
        %v1043 = vunpack.c.h.s8.bf16 %v493
        %v1044 = vunpack.c.l.s8.bf16 %v494
        %v1045 = vunpack.c.l.s8.bf16 %v495
        %v1046 = vunpack.c.h.s8.bf16 %v494
        %v1047 = vunpack.c.h.s8.bf16 %v495
        %v1048 = vunpack.c.l.s8.bf16 %v496
        %v1049 = vunpack.c.l.s8.bf16 %v497
        %v1050 = vunpack.c.h.s8.bf16 %v496
        %v1051 = vunpack.c.h.s8.bf16 %v497
        %v1052 = vunpack.c.l.s8.bf16 %v498
        %v1053 = vunpack.c.l.s8.bf16 %v499
        %v1054 = vunpack.c.h.s8.bf16 %v498
        %v1055 = vunpack.c.h.s8.bf16 %v499
        %v1056 = vunpack.c.l.s8.bf16 %v500
        %v1057 = vunpack.c.l.s8.bf16 %v501
        %v1058 = vunpack.c.h.s8.bf16 %v500
        %v1059 = vunpack.c.h.s8.bf16 %v501
        %v1060 = vunpack.c.l.s8.bf16 %v502
        %v1061 = vunpack.c.l.s8.bf16 %v503
        %v1062 = vunpack.c.h.s8.bf16 %v502
        %v1063 = vunpack.c.h.s8.bf16 %v503
        %v1064 = vunpack.c.l.s8.bf16 %v504
        %v1065 = vunpack.c.l.s8.bf16 %v505
        %v1066 = vunpack.c.h.s8.bf16 %v504
        %v1067 = vunpack.c.h.s8.bf16 %v505
        %v1068 = vunpack.c.l.s8.bf16 %v506
        %v1069 = vunpack.c.l.s8.bf16 %v507
        %v1070 = vunpack.c.h.s8.bf16 %v506
        %v1071 = vunpack.c.h.s8.bf16 %v507
        %v1072 = vunpack.c.l.s8.bf16 %v508
        %v1073 = vunpack.c.l.s8.bf16 %v509
        %v1074 = vunpack.c.h.s8.bf16 %v508
        %v1075 = vunpack.c.h.s8.bf16 %v509
        %v1076 = vunpack.c.l.s8.bf16 %v510
        %v1077 = vunpack.c.l.s8.bf16 %v511
        %v1078 = vunpack.c.h.s8.bf16 %v510
        %v1079 = vunpack.c.h.s8.bf16 %v511
        %v1080 = vunpack.c.l.s8.bf16 %v512
        %v1081 = vunpack.c.l.s8.bf16 %v513
        %v1082 = vunpack.c.h.s8.bf16 %v512
        %v1083 = vunpack.c.h.s8.bf16 %v513
        %v1084 = vunpack.c.l.s8.bf16 %v514
        %v1085 = vunpack.c.l.s8.bf16 %v515
        %v1086 = vunpack.c.h.s8.bf16 %v514
        %v1087 = vunpack.c.h.s8.bf16 %v515
        %v1088 = vunpack.c.l.s8.bf16 %v516
        %v1089 = vunpack.c.l.s8.bf16 %v517
        %v1090 = vunpack.c.h.s8.bf16 %v516
        %v1091 = vunpack.c.h.s8.bf16 %v517
        %v1092 = vunpack.c.l.s8.bf16 %v518
        %v1093 = vunpack.c.l.s8.bf16 %v519
        %v1094 = vunpack.c.h.s8.bf16 %v518
        %v1095 = vunpack.c.h.s8.bf16 %v519
        %v1096 = vunpack.c.l.s8.bf16 %v520
        %v1097 = vunpack.c.l.s8.bf16 %v521
        %v1098 = vunpack.c.h.s8.bf16 %v520
        %v1099 = vunpack.c.h.s8.bf16 %v521
        %v1100 = vunpack.c.l.s8.bf16 %v522
        %v1101 = vunpack.c.l.s8.bf16 %v523
        %v1102 = vunpack.c.h.s8.bf16 %v522
        %v1103 = vunpack.c.h.s8.bf16 %v523
        %v1104 = vunpack.c.l.s8.bf16 %v524
        %v1105 = vunpack.c.l.s8.bf16 %v525
        %v1106 = vunpack.c.h.s8.bf16 %v524
        %v1107 = vunpack.c.h.s8.bf16 %v525
        %v1108 = vunpack.c.l.s8.bf16 %v526
        %v1109 = vunpack.c.l.s8.bf16 %v527
        %v1110 = vunpack.c.h.s8.bf16 %v526
        %v1111 = vunpack.c.h.s8.bf16 %v527
        %v1112 = vunpack.c.l.s8.bf16 %v528
        %v1113 = vunpack.c.l.s8.bf16 %v529
        %v1114 = vunpack.c.h.s8.bf16 %v528
        %v1115 = vunpack.c.h.s8.bf16 %v529
        %v1116 = vunpack.c.l.s8.bf16 %v530
        %v1117 = vunpack.c.l.s8.bf16 %v531
        %v1118 = vunpack.c.h.s8.bf16 %v530
        %v1119 = vunpack.c.h.s8.bf16 %v531
        %v1120 = vunpack.c.l.s8.bf16 %v532
        %v1121 = vunpack.c.l.s8.bf16 %v533
        %v1122 = vunpack.c.h.s8.bf16 %v532
        %v1123 = vunpack.c.h.s8.bf16 %v533
        %v1124 = vunpack.c.l.s8.bf16 %v534
        %v1125 = vunpack.c.l.s8.bf16 %v535
        %v1126 = vunpack.c.h.s8.bf16 %v534
        %v1127 = vunpack.c.h.s8.bf16 %v535
        %v1128 = vunpack.c.l.s8.bf16 %v536
        %v1129 = vunpack.c.l.s8.bf16 %v537
        %v1130 = vunpack.c.h.s8.bf16 %v536
        %v1131 = vunpack.c.h.s8.bf16 %v537
        %v1132 = vunpack.c.l.s8.bf16 %v538
        %v1133 = vunpack.c.l.s8.bf16 %v539
        %v1134 = vunpack.c.h.s8.bf16 %v538
        %v1135 = vunpack.c.h.s8.bf16 %v539
        %v1136 = vunpack.c.l.s8.bf16 %v540
        %v1137 = vunpack.c.l.s8.bf16 %v541
        %v1138 = vunpack.c.h.s8.bf16 %v540
        %v1139 = vunpack.c.h.s8.bf16 %v541
        %v1140 = vunpack.c.l.s8.bf16 %v542
        %v1141 = vunpack.c.l.s8.bf16 %v543
        %v1142 = vunpack.c.h.s8.bf16 %v542
        %v1143 = vunpack.c.h.s8.bf16 %v543
        %v1144 = vunpack.c.l.s8.bf16 %v544
        %v1145 = vunpack.c.l.s8.bf16 %v545
        %v1146 = vunpack.c.h.s8.bf16 %v544
        %v1147 = vunpack.c.h.s8.bf16 %v545
        %v1148 = vunpack.c.l.s8.bf16 %v546
        %v1149 = vunpack.c.l.s8.bf16 %v547
        %v1150 = vunpack.c.h.s8.bf16 %v546
        %v1151 = vunpack.c.h.s8.bf16 %v547
        %v1152 = vunpack.c.l.s8.bf16 %v548
        %v1153 = vunpack.c.l.s8.bf16 %v549
        %v1154 = vunpack.c.h.s8.bf16 %v548
        %v1155 = vunpack.c.h.s8.bf16 %v549
        %v1156 = vunpack.c.l.s8.bf16 %v550
        %v1157 = vunpack.c.l.s8.bf16 %v551
        %v1158 = vunpack.c.h.s8.bf16 %v550
        %v1159 = vunpack.c.h.s8.bf16 %v551
        %v1160 = vunpack.c.l.s8.bf16 %v552
        %v1161 = vunpack.c.l.s8.bf16 %v553
        %v1162 = vunpack.c.h.s8.bf16 %v552
        %v1163 = vunpack.c.h.s8.bf16 %v553
        %v1164 = vunpack.c.l.s8.bf16 %v554
        %v1165 = vunpack.c.l.s8.bf16 %v555
        %v1166 = vunpack.c.h.s8.bf16 %v554
        %v1167 = vunpack.c.h.s8.bf16 %v555
        %v1168 = vunpack.c.l.s8.bf16 %v556
        %v1169 = vunpack.c.l.s8.bf16 %v557
        %v1170 = vunpack.c.h.s8.bf16 %v556
        %v1171 = vunpack.c.h.s8.bf16 %v557
        %v1172 = vunpack.c.l.s8.bf16 %v558
        %v1173 = vunpack.c.l.s8.bf16 %v559
        %v1174 = vunpack.c.h.s8.bf16 %v558
        %v1175 = vunpack.c.h.s8.bf16 %v559
        %v1176 = vunpack.c.l.s8.bf16 %v560
        %v1177 = vunpack.c.l.s8.bf16 %v561
        %v1178 = vunpack.c.h.s8.bf16 %v560
        %v1179 = vunpack.c.h.s8.bf16 %v561
        %v1180 = vunpack.c.l.s8.bf16 %v562
        %v1181 = vunpack.c.l.s8.bf16 %v563
        %v1182 = vunpack.c.h.s8.bf16 %v562
        %v1183 = vunpack.c.h.s8.bf16 %v563
        %v1184 = vunpack.c.l.s8.bf16 %v564
        %v1185 = vunpack.c.l.s8.bf16 %v565
        %v1186 = vunpack.c.h.s8.bf16 %v564
        %v1187 = vunpack.c.h.s8.bf16 %v565
        %v1188 = vunpack.c.l.s8.bf16 %v566
        %v1189 = vunpack.c.l.s8.bf16 %v567
        %v1190 = vunpack.c.h.s8.bf16 %v566
        %v1191 = vunpack.c.h.s8.bf16 %v567
        %v1192 = vunpack.c.l.s8.bf16 %v568
        %v1193 = vunpack.c.l.s8.bf16 %v569
        %v1194 = vunpack.c.h.s8.bf16 %v568
        %v1195 = vunpack.c.h.s8.bf16 %v569
        %v1196 = vunpack.c.l.s8.bf16 %v570
        %v1197 = vunpack.c.l.s8.bf16 %v571
        %v1198 = vunpack.c.h.s8.bf16 %v570
        %v1199 = vunpack.c.h.s8.bf16 %v571
        %v1200 = vunpack.c.l.s8.bf16 %v572
        %v1201 = vunpack.c.l.s8.bf16 %v573
        %v1202 = vunpack.c.h.s8.bf16 %v572
        %v1203 = vunpack.c.h.s8.bf16 %v573
        %v1204 = vunpack.c.l.s8.bf16 %v574
        %v1205 = vunpack.c.l.s8.bf16 %v575
        %v1206 = vunpack.c.h.s8.bf16 %v574
        %v1207 = vunpack.c.h.s8.bf16 %v575
        %v1208 = vunpack.c.l.s8.bf16 %v576
        %v1209 = vunpack.c.l.s8.bf16 %v577
        %v1210 = vunpack.c.h.s8.bf16 %v576
        %v1211 = vunpack.c.h.s8.bf16 %v577
        %v1212 = vunpack.c.l.s8.bf16 %v578
        %v1213 = vunpack.c.l.s8.bf16 %v579
        %v1214 = vunpack.c.h.s8.bf16 %v578
        %v1215 = vunpack.c.h.s8.bf16 %v579
        %v1216 = vunpack.c.l.s8.bf16 %v580
        %v1217 = vunpack.c.l.s8.bf16 %v581
        %v1218 = vunpack.c.h.s8.bf16 %v580
        %v1219 = vunpack.c.h.s8.bf16 %v581
        %v1220 = vunpack.c.l.s8.bf16 %v582
        %v1221 = vunpack.c.l.s8.bf16 %v583
        %v1222 = vunpack.c.h.s8.bf16 %v582
        %v1223 = vunpack.c.h.s8.bf16 %v583
        %v1224 = vunpack.c.l.s8.bf16 %v584
        %v1225 = vunpack.c.l.s8.bf16 %v585
        %v1226 = vunpack.c.h.s8.bf16 %v584
        %v1227 = vunpack.c.h.s8.bf16 %v585
        %v1228 = vunpack.c.l.s8.bf16 %v586
        %v1229 = vunpack.c.l.s8.bf16 %v587
        %v1230 = vunpack.c.h.s8.bf16 %v586
        %v1231 = vunpack.c.h.s8.bf16 %v587
        %v1232 = vunpack.c.l.s8.bf16 %v588
        %v1233 = vunpack.c.l.s8.bf16 %v589
        %v1234 = vunpack.c.h.s8.bf16 %v588
        %v1235 = vunpack.c.h.s8.bf16 %v589
        %v1236 = vunpack.c.l.s8.bf16 %v590
        %v1237 = vunpack.c.l.s8.bf16 %v591
        %v1238 = vunpack.c.h.s8.bf16 %v590
        %v1239 = vunpack.c.h.s8.bf16 %v591
        %v1240 = vunpack.c.l.s8.bf16 %v592
        %v1241 = vunpack.c.l.s8.bf16 %v593
        %v1242 = vunpack.c.h.s8.bf16 %v592
        %v1243 = vunpack.c.h.s8.bf16 %v593
        %v1244 = vunpack.c.l.s8.bf16 %v594
        %v1245 = vunpack.c.l.s8.bf16 %v595
        %v1246 = vunpack.c.h.s8.bf16 %v594
        %v1247 = vunpack.c.h.s8.bf16 %v595
        %v1248 = vunpack.c.l.s8.bf16 %v596
        %v1249 = vunpack.c.l.s8.bf16 %v597
        %v1250 = vunpack.c.h.s8.bf16 %v596
        %v1251 = vunpack.c.h.s8.bf16 %v597
        %v1252 = vunpack.c.l.s8.bf16 %v598
        %v1253 = vunpack.c.l.s8.bf16 %v599
        %v1254 = vunpack.c.h.s8.bf16 %v598
        %v1255 = vunpack.c.h.s8.bf16 %v599
        %v1256 = vunpack.c.l.s8.bf16 %v600
        %v1257 = vunpack.c.l.s8.bf16 %v601
        %v1258 = vunpack.c.h.s8.bf16 %v600
        %v1259 = vunpack.c.h.s8.bf16 %v601
        %v1260 = vunpack.c.l.s8.bf16 %v602
        %v1261 = vunpack.c.l.s8.bf16 %v603
        %v1262 = vunpack.c.h.s8.bf16 %v602
        %v1263 = vunpack.c.h.s8.bf16 %v603
        %v1264 = vunpack.c.l.s8.bf16 %v604
        %v1265 = vunpack.c.l.s8.bf16 %v605
        %v1266 = vunpack.c.h.s8.bf16 %v604
        %v1267 = vunpack.c.h.s8.bf16 %v605
        %v1268 = vunpack.c.l.s8.bf16 %v606
        %v1269 = vunpack.c.l.s8.bf16 %v607
        %v1270 = vunpack.c.h.s8.bf16 %v606
        %v1271 = vunpack.c.h.s8.bf16 %v607
        %v1272 = vunpack.c.l.s8.bf16 %v608
        %v1273 = vunpack.c.l.s8.bf16 %v609
        %v1274 = vunpack.c.h.s8.bf16 %v608
        %v1275 = vunpack.c.h.s8.bf16 %v609
        %v1276 = vunpack.c.l.s8.bf16 %v610
        %v1277 = vunpack.c.l.s8.bf16 %v611
        %v1278 = vunpack.c.h.s8.bf16 %v610
        %v1279 = vunpack.c.h.s8.bf16 %v611
        %v1280 = vunpack.c.l.s8.bf16 %v612
        %v1281 = vunpack.c.l.s8.bf16 %v613
        %v1282 = vunpack.c.h.s8.bf16 %v612
        %v1283 = vunpack.c.h.s8.bf16 %v613
        %v1284 = vunpack.c.l.s8.bf16 %v614
        %v1285 = vunpack.c.l.s8.bf16 %v615
        %v1286 = vunpack.c.h.s8.bf16 %v614
        %v1287 = vunpack.c.h.s8.bf16 %v615
        %v1288 = vunpack.c.l.s8.bf16 %v616
        %v1289 = vunpack.c.l.s8.bf16 %v617
        %v1290 = vunpack.c.h.s8.bf16 %v616
        %v1291 = vunpack.c.h.s8.bf16 %v617
        %v1292 = vunpack.c.l.s8.bf16 %v618
        %v1293 = vunpack.c.l.s8.bf16 %v619
        %v1294 = vunpack.c.h.s8.bf16 %v618
        %v1295 = vunpack.c.h.s8.bf16 %v619
        %v1296 = vunpack.c.l.s8.bf16 %v620
        %v1297 = vunpack.c.l.s8.bf16 %v621
        %v1298 = vunpack.c.h.s8.bf16 %v620
        %v1299 = vunpack.c.h.s8.bf16 %v621
        %v1300 = vunpack.c.l.s8.bf16 %v622
        %v1301 = vunpack.c.l.s8.bf16 %v623
        %v1302 = vunpack.c.h.s8.bf16 %v622
        %v1303 = vunpack.c.h.s8.bf16 %v623
        %v1304 = vunpack.c.l.s8.bf16 %v624
        %v1305 = vunpack.c.l.s8.bf16 %v625
        %v1306 = vunpack.c.h.s8.bf16 %v624
        %v1307 = vunpack.c.h.s8.bf16 %v625
        %v1308 = vunpack.c.l.s8.bf16 %v626
        %v1309 = vunpack.c.l.s8.bf16 %v627
        %v1310 = vunpack.c.h.s8.bf16 %v626
        %v1311 = vunpack.c.h.s8.bf16 %v627
        %v1312 = vunpack.c.l.s8.bf16 %v628
        %v1313 = vunpack.c.l.s8.bf16 %v629
        %v1314 = vunpack.c.h.s8.bf16 %v628
        %v1315 = vunpack.c.h.s8.bf16 %v629
        %v1316 = vunpack.c.l.s8.bf16 %v630
        %v1317 = vunpack.c.l.s8.bf16 %v631
        %v1318 = vunpack.c.h.s8.bf16 %v630
        %v1319 = vunpack.c.h.s8.bf16 %v631
        %v1320 = vunpack.c.l.s8.bf16 %v632
        %v1321 = vunpack.c.l.s8.bf16 %v633
        %v1322 = vunpack.c.h.s8.bf16 %v632
        %v1323 = vunpack.c.h.s8.bf16 %v633
        %v1324 = vunpack.c.l.s8.bf16 %v634
        %v1325 = vunpack.c.l.s8.bf16 %v635
        %v1326 = vunpack.c.h.s8.bf16 %v634
        %v1327 = vunpack.c.h.s8.bf16 %v635
        %v1328 = vunpack.c.l.s8.bf16 %v636
        %v1329 = vunpack.c.l.s8.bf16 %v637
        %v1330 = vunpack.c.h.s8.bf16 %v636
        %v1331 = vunpack.c.h.s8.bf16 %v637
        %v1332 = vunpack.c.l.s8.bf16 %v638
        %v1333 = vunpack.c.l.s8.bf16 %v639
        %v1334 = vunpack.c.h.s8.bf16 %v638
        %v1335 = vunpack.c.h.s8.bf16 %v639
        %v1336 = vunpack.c.l.s8.bf16 %v640
        %v1337 = vunpack.c.l.s8.bf16 %v641
        %v1338 = vunpack.c.h.s8.bf16 %v640
        %v1339 = vunpack.c.h.s8.bf16 %v641
        %v1340 = vunpack.c.l.s8.bf16 %v642
        %v1341 = vunpack.c.l.s8.bf16 %v643
        %v1342 = vunpack.c.h.s8.bf16 %v642
        %v1343 = vunpack.c.h.s8.bf16 %v643
        %v1344 = vunpack.c.l.s8.bf16 %v644
        %v1345 = vunpack.c.l.s8.bf16 %v645
        %v1346 = vunpack.c.h.s8.bf16 %v644
        %v1347 = vunpack.c.h.s8.bf16 %v645
        %v1348 = vunpack.c.l.s8.bf16 %v646
        %v1349 = vunpack.c.l.s8.bf16 %v647
        %v1350 = vunpack.c.h.s8.bf16 %v646
        %v1351 = vunpack.c.h.s8.bf16 %v647
        %v1352 = vunpack.c.l.s8.bf16 %v648
        %v1353 = vunpack.c.l.s8.bf16 %v649
        %v1354 = vunpack.c.h.s8.bf16 %v648
        %v1355 = vunpack.c.h.s8.bf16 %v649
        %v1356 = vunpack.c.l.s8.bf16 %v650
        %v1357 = vunpack.c.l.s8.bf16 %v651
        %v1358 = vunpack.c.h.s8.bf16 %v650
        %v1359 = vunpack.c.h.s8.bf16 %v651
        %v1360 = vunpack.c.l.s8.bf16 %v652
        %v1361 = vunpack.c.l.s8.bf16 %v653
        %v1362 = vunpack.c.h.s8.bf16 %v652
        %v1363 = vunpack.c.h.s8.bf16 %v653
        %v1364 = vunpack.c.l.s8.bf16 %v654
        %v1365 = vunpack.c.l.s8.bf16 %v655
        %v1366 = vunpack.c.h.s8.bf16 %v654
        %v1367 = vunpack.c.h.s8.bf16 %v655
        %v1368 = vunpack.c.l.s8.bf16 %v656
        %v1369 = vunpack.c.l.s8.bf16 %v657
        %v1370 = vunpack.c.h.s8.bf16 %v656
        %v1371 = vunpack.c.h.s8.bf16 %v657
        %v1372 = vunpack.c.l.s8.bf16 %v658
        %v1373 = vunpack.c.l.s8.bf16 %v659
        %v1374 = vunpack.c.h.s8.bf16 %v658
        %v1375 = vunpack.c.h.s8.bf16 %v659
        %v1376 = vunpack.c.l.s8.bf16 %v660
        %v1377 = vunpack.c.l.s8.bf16 %v661
        %v1378 = vunpack.c.h.s8.bf16 %v660
        %v1379 = vunpack.c.h.s8.bf16 %v661
        %v1380 = vunpack.c.l.s8.bf16 %v662
        %v1381 = vunpack.c.l.s8.bf16 %v663
        %v1382 = vunpack.c.h.s8.bf16 %v662
        %v1383 = vunpack.c.h.s8.bf16 %v663
        %v1384 = vunpack.c.l.s8.bf16 %v664
        %v1385 = vunpack.c.l.s8.bf16 %v665
        %v1386 = vunpack.c.h.s8.bf16 %v664
        %v1387 = vunpack.c.h.s8.bf16 %v665
        %v1388 = vunpack.c.l.s8.bf16 %v666
        %v1389 = vunpack.c.l.s8.bf16 %v667
        %v1390 = vunpack.c.h.s8.bf16 %v666
        %v1391 = vunpack.c.h.s8.bf16 %v667
        %v1392 = vunpack.c.l.s8.bf16 %v668
        %v1393 = vunpack.c.l.s8.bf16 %v669
        %v1394 = vunpack.c.h.s8.bf16 %v668
        %v1395 = vunpack.c.h.s8.bf16 %v669
        %v1396 = vunpack.c.l.s8.bf16 %v670
        %v1397 = vunpack.c.l.s8.bf16 %v671
        %v1398 = vunpack.c.h.s8.bf16 %v670
        %v1399 = vunpack.c.h.s8.bf16 %v671
        %v1400 = vunpack.c.l.s8.bf16 %v672
        %v1401 = vunpack.c.l.s8.bf16 %v673
        %v1402 = vunpack.c.h.s8.bf16 %v672
        %v1403 = vunpack.c.h.s8.bf16 %v673
        %v1404 = vunpack.c.l.s8.bf16 %v674
        %v1405 = vunpack.c.l.s8.bf16 %v675
        %v1406 = vunpack.c.h.s8.bf16 %v674
        %v1407 = vunpack.c.h.s8.bf16 %v675
        %v1408 = vunpack.c.l.s8.bf16 %v676
        %v1409 = vunpack.c.l.s8.bf16 %v677
        %v1410 = vunpack.c.h.s8.bf16 %v676
        %v1411 = vunpack.c.h.s8.bf16 %v677
        %v1412 = vunpack.c.l.s8.bf16 %v678
        %v1413 = vunpack.c.l.s8.bf16 %v679
        %v1414 = vunpack.c.h.s8.bf16 %v678
        %v1415 = vunpack.c.h.s8.bf16 %v679
        %v1416 = vunpack.c.l.s8.bf16 %v680
        %v1417 = vunpack.c.l.s8.bf16 %v681
        %v1418 = vunpack.c.h.s8.bf16 %v680
        %v1419 = vunpack.c.h.s8.bf16 %v681
        %v1420 = vunpack.c.l.s8.bf16 %v682
        %v1421 = vunpack.c.l.s8.bf16 %v683
        %v1422 = vunpack.c.h.s8.bf16 %v682
        %v1423 = vunpack.c.h.s8.bf16 %v683
        %v1424 = vunpack.c.l.s8.bf16 %v684
        %v1425 = vunpack.c.l.s8.bf16 %v685
        %v1426 = vunpack.c.h.s8.bf16 %v684
        %v1427 = vunpack.c.h.s8.bf16 %v685
        %v1428 = vunpack.c.l.s8.bf16 %v686
        %v1429 = vunpack.c.l.s8.bf16 %v687
        %v1430 = vunpack.c.h.s8.bf16 %v686
        %v1431 = vunpack.c.h.s8.bf16 %v687
        %v1432 = vunpack.c.l.s8.bf16 %v688
        %v1433 = vunpack.c.l.s8.bf16 %v689
        %v1434 = vunpack.c.h.s8.bf16 %v688
        %v1435 = vunpack.c.h.s8.bf16 %v689
        %v1436 = vunpack.c.l.s8.bf16 %v690
        %v1437 = vunpack.c.l.s8.bf16 %v691
        %v1438 = vunpack.c.h.s8.bf16 %v690
        %v1439 = vunpack.c.h.s8.bf16 %v691
        %v1440 = vunpack.c.l.s8.bf16 %v692
        %v1441 = vunpack.c.l.s8.bf16 %v693
        %v1442 = vunpack.c.h.s8.bf16 %v692
        %v1443 = vunpack.c.h.s8.bf16 %v693
        %v1444 = vunpack.c.l.s8.bf16 %v694
        %v1445 = vunpack.c.l.s8.bf16 %v695
        %v1446 = vunpack.c.h.s8.bf16 %v694
        %v1447 = vunpack.c.h.s8.bf16 %v695
        %v1448 = vunpack.c.l.s8.bf16 %v696
        %v1449 = vunpack.c.l.s8.bf16 %v697
        %v1450 = vunpack.c.h.s8.bf16 %v696
        %v1451 = vunpack.c.h.s8.bf16 %v697
        %v1452 = vunpack.c.l.s8.bf16 %v698
        %v1453 = vunpack.c.l.s8.bf16 %v699
        %v1454 = vunpack.c.h.s8.bf16 %v698
        %v1455 = vunpack.c.h.s8.bf16 %v699
        %v1456 = vunpack.c.l.s8.bf16 %v700
        %v1457 = vunpack.c.l.s8.bf16 %v701
        %v1458 = vunpack.c.h.s8.bf16 %v700
        %v1459 = vunpack.c.h.s8.bf16 %v701
        %v1460 = vunpack.c.l.s8.bf16 %v702
        %v1461 = vunpack.c.l.s8.bf16 %v703
        %v1462 = vunpack.c.h.s8.bf16 %v702
        %v1463 = vunpack.c.h.s8.bf16 %v703
        %v1464 = vunpack.c.l.s8.bf16 %v704
        %v1465 = vunpack.c.l.s8.bf16 %v705
        %v1466 = vunpack.c.h.s8.bf16 %v704
        %v1467 = vunpack.c.h.s8.bf16 %v705
        %v1468 = vunpack.c.l.s8.bf16 %v706
        %v1469 = vunpack.c.l.s8.bf16 %v707
        %v1470 = vunpack.c.h.s8.bf16 %v706
        %v1471 = vunpack.c.h.s8.bf16 %v707
        %v1472 = vunpack.c.l.s8.bf16 %v708
        %v1473 = vunpack.c.l.s8.bf16 %v709
        %v1474 = vunpack.c.h.s8.bf16 %v708
        %v1475 = vunpack.c.h.s8.bf16 %v709
        %v1476 = vunpack.c.l.s8.bf16 %v710
        %v1477 = vunpack.c.l.s8.bf16 %v711
        %v1478 = vunpack.c.h.s8.bf16 %v710
        %v1479 = vunpack.c.h.s8.bf16 %v711
        %v1480 = vunpack.c.l.s8.bf16 %v712
        %v1481 = vunpack.c.l.s8.bf16 %v713
        %v1482 = vunpack.c.h.s8.bf16 %v712
        %v1483 = vunpack.c.h.s8.bf16 %v713
        %v1484 = vunpack.c.l.s8.bf16 %v714
        %v1485 = vunpack.c.l.s8.bf16 %v715
        %v1486 = vunpack.c.h.s8.bf16 %v714
        %v1487 = vunpack.c.h.s8.bf16 %v715
        %v1488 = vunpack.c.l.s8.bf16 %v716
        %v1489 = vunpack.c.l.s8.bf16 %v717
        %v1490 = vunpack.c.h.s8.bf16 %v716
        %v1491 = vunpack.c.h.s8.bf16 %v717
        %v1492 = vunpack.c.l.s8.bf16 %v718
        %v1493 = vunpack.c.l.s8.bf16 %v719
        %v1494 = vunpack.c.h.s8.bf16 %v718
        %v1495 = vunpack.c.h.s8.bf16 %v719
        %v1496 = vunpack.c.l.s8.bf16 %v720
        %v1497 = vunpack.c.l.s8.bf16 %v721
        %v1498 = vunpack.c.h.s8.bf16 %v720
        %v1499 = vunpack.c.h.s8.bf16 %v721
        %v1500 = vunpack.c.l.s8.bf16 %v722
        %v1501 = vunpack.c.l.s8.bf16 %v723
        %v1502 = vunpack.c.h.s8.bf16 %v722
        %v1503 = vunpack.c.h.s8.bf16 %v723
        %v1504 = vunpack.c.l.s8.bf16 %v724
        %v1505 = vunpack.c.l.s8.bf16 %v725
        %v1506 = vunpack.c.h.s8.bf16 %v724
        %v1507 = vunpack.c.h.s8.bf16 %v725
        %v1508 = vunpack.c.l.s8.bf16 %v726
        %v1509 = vunpack.c.l.s8.bf16 %v727
        %v1510 = vunpack.c.h.s8.bf16 %v726
        %v1511 = vunpack.c.h.s8.bf16 %v727
        %v1512 = vld [vmem:[#allocation2] sm:$0xf]
        %v1513 = vld [vmem:[%s327] sm:$0xff]
        %v1514 = vld [vmem:[%s327 + $0x8] sm:$0xff]
        %v1515 = vld [vmem:[%s327 + $0x10] sm:$0xff]
        %v1516 = vld [vmem:[%s327 + $0x18] sm:$0xff]
        %v1517 = vld [vmem:[%s327 + $0x20] sm:$0xff]
        %v1518 = vld [vmem:[%s327 + $0x28] sm:$0xff]
        %v1519 = vld [vmem:[%s327 + $0x30] sm:$0x1]
        %v1527 = vcombine.high %v1513, %v1513
        %v1529 = vunpack.c.l.s4 1966171168
        %v1530 = vunpack.c.0.s8 %v1529
        %v1531 = vlaneseq
        %v1532 = vshrl.u32 %v1531, 7
        %v1533 = vsub.s32 %v1530, %v1532
        %v1534 = vrot.slane %v1513, %v1533
        %v1536 = vunpack.c.l.s4 1966171168
        %v1537 = vunpack.c.0.s8 %v1536
        %v1538 = vlaneseq
        %v1539 = vshrl.u32 %v1538, 7
        %v1540 = vsub.s32 %v1537, %v1539
        %v1541 = vrot.slane %v1527, %v1540
        %v1542 = vcombine.high %v1534, %v1534
        %v1543 = vcombine.high %v1541, %v1541
        %v1545 = vunpack.c.l.s4 1966171168
        %v1546 = vunpack.c.0.s8 %v1545
        %v1547 = vlaneseq
        %v1548 = vshrl.u32 %v1547, 7
        %v1549 = vsub.s32 %v1546, %v1548
        %v1550 = vrot.slane %v1534, %v1549
        %v1552 = vunpack.c.l.s4 1966171168
        %v1553 = vunpack.c.0.s8 %v1552
        %v1554 = vlaneseq
        %v1555 = vshrl.u32 %v1554, 7
        %v1556 = vsub.s32 %v1553, %v1555
        %v1557 = vrot.slane %v1541, %v1556
        %v1559 = vunpack.c.l.s4 1966171168
        %v1560 = vunpack.c.0.s8 %v1559
        %v1561 = vlaneseq
        %v1562 = vshrl.u32 %v1561, 7
        %v1563 = vsub.s32 %v1560, %v1562
        %v1564 = vrot.slane %v1542, %v1563
        %v1566 = vunpack.c.l.s4 1966171168
        %v1567 = vunpack.c.0.s8 %v1566
        %v1568 = vlaneseq
        %v1569 = vshrl.u32 %v1568, 7
        %v1570 = vsub.s32 %v1567, %v1569
        %v1571 = vrot.slane %v1543, %v1570
        %v1572 = vcombine.high %v1550, %v1550
        %v1573 = vcombine.high %v1557, %v1557
        %v1574 = vcombine.high %v1564, %v1564
        %v1575 = vcombine.high %v1571, %v1571
        %v1576 = vcombine.high %v1514, %v1514
        %v1578 = vunpack.c.l.s4 1966171168
        %v1579 = vunpack.c.0.s8 %v1578
        %v1580 = vlaneseq
        %v1581 = vshrl.u32 %v1580, 7
        %v1582 = vsub.s32 %v1579, %v1581
        %v1583 = vrot.slane %v1514, %v1582
        %v1585 = vunpack.c.l.s4 1966171168
        %v1586 = vunpack.c.0.s8 %v1585
        %v1587 = vlaneseq
        %v1588 = vshrl.u32 %v1587, 7
        %v1589 = vsub.s32 %v1586, %v1588
        %v1590 = vrot.slane %v1576, %v1589
        %v1591 = vcombine.high %v1583, %v1583
        %v1592 = vcombine.high %v1590, %v1590
        %v1594 = vunpack.c.l.s4 1966171168
        %v1595 = vunpack.c.0.s8 %v1594
        %v1596 = vlaneseq
        %v1597 = vshrl.u32 %v1596, 7
        %v1598 = vsub.s32 %v1595, %v1597
        %v1599 = vrot.slane %v1583, %v1598
        %v1601 = vunpack.c.l.s4 1966171168
        %v1602 = vunpack.c.0.s8 %v1601
        %v1603 = vlaneseq
        %v1604 = vshrl.u32 %v1603, 7
        %v1605 = vsub.s32 %v1602, %v1604
        %v1606 = vrot.slane %v1590, %v1605
        %v1608 = vunpack.c.l.s4 1966171168
        %v1609 = vunpack.c.0.s8 %v1608
        %v1610 = vlaneseq
        %v1611 = vshrl.u32 %v1610, 7
        %v1612 = vsub.s32 %v1609, %v1611
        %v1613 = vrot.slane %v1591, %v1612
        %v1615 = vunpack.c.l.s4 1966171168
        %v1616 = vunpack.c.0.s8 %v1615
        %v1617 = vlaneseq
        %v1618 = vshrl.u32 %v1617, 7
        %v1619 = vsub.s32 %v1616, %v1618
        %v1620 = vrot.slane %v1592, %v1619
        %v1621 = vcombine.high %v1599, %v1599
        %v1622 = vcombine.high %v1606, %v1606
        %v1623 = vcombine.high %v1613, %v1613
        %v1624 = vcombine.high %v1620, %v1620
        %v1625 = vcombine.high %v1515, %v1515
        %v1627 = vunpack.c.l.s4 1966171168
        %v1628 = vunpack.c.0.s8 %v1627
        %v1629 = vlaneseq
        %v1630 = vshrl.u32 %v1629, 7
        %v1631 = vsub.s32 %v1628, %v1630
        %v1632 = vrot.slane %v1515, %v1631
        %v1634 = vunpack.c.l.s4 1966171168
        %v1635 = vunpack.c.0.s8 %v1634
        %v1636 = vlaneseq
        %v1637 = vshrl.u32 %v1636, 7
        %v1638 = vsub.s32 %v1635, %v1637
        %v1639 = vrot.slane %v1625, %v1638
        %v1640 = vcombine.high %v1632, %v1632
        %v1641 = vcombine.high %v1639, %v1639
        %v1643 = vunpack.c.l.s4 1966171168
        %v1644 = vunpack.c.0.s8 %v1643
        %v1645 = vlaneseq
        %v1646 = vshrl.u32 %v1645, 7
        %v1647 = vsub.s32 %v1644, %v1646
        %v1648 = vrot.slane %v1632, %v1647
        %v1650 = vunpack.c.l.s4 1966171168
        %v1651 = vunpack.c.0.s8 %v1650
        %v1652 = vlaneseq
        %v1653 = vshrl.u32 %v1652, 7
        %v1654 = vsub.s32 %v1651, %v1653
        %v1655 = vrot.slane %v1639, %v1654
        %v1657 = vunpack.c.l.s4 1966171168
        %v1658 = vunpack.c.0.s8 %v1657
        %v1659 = vlaneseq
        %v1660 = vshrl.u32 %v1659, 7
        %v1661 = vsub.s32 %v1658, %v1660
        %v1662 = vrot.slane %v1640, %v1661
        %v1664 = vunpack.c.l.s4 1966171168
        %v1665 = vunpack.c.0.s8 %v1664
        %v1666 = vlaneseq
        %v1667 = vshrl.u32 %v1666, 7
        %v1668 = vsub.s32 %v1665, %v1667
        %v1669 = vrot.slane %v1641, %v1668
        %v1670 = vcombine.high %v1648, %v1648
        %v1671 = vcombine.high %v1655, %v1655
        %v1672 = vcombine.high %v1662, %v1662
        %v1673 = vcombine.high %v1669, %v1669
        %v1674 = vcombine.high %v1516, %v1516
        %v1676 = vunpack.c.l.s4 1966171168
        %v1677 = vunpack.c.0.s8 %v1676
        %v1678 = vlaneseq
        %v1679 = vshrl.u32 %v1678, 7
        %v1680 = vsub.s32 %v1677, %v1679
        %v1681 = vrot.slane %v1516, %v1680
        %v1683 = vunpack.c.l.s4 1966171168
        %v1684 = vunpack.c.0.s8 %v1683
        %v1685 = vlaneseq
        %v1686 = vshrl.u32 %v1685, 7
        %v1687 = vsub.s32 %v1684, %v1686
        %v1688 = vrot.slane %v1674, %v1687
        %v1689 = vcombine.high %v1681, %v1681
        %v1690 = vcombine.high %v1688, %v1688
        %v1692 = vunpack.c.l.s4 1966171168
        %v1693 = vunpack.c.0.s8 %v1692
        %v1694 = vlaneseq
        %v1695 = vshrl.u32 %v1694, 7
        %v1696 = vsub.s32 %v1693, %v1695
        %v1697 = vrot.slane %v1681, %v1696
        %v1699 = vunpack.c.l.s4 1966171168
        %v1700 = vunpack.c.0.s8 %v1699
        %v1701 = vlaneseq
        %v1702 = vshrl.u32 %v1701, 7
        %v1703 = vsub.s32 %v1700, %v1702
        %v1704 = vrot.slane %v1688, %v1703
        %v1706 = vunpack.c.l.s4 1966171168
        %v1707 = vunpack.c.0.s8 %v1706
        %v1708 = vlaneseq
        %v1709 = vshrl.u32 %v1708, 7
        %v1710 = vsub.s32 %v1707, %v1709
        %v1711 = vrot.slane %v1689, %v1710
        %v1713 = vunpack.c.l.s4 1966171168
        %v1714 = vunpack.c.0.s8 %v1713
        %v1715 = vlaneseq
        %v1716 = vshrl.u32 %v1715, 7
        %v1717 = vsub.s32 %v1714, %v1716
        %v1718 = vrot.slane %v1690, %v1717
        %v1719 = vcombine.high %v1697, %v1697
        %v1720 = vcombine.high %v1704, %v1704
        %v1721 = vcombine.high %v1711, %v1711
        %v1722 = vcombine.high %v1718, %v1718
        %v1723 = vcombine.high %v1517, %v1517
        %v1725 = vunpack.c.l.s4 1966171168
        %v1726 = vunpack.c.0.s8 %v1725
        %v1727 = vlaneseq
        %v1728 = vshrl.u32 %v1727, 7
        %v1729 = vsub.s32 %v1726, %v1728
        %v1730 = vrot.slane %v1517, %v1729
        %v1732 = vunpack.c.l.s4 1966171168
        %v1733 = vunpack.c.0.s8 %v1732
        %v1734 = vlaneseq
        %v1735 = vshrl.u32 %v1734, 7
        %v1736 = vsub.s32 %v1733, %v1735
        %v1737 = vrot.slane %v1723, %v1736
        %v1738 = vcombine.high %v1730, %v1730
        %v1739 = vcombine.high %v1737, %v1737
        %v1741 = vunpack.c.l.s4 1966171168
        %v1742 = vunpack.c.0.s8 %v1741
        %v1743 = vlaneseq
        %v1744 = vshrl.u32 %v1743, 7
        %v1745 = vsub.s32 %v1742, %v1744
        %v1746 = vrot.slane %v1730, %v1745
        %v1748 = vunpack.c.l.s4 1966171168
        %v1749 = vunpack.c.0.s8 %v1748
        %v1750 = vlaneseq
        %v1751 = vshrl.u32 %v1750, 7
        %v1752 = vsub.s32 %v1749, %v1751
        %v1753 = vrot.slane %v1737, %v1752
        %v1755 = vunpack.c.l.s4 1966171168
        %v1756 = vunpack.c.0.s8 %v1755
        %v1757 = vlaneseq
        %v1758 = vshrl.u32 %v1757, 7
        %v1759 = vsub.s32 %v1756, %v1758
        %v1760 = vrot.slane %v1738, %v1759
        %v1762 = vunpack.c.l.s4 1966171168
        %v1763 = vunpack.c.0.s8 %v1762
        %v1764 = vlaneseq
        %v1765 = vshrl.u32 %v1764, 7
        %v1766 = vsub.s32 %v1763, %v1765
        %v1767 = vrot.slane %v1739, %v1766
        %v1768 = vcombine.high %v1746, %v1746
        %v1769 = vcombine.high %v1753, %v1753
        %v1770 = vcombine.high %v1760, %v1760
        %v1771 = vcombine.high %v1767, %v1767
        %v1772 = vcombine.high %v1518, %v1518
        %v1774 = vunpack.c.l.s4 1966171168
        %v1775 = vunpack.c.0.s8 %v1774
        %v1776 = vlaneseq
        %v1777 = vshrl.u32 %v1776, 7
        %v1778 = vsub.s32 %v1775, %v1777
        %v1779 = vrot.slane %v1518, %v1778
        %v1781 = vunpack.c.l.s4 1966171168
        %v1782 = vunpack.c.0.s8 %v1781
        %v1783 = vlaneseq
        %v1784 = vshrl.u32 %v1783, 7
        %v1785 = vsub.s32 %v1782, %v1784
        %v1786 = vrot.slane %v1772, %v1785
        %v1787 = vcombine.high %v1779, %v1779
        %v1788 = vcombine.high %v1786, %v1786
        %v1790 = vunpack.c.l.s4 1966171168
        %v1791 = vunpack.c.0.s8 %v1790
        %v1792 = vlaneseq
        %v1793 = vshrl.u32 %v1792, 7
        %v1794 = vsub.s32 %v1791, %v1793
        %v1795 = vrot.slane %v1779, %v1794
        %v1797 = vunpack.c.l.s4 1966171168
        %v1798 = vunpack.c.0.s8 %v1797
        %v1799 = vlaneseq
        %v1800 = vshrl.u32 %v1799, 7
        %v1801 = vsub.s32 %v1798, %v1800
        %v1802 = vrot.slane %v1786, %v1801
        %v1804 = vunpack.c.l.s4 1966171168
        %v1805 = vunpack.c.0.s8 %v1804
        %v1806 = vlaneseq
        %v1807 = vshrl.u32 %v1806, 7
        %v1808 = vsub.s32 %v1805, %v1807
        %v1809 = vrot.slane %v1787, %v1808
        %v1811 = vunpack.c.l.s4 1966171168
        %v1812 = vunpack.c.0.s8 %v1811
        %v1813 = vlaneseq
        %v1814 = vshrl.u32 %v1813, 7
        %v1815 = vsub.s32 %v1812, %v1814
        %v1816 = vrot.slane %v1788, %v1815
        %v1817 = vcombine.high %v1795, %v1795
        %v1818 = vcombine.high %v1802, %v1802
        %v1819 = vcombine.high %v1809, %v1809
        %v1820 = vcombine.high %v1816, %v1816
        %v1822 = vunpack.c.l.s4 1966171168
        %v1823 = vunpack.c.0.s8 %v1822
        %v1824 = vlaneseq
        %v1825 = vshrl.u32 %v1824, 7
        %v1826 = vsub.s32 %v1823, %v1825
        %v1827 = vrot.slane %v1519, %v1826
        %v1829 = vunpack.c.l.s4 1966171168
        %v1830 = vunpack.c.0.s8 %v1829
        %v1831 = vlaneseq
        %v1832 = vshrl.u32 %v1831, 7
        %v1833 = vsub.s32 %v1830, %v1832
        %v1834 = vrot.slane %v1827, %v1833
        %1884 = vmatprep.subr.bf16.mxu0 %v729
        %1885 = vmatpush1.bf16.msra.mxu0 %v728
        %1886 = vmatprep.subr.bf16.mxu0 %v731
        %1887 = vmatpush1.bf16.msra.mxu0 %v730
        %1888 = vmatprep.subr.bf16.mxu0 %v733
        %1889 = vmatpush1.bf16.msra.mxu0 %v732
        %1890 = vmatprep.subr.bf16.mxu0 %v735
        %1891 = vmatpush1.bf16.msra.mxu0 %v734
        %1892 = vmatprep.subr.bf16.mxu0 %v737
        %1893 = vmatpush1.bf16.msra.mxu0 %v736
        %1894 = vmatprep.subr.bf16.mxu0 %v739
        %1895 = vmatpush1.bf16.msra.mxu0 %v738
        %1896 = vmatprep.subr.bf16.mxu0 %v741
        %1897 = vmatpush1.bf16.msra.mxu0 %v740
        %1898 = vmatprep.subr.bf16.mxu0 %v743
        %1899 = vmatpush1.bf16.msra.mxu0 %v742
        %1900 = vmatprep.subr.bf16.mxu0 %v745
        %1901 = vmatpush1.bf16.msra.mxu0 %v744
        %1902 = vmatprep.subr.bf16.mxu0 %v747
        %1903 = vmatpush1.bf16.msra.mxu0 %v746
        %1904 = vmatprep.subr.bf16.mxu0 %v749
        %1905 = vmatpush1.bf16.msra.mxu0 %v748
        %1906 = vmatprep.subr.bf16.mxu0 %v751
        %1907 = vmatpush1.bf16.msra.mxu0 %v750
        %1908 = vmatprep.subr.bf16.mxu0 %v753
        %1909 = vmatpush1.bf16.msra.mxu0 %v752
        %1910 = vmatprep.subr.bf16.mxu0 %v755
        %1911 = vmatpush1.bf16.msra.mxu0 %v754
        %1912 = vmatprep.subr.bf16.mxu0 %v757
        %1913 = vmatpush1.bf16.msra.mxu0 %v756
        %1914 = vmatprep.subr.bf16.mxu0 %v759
        %1915 = vmatpush1.bf16.msra.mxu0 %v758
        %1916 = vmatprep.mubr.bf16.mxu0 %v1564
        %1917 = vmatmul.mubr.bf16.gmra.mrb[0].mxu0 %v1550
        %v1918 = vpop.f32.mrb[0].mxu0
        %v1919 = vadd.f32 0.0, %v1918
        %v1920 = vpop.f32.mrb[0].mxu0
        %v1921 = vadd.f32 0.0, %v1920
        %v1922 = vpop.f32.mrb[0].mxu0
        %v1923 = vpop.f32.mrb[0].mxu0
        %1924 = vdwg.mxu0
        %1925 = vmatprep.subr.bf16.mxu0 %v761
        %1926 = vmatpush1.bf16.msra.mxu0 %v760
        %1927 = vmatprep.subr.bf16.mxu0 %v763
        %1928 = vmatpush1.bf16.msra.mxu0 %v762
        %1929 = vmatprep.subr.bf16.mxu0 %v765
        %1930 = vmatpush1.bf16.msra.mxu0 %v764
        %1931 = vmatprep.subr.bf16.mxu0 %v767
        %1932 = vmatpush1.bf16.msra.mxu0 %v766
        %1933 = vmatprep.subr.bf16.mxu0 %v769
        %1934 = vmatpush1.bf16.msra.mxu0 %v768
        %1935 = vmatprep.subr.bf16.mxu0 %v771
        %1936 = vmatpush1.bf16.msra.mxu0 %v770
        %1937 = vmatprep.subr.bf16.mxu0 %v773
        %1938 = vmatpush1.bf16.msra.mxu0 %v772
        %1939 = vmatprep.subr.bf16.mxu0 %v775
        %1940 = vmatpush1.bf16.msra.mxu0 %v774
        %1941 = vmatprep.subr.bf16.mxu0 %v777
        %1942 = vmatpush1.bf16.msra.mxu0 %v776
        %1943 = vmatprep.subr.bf16.mxu0 %v779
        %1944 = vmatpush1.bf16.msra.mxu0 %v778
        %1945 = vmatprep.subr.bf16.mxu0 %v781
        %1946 = vmatpush1.bf16.msra.mxu0 %v780
        %1947 = vmatprep.subr.bf16.mxu0 %v783
        %1948 = vmatpush1.bf16.msra.mxu0 %v782
        %1949 = vmatprep.subr.bf16.mxu0 %v785
        %1950 = vmatpush1.bf16.msra.mxu0 %v784
        %1951 = vmatprep.subr.bf16.mxu0 %v787
        %1952 = vmatpush1.bf16.msra.mxu0 %v786
        %1953 = vmatprep.subr.bf16.mxu0 %v789
        %1954 = vmatpush1.bf16.msra.mxu0 %v788
        %1955 = vmatprep.subr.bf16.mxu0 %v791
        %1956 = vmatpush1.bf16.msra.mxu0 %v790
        %1957 = vmatprep.mubr.bf16.mxu0 %v1574
        %1958 = vmatmul.mubr.bf16.gmra.mrb[0].mxu0 %v1572
        %v1959 = vpop.f32.mrb[0].mxu0
        %v1960 = vadd.f32 %v1919, %v1959
        %v1961 = vpop.f32.mrb[0].mxu0
        %v1962 = vadd.f32 %v1921, %v1961
        %v1963 = vpop.f32.mrb[0].mxu0
        %v1964 = vpop.f32.mrb[0].mxu0
        %1965 = vdwg.mxu0
        %1966 = vmatprep.subr.bf16.mxu0 %v793
        %1967 = vmatpush1.bf16.msra.mxu0 %v792
        %1968 = vmatprep.subr.bf16.mxu0 %v795
        %1969 = vmatpush1.bf16.msra.mxu0 %v794
        %1970 = vmatprep.subr.bf16.mxu0 %v797
        %1971 = vmatpush1.bf16.msra.mxu0 %v796
        %1972 = vmatprep.subr.bf16.mxu0 %v799
        %1973 = vmatpush1.bf16.msra.mxu0 %v798
        %1974 = vmatprep.subr.bf16.mxu0 %v801
        %1975 = vmatpush1.bf16.msra.mxu0 %v800
        %1976 = vmatprep.subr.bf16.mxu0 %v803
        %1977 = vmatpush1.bf16.msra.mxu0 %v802
        %1978 = vmatprep.subr.bf16.mxu0 %v805
        %1979 = vmatpush1.bf16.msra.mxu0 %v804
        %1980 = vmatprep.subr.bf16.mxu0 %v807
        %1981 = vmatpush1.bf16.msra.mxu0 %v806
        %1982 = vmatprep.subr.bf16.mxu0 %v809
        %1983 = vmatpush1.bf16.msra.mxu0 %v808
        %1984 = vmatprep.subr.bf16.mxu0 %v811
        %1985 = vmatpush1.bf16.msra.mxu0 %v810
        %1986 = vmatprep.subr.bf16.mxu0 %v813
        %1987 = vmatpush1.bf16.msra.mxu0 %v812
        %1988 = vmatprep.subr.bf16.mxu0 %v815
        %1989 = vmatpush1.bf16.msra.mxu0 %v814
        %1990 = vmatprep.subr.bf16.mxu0 %v817
        %1991 = vmatpush1.bf16.msra.mxu0 %v816
        %1992 = vmatprep.subr.bf16.mxu0 %v819
        %1993 = vmatpush1.bf16.msra.mxu0 %v818
        %1994 = vmatprep.subr.bf16.mxu0 %v821
        %1995 = vmatpush1.bf16.msra.mxu0 %v820
        %1996 = vmatprep.subr.bf16.mxu0 %v823
        %1997 = vmatpush1.bf16.msra.mxu0 %v822
        %1998 = vmatprep.mubr.bf16.mxu0 %v1571
        %1999 = vmatmul.mubr.bf16.gmra.mrb[0].mxu0 %v1557
        %v2000 = vpop.f32.mrb[0].mxu0
        %v2001 = vadd.f32 %v1960, %v2000
        %v2002 = vpop.f32.mrb[0].mxu0
        %v2003 = vadd.f32 %v1962, %v2002
        %v2004 = vpop.f32.mrb[0].mxu0
        %v2005 = vpop.f32.mrb[0].mxu0
        %2006 = vdwg.mxu0
        %2007 = vmatprep.subr.bf16.mxu0 %v825
        %2008 = vmatpush1.bf16.msra.mxu0 %v824
        %2009 = vmatprep.subr.bf16.mxu0 %v827
        %2010 = vmatpush1.bf16.msra.mxu0 %v826
        %2011 = vmatprep.subr.bf16.mxu0 %v829
        %2012 = vmatpush1.bf16.msra.mxu0 %v828
        %2013 = vmatprep.subr.bf16.mxu0 %v831
        %2014 = vmatpush1.bf16.msra.mxu0 %v830
        %2015 = vmatprep.subr.bf16.mxu0 %v833
        %2016 = vmatpush1.bf16.msra.mxu0 %v832
        %2017 = vmatprep.subr.bf16.mxu0 %v835
        %2018 = vmatpush1.bf16.msra.mxu0 %v834
        %2019 = vmatprep.subr.bf16.mxu0 %v837
        %2020 = vmatpush1.bf16.msra.mxu0 %v836
        %2021 = vmatprep.subr.bf16.mxu0 %v839
        %2022 = vmatpush1.bf16.msra.mxu0 %v838
        %2023 = vmatprep.subr.bf16.mxu0 %v841
        %2024 = vmatpush1.bf16.msra.mxu0 %v840
        %2025 = vmatprep.subr.bf16.mxu0 %v843
        %2026 = vmatpush1.bf16.msra.mxu0 %v842
        %2027 = vmatprep.subr.bf16.mxu0 %v845
        %2028 = vmatpush1.bf16.msra.mxu0 %v844
        %2029 = vmatprep.subr.bf16.mxu0 %v847
        %2030 = vmatpush1.bf16.msra.mxu0 %v846
        %2031 = vmatprep.subr.bf16.mxu0 %v849
        %2032 = vmatpush1.bf16.msra.mxu0 %v848
        %2033 = vmatprep.subr.bf16.mxu0 %v851
        %2034 = vmatpush1.bf16.msra.mxu0 %v850
        %2035 = vmatprep.subr.bf16.mxu0 %v853
        %2036 = vmatpush1.bf16.msra.mxu0 %v852
        %2037 = vmatprep.subr.bf16.mxu0 %v855
        %2038 = vmatpush1.bf16.msra.mxu0 %v854
        %2039 = vmatprep.mubr.bf16.mxu0 %v1575
        %2040 = vmatmul.mubr.bf16.gmra.mrb[0].mxu0 %v1573
        %v2041 = vpop.f32.mrb[0].mxu0
        %v2042 = vadd.f32 %v2001, %v2041
        %v2043 = vpop.f32.mrb[0].mxu0
        %v2044 = vadd.f32 %v2003, %v2043
        %v2045 = vpop.f32.mrb[0].mxu0
        %v2046 = vpop.f32.mrb[0].mxu0
        %2047 = vdwg.mxu0
        %2048 = vmatprep.subr.bf16.mxu0 %v857
        %2049 = vmatpush1.bf16.msra.mxu0 %v856
        %2050 = vmatprep.subr.bf16.mxu0 %v859
        %2051 = vmatpush1.bf16.msra.mxu0 %v858
        %2052 = vmatprep.subr.bf16.mxu0 %v861
        %2053 = vmatpush1.bf16.msra.mxu0 %v860
        %2054 = vmatprep.subr.bf16.mxu0 %v863
        %2055 = vmatpush1.bf16.msra.mxu0 %v862
        %2056 = vmatprep.subr.bf16.mxu0 %v865
        %2057 = vmatpush1.bf16.msra.mxu0 %v864
        %2058 = vmatprep.subr.bf16.mxu0 %v867
        %2059 = vmatpush1.bf16.msra.mxu0 %v866
        %2060 = vmatprep.subr.bf16.mxu0 %v869
        %2061 = vmatpush1.bf16.msra.mxu0 %v868
        %2062 = vmatprep.subr.bf16.mxu0 %v871
        %2063 = vmatpush1.bf16.msra.mxu0 %v870
        %2064 = vmatprep.subr.bf16.mxu0 %v873
        %2065 = vmatpush1.bf16.msra.mxu0 %v872
        %2066 = vmatprep.subr.bf16.mxu0 %v875
        %2067 = vmatpush1.bf16.msra.mxu0 %v874
        %2068 = vmatprep.subr.bf16.mxu0 %v877
        %2069 = vmatpush1.bf16.msra.mxu0 %v876
        %2070 = vmatprep.subr.bf16.mxu0 %v879
        %2071 = vmatpush1.bf16.msra.mxu0 %v878
        %2072 = vmatprep.subr.bf16.mxu0 %v881
        %2073 = vmatpush1.bf16.msra.mxu0 %v880
        %2074 = vmatprep.subr.bf16.mxu0 %v883
        %2075 = vmatpush1.bf16.msra.mxu0 %v882
        %2076 = vmatprep.subr.bf16.mxu0 %v885
        %2077 = vmatpush1.bf16.msra.mxu0 %v884
        %2078 = vmatprep.subr.bf16.mxu0 %v887
        %2079 = vmatpush1.bf16.msra.mxu0 %v886
        %2080 = vmatprep.mubr.bf16.mxu0 %v1613
        %2081 = vmatmul.mubr.bf16.gmra.mrb[0].mxu0 %v1599
        %v2082 = vpop.f32.mrb[0].mxu0
        %v2083 = vadd.f32 %v2042, %v2082
        %v2084 = vpop.f32.mrb[0].mxu0
        %v2085 = vadd.f32 %v2044, %v2084
        %v2086 = vpop.f32.mrb[0].mxu0
        %v2087 = vpop.f32.mrb[0].mxu0
        %2088 = vdwg.mxu0
        %2089 = vmatprep.subr.bf16.mxu0 %v889
        %2090 = vmatpush1.bf16.msra.mxu0 %v888
        %2091 = vmatprep.subr.bf16.mxu0 %v891
        %2092 = vmatpush1.bf16.msra.mxu0 %v890
        %2093 = vmatprep.subr.bf16.mxu0 %v893
        %2094 = vmatpush1.bf16.msra.mxu0 %v892
        %2095 = vmatprep.subr.bf16.mxu0 %v895
        %2096 = vmatpush1.bf16.msra.mxu0 %v894
        %2097 = vmatprep.subr.bf16.mxu0 %v897
        %2098 = vmatpush1.bf16.msra.mxu0 %v896
        %2099 = vmatprep.subr.bf16.mxu0 %v899
        %2100 = vmatpush1.bf16.msra.mxu0 %v898
        %2101 = vmatprep.subr.bf16.mxu0 %v901
        %2102 = vmatpush1.bf16.msra.mxu0 %v900
        %2103 = vmatprep.subr.bf16.mxu0 %v903
        %2104 = vmatpush1.bf16.msra.mxu0 %v902
        %2105 = vmatprep.subr.bf16.mxu0 %v905
        %2106 = vmatpush1.bf16.msra.mxu0 %v904
        %2107 = vmatprep.subr.bf16.mxu0 %v907
        %2108 = vmatpush1.bf16.msra.mxu0 %v906
        %2109 = vmatprep.subr.bf16.mxu0 %v909
        %2110 = vmatpush1.bf16.msra.mxu0 %v908
        %2111 = vmatprep.subr.bf16.mxu0 %v911
        %2112 = vmatpush1.bf16.msra.mxu0 %v910
        %2113 = vmatprep.subr.bf16.mxu0 %v913
        %2114 = vmatpush1.bf16.msra.mxu0 %v912
        %2115 = vmatprep.subr.bf16.mxu0 %v915
        %2116 = vmatpush1.bf16.msra.mxu0 %v914
        %2117 = vmatprep.subr.bf16.mxu0 %v917
        %2118 = vmatpush1.bf16.msra.mxu0 %v916
        %2119 = vmatprep.subr.bf16.mxu0 %v919
        %2120 = vmatpush1.bf16.msra.mxu0 %v918
        %2121 = vmatprep.mubr.bf16.mxu0 %v1623
        %2122 = vmatmul.mubr.bf16.gmra.mrb[0].mxu0 %v1621
        %v2123 = vpop.f32.mrb[0].mxu0
        %v2124 = vadd.f32 %v2083, %v2123
        %v2125 = vpop.f32.mrb[0].mxu0
        %v2126 = vadd.f32 %v2085, %v2125
        %v2127 = vpop.f32.mrb[0].mxu0
        %v2128 = vpop.f32.mrb[0].mxu0
        %2129 = vdwg.mxu0
        %2130 = vmatprep.subr.bf16.mxu0 %v921
        %2131 = vmatpush1.bf16.msra.mxu0 %v920
        %2132 = vmatprep.subr.bf16.mxu0 %v923
        %2133 = vmatpush1.bf16.msra.mxu0 %v922
        %2134 = vmatprep.subr.bf16.mxu0 %v925
        %2135 = vmatpush1.bf16.msra.mxu0 %v924
        %2136 = vmatprep.subr.bf16.mxu0 %v927
        %2137 = vmatpush1.bf16.msra.mxu0 %v926
        %2138 = vmatprep.subr.bf16.mxu0 %v929
        %2139 = vmatpush1.bf16.msra.mxu0 %v928
        %2140 = vmatprep.subr.bf16.mxu0 %v931
        %2141 = vmatpush1.bf16.msra.mxu0 %v930
        %2142 = vmatprep.subr.bf16.mxu0 %v933
        %2143 = vmatpush1.bf16.msra.mxu0 %v932
        %2144 = vmatprep.subr.bf16.mxu0 %v935
        %2145 = vmatpush1.bf16.msra.mxu0 %v934
        %2146 = vmatprep.subr.bf16.mxu0 %v937
        %2147 = vmatpush1.bf16.msra.mxu0 %v936
        %2148 = vmatprep.subr.bf16.mxu0 %v939
        %2149 = vmatpush1.bf16.msra.mxu0 %v938
        %2150 = vmatprep.subr.bf16.mxu0 %v941
        %2151 = vmatpush1.bf16.msra.mxu0 %v940
        %2152 = vmatprep.subr.bf16.mxu0 %v943
        %2153 = vmatpush1.bf16.msra.mxu0 %v942
        %2154 = vmatprep.subr.bf16.mxu0 %v945
        %2155 = vmatpush1.bf16.msra.mxu0 %v944
        %2156 = vmatprep.subr.bf16.mxu0 %v947
        %2157 = vmatpush1.bf16.msra.mxu0 %v946
        %2158 = vmatprep.subr.bf16.mxu0 %v949
        %2159 = vmatpush1.bf16.msra.mxu0 %v948
        %2160 = vmatprep.subr.bf16.mxu0 %v951
        %2161 = vmatpush1.bf16.msra.mxu0 %v950
        %2162 = vmatprep.mubr.bf16.mxu0 %v1620
        %2163 = vmatmul.mubr.bf16.gmra.mrb[0].mxu0 %v1606
        %v2164 = vpop.f32.mrb[0].mxu0
        %v2165 = vadd.f32 %v2124, %v2164
        %v2166 = vpop.f32.mrb[0].mxu0
        %v2167 = vadd.f32 %v2126, %v2166
        %v2168 = vpop.f32.mrb[0].mxu0
        %v2169 = vpop.f32.mrb[0].mxu0
        %2170 = vdwg.mxu0
        %2171 = vmatprep.subr.bf16.mxu0 %v953
        %2172 = vmatpush1.bf16.msra.mxu0 %v952
        %2173 = vmatprep.subr.bf16.mxu0 %v955
        %2174 = vmatpush1.bf16.msra.mxu0 %v954
        %2175 = vmatprep.subr.bf16.mxu0 %v957
        %2176 = vmatpush1.bf16.msra.mxu0 %v956
        %2177 = vmatprep.subr.bf16.mxu0 %v959
        %2178 = vmatpush1.bf16.msra.mxu0 %v958
        %2179 = vmatprep.subr.bf16.mxu0 %v961
        %2180 = vmatpush1.bf16.msra.mxu0 %v960
        %2181 = vmatprep.subr.bf16.mxu0 %v963
        %2182 = vmatpush1.bf16.msra.mxu0 %v962
        %2183 = vmatprep.subr.bf16.mxu0 %v965
        %2184 = vmatpush1.bf16.msra.mxu0 %v964
        %2185 = vmatprep.subr.bf16.mxu0 %v967
        %2186 = vmatpush1.bf16.msra.mxu0 %v966
        %2187 = vmatprep.subr.bf16.mxu0 %v969
        %2188 = vmatpush1.bf16.msra.mxu0 %v968
        %2189 = vmatprep.subr.bf16.mxu0 %v971
        %2190 = vmatpush1.bf16.msra.mxu0 %v970
        %2191 = vmatprep.subr.bf16.mxu0 %v973
        %2192 = vmatpush1.bf16.msra.mxu0 %v972
        %2193 = vmatprep.subr.bf16.mxu0 %v975
        %2194 = vmatpush1.bf16.msra.mxu0 %v974
        %2195 = vmatprep.subr.bf16.mxu0 %v977
        %2196 = vmatpush1.bf16.msra.mxu0 %v976
        %2197 = vmatprep.subr.bf16.mxu0 %v979
        %2198 = vmatpush1.bf16.msra.mxu0 %v978
        %2199 = vmatprep.subr.bf16.mxu0 %v981
        %2200 = vmatpush1.bf16.msra.mxu0 %v980
        %2201 = vmatprep.subr.bf16.mxu0 %v983
        %2202 = vmatpush1.bf16.msra.mxu0 %v982
        %2203 = vmatprep.mubr.bf16.mxu0 %v1624
        %2204 = vmatmul.mubr.bf16.gmra.mrb[0].mxu0 %v1622
        %v2205 = vpop.f32.mrb[0].mxu0
        %v2206 = vadd.f32 %v2165, %v2205
        %v2207 = vpop.f32.mrb[0].mxu0
        %v2208 = vadd.f32 %v2167, %v2207
        %v2209 = vpop.f32.mrb[0].mxu0
        %v2210 = vpop.f32.mrb[0].mxu0
        %2211 = vdwg.mxu0
        %2212 = vmatprep.subr.bf16.mxu0 %v985
        %2213 = vmatpush1.bf16.msra.mxu0 %v984
        %2214 = vmatprep.subr.bf16.mxu0 %v987
        %2215 = vmatpush1.bf16.msra.mxu0 %v986
        %2216 = vmatprep.subr.bf16.mxu0 %v989
        %2217 = vmatpush1.bf16.msra.mxu0 %v988
        %2218 = vmatprep.subr.bf16.mxu0 %v991
        %2219 = vmatpush1.bf16.msra.mxu0 %v990
        %2220 = vmatprep.subr.bf16.mxu0 %v993
        %2221 = vmatpush1.bf16.msra.mxu0 %v992
        %2222 = vmatprep.subr.bf16.mxu0 %v995
        %2223 = vmatpush1.bf16.msra.mxu0 %v994
        %2224 = vmatprep.subr.bf16.mxu0 %v997
        %2225 = vmatpush1.bf16.msra.mxu0 %v996
        %2226 = vmatprep.subr.bf16.mxu0 %v999
        %2227 = vmatpush1.bf16.msra.mxu0 %v998
        %2228 = vmatprep.subr.bf16.mxu0 %v1001
        %2229 = vmatpush1.bf16.msra.mxu0 %v1000
        %2230 = vmatprep.subr.bf16.mxu0 %v1003
        %2231 = vmatpush1.bf16.msra.mxu0 %v1002
        %2232 = vmatprep.subr.bf16.mxu0 %v1005
        %2233 = vmatpush1.bf16.msra.mxu0 %v1004
        %2234 = vmatprep.subr.bf16.mxu0 %v1007
        %2235 = vmatpush1.bf16.msra.mxu0 %v1006
        %2236 = vmatprep.subr.bf16.mxu0 %v1009
        %2237 = vmatpush1.bf16.msra.mxu0 %v1008
        %2238 = vmatprep.subr.bf16.mxu0 %v1011
        %2239 = vmatpush1.bf16.msra.mxu0 %v1010
        %2240 = vmatprep.subr.bf16.mxu0 %v1013
        %2241 = vmatpush1.bf16.msra.mxu0 %v1012
        %2242 = vmatprep.subr.bf16.mxu0 %v1015
        %2243 = vmatpush1.bf16.msra.mxu0 %v1014
        %2244 = vmatprep.mubr.bf16.mxu0 %v1662
        %2245 = vmatmul.mubr.bf16.gmra.mrb[0].mxu0 %v1648
        %v2246 = vpop.f32.mrb[0].mxu0
        %v2247 = vadd.f32 %v2206, %v2246
        %v2248 = vpop.f32.mrb[0].mxu0
        %v2249 = vadd.f32 %v2208, %v2248
        %v2250 = vpop.f32.mrb[0].mxu0
        %v2251 = vpop.f32.mrb[0].mxu0
        %2252 = vdwg.mxu0
        %2253 = vmatprep.subr.bf16.mxu0 %v1017
        %2254 = vmatpush1.bf16.msra.mxu0 %v1016
        %2255 = vmatprep.subr.bf16.mxu0 %v1019
        %2256 = vmatpush1.bf16.msra.mxu0 %v1018
        %2257 = vmatprep.subr.bf16.mxu0 %v1021
        %2258 = vmatpush1.bf16.msra.mxu0 %v1020
        %2259 = vmatprep.subr.bf16.mxu0 %v1023
        %2260 = vmatpush1.bf16.msra.mxu0 %v1022
        %2261 = vmatprep.subr.bf16.mxu0 %v1025
        %2262 = vmatpush1.bf16.msra.mxu0 %v1024
        %2263 = vmatprep.subr.bf16.mxu0 %v1027
        %2264 = vmatpush1.bf16.msra.mxu0 %v1026
        %2265 = vmatprep.subr.bf16.mxu0 %v1029
        %2266 = vmatpush1.bf16.msra.mxu0 %v1028
        %2267 = vmatprep.subr.bf16.mxu0 %v1031
        %2268 = vmatpush1.bf16.msra.mxu0 %v1030
        %2269 = vmatprep.subr.bf16.mxu0 %v1033
        %2270 = vmatpush1.bf16.msra.mxu0 %v1032
        %2271 = vmatprep.subr.bf16.mxu0 %v1035
        %2272 = vmatpush1.bf16.msra.mxu0 %v1034
        %2273 = vmatprep.subr.bf16.mxu0 %v1037
        %2274 = vmatpush1.bf16.msra.mxu0 %v1036
        %2275 = vmatprep.subr.bf16.mxu0 %v1039
        %2276 = vmatpush1.bf16.msra.mxu0 %v1038
        %2277 = vmatprep.subr.bf16.mxu0 %v1041
        %2278 = vmatpush1.bf16.msra.mxu0 %v1040
        %2279 = vmatprep.subr.bf16.mxu0 %v1043
        %2280 = vmatpush1.bf16.msra.mxu0 %v1042
        %2281 = vmatprep.subr.bf16.mxu0 %v1045
        %2282 = vmatpush1.bf16.msra.mxu0 %v1044
        %2283 = vmatprep.subr.bf16.mxu0 %v1047
        %2284 = vmatpush1.bf16.msra.mxu0 %v1046
        %2285 = vmatprep.mubr.bf16.mxu0 %v1672
        %2286 = vmatmul.mubr.bf16.gmra.mrb[0].mxu0 %v1670
        %v2287 = vpop.f32.mrb[0].mxu0
        %v2288 = vadd.f32 %v2247, %v2287
        %v2289 = vpop.f32.mrb[0].mxu0
        %v2290 = vadd.f32 %v2249, %v2289
        %v2291 = vpop.f32.mrb[0].mxu0
        %v2292 = vpop.f32.mrb[0].mxu0
        %2293 = vdwg.mxu0
        %2294 = vmatprep.subr.bf16.mxu0 %v1049
        %2295 = vmatpush1.bf16.msra.mxu0 %v1048
        %2296 = vmatprep.subr.bf16.mxu0 %v1051
        %2297 = vmatpush1.bf16.msra.mxu0 %v1050
        %2298 = vmatprep.subr.bf16.mxu0 %v1053
        %2299 = vmatpush1.bf16.msra.mxu0 %v1052
        %2300 = vmatprep.subr.bf16.mxu0 %v1055
        %2301 = vmatpush1.bf16.msra.mxu0 %v1054
        %2302 = vmatprep.subr.bf16.mxu0 %v1057
        %2303 = vmatpush1.bf16.msra.mxu0 %v1056
        %2304 = vmatprep.subr.bf16.mxu0 %v1059
        %2305 = vmatpush1.bf16.msra.mxu0 %v1058
        %2306 = vmatprep.subr.bf16.mxu0 %v1061
        %2307 = vmatpush1.bf16.msra.mxu0 %v1060
        %2308 = vmatprep.subr.bf16.mxu0 %v1063
        %2309 = vmatpush1.bf16.msra.mxu0 %v1062
        %2310 = vmatprep.subr.bf16.mxu0 %v1065
        %2311 = vmatpush1.bf16.msra.mxu0 %v1064
        %2312 = vmatprep.subr.bf16.mxu0 %v1067
        %2313 = vmatpush1.bf16.msra.mxu0 %v1066
        %2314 = vmatprep.subr.bf16.mxu0 %v1069
        %2315 = vmatpush1.bf16.msra.mxu0 %v1068
        %2316 = vmatprep.subr.bf16.mxu0 %v1071
        %2317 = vmatpush1.bf16.msra.mxu0 %v1070
        %2318 = vmatprep.subr.bf16.mxu0 %v1073
        %2319 = vmatpush1.bf16.msra.mxu0 %v1072
        %2320 = vmatprep.subr.bf16.mxu0 %v1075
        %2321 = vmatpush1.bf16.msra.mxu0 %v1074
        %2322 = vmatprep.subr.bf16.mxu0 %v1077
        %2323 = vmatpush1.bf16.msra.mxu0 %v1076
        %2324 = vmatprep.subr.bf16.mxu0 %v1079
        %2325 = vmatpush1.bf16.msra.mxu0 %v1078
        %2326 = vmatprep.mubr.bf16.mxu0 %v1669
        %2327 = vmatmul.mubr.bf16.gmra.mrb[0].mxu0 %v1655
        %v2328 = vpop.f32.mrb[0].mxu0
        %v2329 = vadd.f32 %v2288, %v2328
        %v2330 = vpop.f32.mrb[0].mxu0
        %v2331 = vadd.f32 %v2290, %v2330
        %v2332 = vpop.f32.mrb[0].mxu0
        %v2333 = vpop.f32.mrb[0].mxu0
        %2334 = vdwg.mxu0
        %2335 = vmatprep.subr.bf16.mxu0 %v1081
        %2336 = vmatpush1.bf16.msra.mxu0 %v1080
        %2337 = vmatprep.subr.bf16.mxu0 %v1083
        %2338 = vmatpush1.bf16.msra.mxu0 %v1082
        %2339 = vmatprep.subr.bf16.mxu0 %v1085
        %2340 = vmatpush1.bf16.msra.mxu0 %v1084
        %2341 = vmatprep.subr.bf16.mxu0 %v1087
        %2342 = vmatpush1.bf16.msra.mxu0 %v1086
        %2343 = vmatprep.subr.bf16.mxu0 %v1089
        %2344 = vmatpush1.bf16.msra.mxu0 %v1088
        %2345 = vmatprep.subr.bf16.mxu0 %v1091
        %2346 = vmatpush1.bf16.msra.mxu0 %v1090
        %2347 = vmatprep.subr.bf16.mxu0 %v1093
        %2348 = vmatpush1.bf16.msra.mxu0 %v1092
        %2349 = vmatprep.subr.bf16.mxu0 %v1095
        %2350 = vmatpush1.bf16.msra.mxu0 %v1094
        %2351 = vmatprep.subr.bf16.mxu0 %v1097
        %2352 = vmatpush1.bf16.msra.mxu0 %v1096
        %2353 = vmatprep.subr.bf16.mxu0 %v1099
        %2354 = vmatpush1.bf16.msra.mxu0 %v1098
        %2355 = vmatprep.subr.bf16.mxu0 %v1101
        %2356 = vmatpush1.bf16.msra.mxu0 %v1100
        %2357 = vmatprep.subr.bf16.mxu0 %v1103
        %2358 = vmatpush1.bf16.msra.mxu0 %v1102
        %2359 = vmatprep.subr.bf16.mxu0 %v1105
        %2360 = vmatpush1.bf16.msra.mxu0 %v1104
        %2361 = vmatprep.subr.bf16.mxu0 %v1107
        %2362 = vmatpush1.bf16.msra.mxu0 %v1106
        %2363 = vmatprep.subr.bf16.mxu0 %v1109
        %2364 = vmatpush1.bf16.msra.mxu0 %v1108
        %2365 = vmatprep.subr.bf16.mxu0 %v1111
        %2366 = vmatpush1.bf16.msra.mxu0 %v1110
        %2367 = vmatprep.mubr.bf16.mxu0 %v1673
        %2368 = vmatmul.mubr.bf16.gmra.mrb[0].mxu0 %v1671
        %v2369 = vpop.f32.mrb[0].mxu0
        %v2370 = vadd.f32 %v2329, %v2369
        %v2371 = vpop.f32.mrb[0].mxu0
        %v2372 = vadd.f32 %v2331, %v2371
        %v2373 = vpop.f32.mrb[0].mxu0
        %v2374 = vpop.f32.mrb[0].mxu0
        %2375 = vdwg.mxu0
        %2376 = vmatprep.subr.bf16.mxu0 %v1113
        %2377 = vmatpush1.bf16.msra.mxu0 %v1112
        %2378 = vmatprep.subr.bf16.mxu0 %v1115
        %2379 = vmatpush1.bf16.msra.mxu0 %v1114
        %2380 = vmatprep.subr.bf16.mxu0 %v1117
        %2381 = vmatpush1.bf16.msra.mxu0 %v1116
        %2382 = vmatprep.subr.bf16.mxu0 %v1119
        %2383 = vmatpush1.bf16.msra.mxu0 %v1118
        %2384 = vmatprep.subr.bf16.mxu0 %v1121
        %2385 = vmatpush1.bf16.msra.mxu0 %v1120
        %2386 = vmatprep.subr.bf16.mxu0 %v1123
        %2387 = vmatpush1.bf16.msra.mxu0 %v1122
        %2388 = vmatprep.subr.bf16.mxu0 %v1125
        %2389 = vmatpush1.bf16.msra.mxu0 %v1124
        %2390 = vmatprep.subr.bf16.mxu0 %v1127
        %2391 = vmatpush1.bf16.msra.mxu0 %v1126
        %2392 = vmatprep.subr.bf16.mxu0 %v1129
        %2393 = vmatpush1.bf16.msra.mxu0 %v1128
        %2394 = vmatprep.subr.bf16.mxu0 %v1131
        %2395 = vmatpush1.bf16.msra.mxu0 %v1130
        %2396 = vmatprep.subr.bf16.mxu0 %v1133
        %2397 = vmatpush1.bf16.msra.mxu0 %v1132
        %2398 = vmatprep.subr.bf16.mxu0 %v1135
        %2399 = vmatpush1.bf16.msra.mxu0 %v1134
        %2400 = vmatprep.subr.bf16.mxu0 %v1137
        %2401 = vmatpush1.bf16.msra.mxu0 %v1136
        %2402 = vmatprep.subr.bf16.mxu0 %v1139
        %2403 = vmatpush1.bf16.msra.mxu0 %v1138
        %2404 = vmatprep.subr.bf16.mxu0 %v1141
        %2405 = vmatpush1.bf16.msra.mxu0 %v1140
        %2406 = vmatprep.subr.bf16.mxu0 %v1143
        %2407 = vmatpush1.bf16.msra.mxu0 %v1142
        %2408 = vmatprep.mubr.bf16.mxu0 %v1711
        %2409 = vmatmul.mubr.bf16.gmra.mrb[0].mxu0 %v1697
        %v2410 = vpop.f32.mrb[0].mxu0
        %v2411 = vadd.f32 %v2370, %v2410
        %v2412 = vpop.f32.mrb[0].mxu0
        %v2413 = vadd.f32 %v2372, %v2412
        %v2414 = vpop.f32.mrb[0].mxu0
        %v2415 = vpop.f32.mrb[0].mxu0
        %2416 = vdwg.mxu0
        %2417 = vmatprep.subr.bf16.mxu0 %v1145
        %2418 = vmatpush1.bf16.msra.mxu0 %v1144
        %2419 = vmatprep.subr.bf16.mxu0 %v1147
        %2420 = vmatpush1.bf16.msra.mxu0 %v1146
        %2421 = vmatprep.subr.bf16.mxu0 %v1149
        %2422 = vmatpush1.bf16.msra.mxu0 %v1148
        %2423 = vmatprep.subr.bf16.mxu0 %v1151
        %2424 = vmatpush1.bf16.msra.mxu0 %v1150
        %2425 = vmatprep.subr.bf16.mxu0 %v1153
        %2426 = vmatpush1.bf16.msra.mxu0 %v1152
        %2427 = vmatprep.subr.bf16.mxu0 %v1155
        %2428 = vmatpush1.bf16.msra.mxu0 %v1154
        %2429 = vmatprep.subr.bf16.mxu0 %v1157
        %2430 = vmatpush1.bf16.msra.mxu0 %v1156
        %2431 = vmatprep.subr.bf16.mxu0 %v1159
        %2432 = vmatpush1.bf16.msra.mxu0 %v1158
        %2433 = vmatprep.subr.bf16.mxu0 %v1161
        %2434 = vmatpush1.bf16.msra.mxu0 %v1160
        %2435 = vmatprep.subr.bf16.mxu0 %v1163
        %2436 = vmatpush1.bf16.msra.mxu0 %v1162
        %2437 = vmatprep.subr.bf16.mxu0 %v1165
        %2438 = vmatpush1.bf16.msra.mxu0 %v1164
        %2439 = vmatprep.subr.bf16.mxu0 %v1167
        %2440 = vmatpush1.bf16.msra.mxu0 %v1166
        %2441 = vmatprep.subr.bf16.mxu0 %v1169
        %2442 = vmatpush1.bf16.msra.mxu0 %v1168
        %2443 = vmatprep.subr.bf16.mxu0 %v1171
        %2444 = vmatpush1.bf16.msra.mxu0 %v1170
        %2445 = vmatprep.subr.bf16.mxu0 %v1173
        %2446 = vmatpush1.bf16.msra.mxu0 %v1172
        %2447 = vmatprep.subr.bf16.mxu0 %v1175
        %2448 = vmatpush1.bf16.msra.mxu0 %v1174
        %2449 = vmatprep.mubr.bf16.mxu0 %v1721
        %2450 = vmatmul.mubr.bf16.gmra.mrb[0].mxu0 %v1719
        %v2451 = vpop.f32.mrb[0].mxu0
        %v2452 = vadd.f32 %v2411, %v2451
        %v2453 = vpop.f32.mrb[0].mxu0
        %v2454 = vadd.f32 %v2413, %v2453
        %v2455 = vpop.f32.mrb[0].mxu0
        %v2456 = vpop.f32.mrb[0].mxu0
        %2457 = vdwg.mxu0
        %2458 = vmatprep.subr.bf16.mxu0 %v1177
        %2459 = vmatpush1.bf16.msra.mxu0 %v1176
        %2460 = vmatprep.subr.bf16.mxu0 %v1179
        %2461 = vmatpush1.bf16.msra.mxu0 %v1178
        %2462 = vmatprep.subr.bf16.mxu0 %v1181
        %2463 = vmatpush1.bf16.msra.mxu0 %v1180
        %2464 = vmatprep.subr.bf16.mxu0 %v1183
        %2465 = vmatpush1.bf16.msra.mxu0 %v1182
        %2466 = vmatprep.subr.bf16.mxu0 %v1185
        %2467 = vmatpush1.bf16.msra.mxu0 %v1184
        %2468 = vmatprep.subr.bf16.mxu0 %v1187
        %2469 = vmatpush1.bf16.msra.mxu0 %v1186
        %2470 = vmatprep.subr.bf16.mxu0 %v1189
        %2471 = vmatpush1.bf16.msra.mxu0 %v1188
        %2472 = vmatprep.subr.bf16.mxu0 %v1191
        %2473 = vmatpush1.bf16.msra.mxu0 %v1190
        %2474 = vmatprep.subr.bf16.mxu0 %v1193
        %2475 = vmatpush1.bf16.msra.mxu0 %v1192
        %2476 = vmatprep.subr.bf16.mxu0 %v1195
        %2477 = vmatpush1.bf16.msra.mxu0 %v1194
        %2478 = vmatprep.subr.bf16.mxu0 %v1197
        %2479 = vmatpush1.bf16.msra.mxu0 %v1196
        %2480 = vmatprep.subr.bf16.mxu0 %v1199
        %2481 = vmatpush1.bf16.msra.mxu0 %v1198
        %2482 = vmatprep.subr.bf16.mxu0 %v1201
        %2483 = vmatpush1.bf16.msra.mxu0 %v1200
        %2484 = vmatprep.subr.bf16.mxu0 %v1203
        %2485 = vmatpush1.bf16.msra.mxu0 %v1202
        %2486 = vmatprep.subr.bf16.mxu0 %v1205
        %2487 = vmatpush1.bf16.msra.mxu0 %v1204
        %2488 = vmatprep.subr.bf16.mxu0 %v1207
        %2489 = vmatpush1.bf16.msra.mxu0 %v1206
        %2490 = vmatprep.mubr.bf16.mxu0 %v1718
        %2491 = vmatmul.mubr.bf16.gmra.mrb[0].mxu0 %v1704
        %v2492 = vpop.f32.mrb[0].mxu0
        %v2493 = vadd.f32 %v2452, %v2492
        %v2494 = vpop.f32.mrb[0].mxu0
        %v2495 = vadd.f32 %v2454, %v2494
        %v2496 = vpop.f32.mrb[0].mxu0
        %v2497 = vpop.f32.mrb[0].mxu0
        %2498 = vdwg.mxu0
        %2499 = vmatprep.subr.bf16.mxu0 %v1209
        %2500 = vmatpush1.bf16.msra.mxu0 %v1208
        %2501 = vmatprep.subr.bf16.mxu0 %v1211
        %2502 = vmatpush1.bf16.msra.mxu0 %v1210
        %2503 = vmatprep.subr.bf16.mxu0 %v1213
        %2504 = vmatpush1.bf16.msra.mxu0 %v1212
        %2505 = vmatprep.subr.bf16.mxu0 %v1215
        %2506 = vmatpush1.bf16.msra.mxu0 %v1214
        %2507 = vmatprep.subr.bf16.mxu0 %v1217
        %2508 = vmatpush1.bf16.msra.mxu0 %v1216
        %2509 = vmatprep.subr.bf16.mxu0 %v1219
        %2510 = vmatpush1.bf16.msra.mxu0 %v1218
        %2511 = vmatprep.subr.bf16.mxu0 %v1221
        %2512 = vmatpush1.bf16.msra.mxu0 %v1220
        %2513 = vmatprep.subr.bf16.mxu0 %v1223
        %2514 = vmatpush1.bf16.msra.mxu0 %v1222
        %2515 = vmatprep.subr.bf16.mxu0 %v1225
        %2516 = vmatpush1.bf16.msra.mxu0 %v1224
        %2517 = vmatprep.subr.bf16.mxu0 %v1227
        %2518 = vmatpush1.bf16.msra.mxu0 %v1226
        %2519 = vmatprep.subr.bf16.mxu0 %v1229
        %2520 = vmatpush1.bf16.msra.mxu0 %v1228
        %2521 = vmatprep.subr.bf16.mxu0 %v1231
        %2522 = vmatpush1.bf16.msra.mxu0 %v1230
        %2523 = vmatprep.subr.bf16.mxu0 %v1233
        %2524 = vmatpush1.bf16.msra.mxu0 %v1232
        %2525 = vmatprep.subr.bf16.mxu0 %v1235
        %2526 = vmatpush1.bf16.msra.mxu0 %v1234
        %2527 = vmatprep.subr.bf16.mxu0 %v1237
        %2528 = vmatpush1.bf16.msra.mxu0 %v1236
        %2529 = vmatprep.subr.bf16.mxu0 %v1239
        %2530 = vmatpush1.bf16.msra.mxu0 %v1238
        %2531 = vmatprep.mubr.bf16.mxu0 %v1722
        %2532 = vmatmul.mubr.bf16.gmra.mrb[0].mxu0 %v1720
        %v2533 = vpop.f32.mrb[0].mxu0
        %v2534 = vadd.f32 %v2493, %v2533
        %v2535 = vpop.f32.mrb[0].mxu0
        %v2536 = vadd.f32 %v2495, %v2535
        %v2537 = vpop.f32.mrb[0].mxu0
        %v2538 = vpop.f32.mrb[0].mxu0
        %2539 = vdwg.mxu0
        %2540 = vmatprep.subr.bf16.mxu0 %v1241
        %2541 = vmatpush1.bf16.msra.mxu0 %v1240
        %2542 = vmatprep.subr.bf16.mxu0 %v1243
        %2543 = vmatpush1.bf16.msra.mxu0 %v1242
        %2544 = vmatprep.subr.bf16.mxu0 %v1245
        %2545 = vmatpush1.bf16.msra.mxu0 %v1244
        %2546 = vmatprep.subr.bf16.mxu0 %v1247
        %2547 = vmatpush1.bf16.msra.mxu0 %v1246
        %2548 = vmatprep.subr.bf16.mxu0 %v1249
        %2549 = vmatpush1.bf16.msra.mxu0 %v1248
        %2550 = vmatprep.subr.bf16.mxu0 %v1251
        %2551 = vmatpush1.bf16.msra.mxu0 %v1250
        %2552 = vmatprep.subr.bf16.mxu0 %v1253
        %2553 = vmatpush1.bf16.msra.mxu0 %v1252
        %2554 = vmatprep.subr.bf16.mxu0 %v1255
        %2555 = vmatpush1.bf16.msra.mxu0 %v1254
        %2556 = vmatprep.subr.bf16.mxu0 %v1257
        %2557 = vmatpush1.bf16.msra.mxu0 %v1256
        %2558 = vmatprep.subr.bf16.mxu0 %v1259
        %2559 = vmatpush1.bf16.msra.mxu0 %v1258
        %2560 = vmatprep.subr.bf16.mxu0 %v1261
        %2561 = vmatpush1.bf16.msra.mxu0 %v1260
        %2562 = vmatprep.subr.bf16.mxu0 %v1263
        %2563 = vmatpush1.bf16.msra.mxu0 %v1262
        %2564 = vmatprep.subr.bf16.mxu0 %v1265
        %2565 = vmatpush1.bf16.msra.mxu0 %v1264
        %2566 = vmatprep.subr.bf16.mxu0 %v1267
        %2567 = vmatpush1.bf16.msra.mxu0 %v1266
        %2568 = vmatprep.subr.bf16.mxu0 %v1269
        %2569 = vmatpush1.bf16.msra.mxu0 %v1268
        %2570 = vmatprep.subr.bf16.mxu0 %v1271
        %2571 = vmatpush1.bf16.msra.mxu0 %v1270
        %2572 = vmatprep.mubr.bf16.mxu0 %v1760
        %2573 = vmatmul.mubr.bf16.gmra.mrb[0].mxu0 %v1746
        %v2574 = vpop.f32.mrb[0].mxu0
        %v2575 = vadd.f32 %v2534, %v2574
        %v2576 = vpop.f32.mrb[0].mxu0
        %v2577 = vadd.f32 %v2536, %v2576
        %v2578 = vpop.f32.mrb[0].mxu0
        %v2579 = vpop.f32.mrb[0].mxu0
        %2580 = vdwg.mxu0
        %2581 = vmatprep.subr.bf16.mxu0 %v1273
        %2582 = vmatpush1.bf16.msra.mxu0 %v1272
        %2583 = vmatprep.subr.bf16.mxu0 %v1275
        %2584 = vmatpush1.bf16.msra.mxu0 %v1274
        %2585 = vmatprep.subr.bf16.mxu0 %v1277
        %2586 = vmatpush1.bf16.msra.mxu0 %v1276
        %2587 = vmatprep.subr.bf16.mxu0 %v1279
        %2588 = vmatpush1.bf16.msra.mxu0 %v1278
        %2589 = vmatprep.subr.bf16.mxu0 %v1281
        %2590 = vmatpush1.bf16.msra.mxu0 %v1280
        %2591 = vmatprep.subr.bf16.mxu0 %v1283
        %2592 = vmatpush1.bf16.msra.mxu0 %v1282
        %2593 = vmatprep.subr.bf16.mxu0 %v1285
        %2594 = vmatpush1.bf16.msra.mxu0 %v1284
        %2595 = vmatprep.subr.bf16.mxu0 %v1287
        %2596 = vmatpush1.bf16.msra.mxu0 %v1286
        %2597 = vmatprep.subr.bf16.mxu0 %v1289
        %2598 = vmatpush1.bf16.msra.mxu0 %v1288
        %2599 = vmatprep.subr.bf16.mxu0 %v1291
        %2600 = vmatpush1.bf16.msra.mxu0 %v1290
        %2601 = vmatprep.subr.bf16.mxu0 %v1293
        %2602 = vmatpush1.bf16.msra.mxu0 %v1292
        %2603 = vmatprep.subr.bf16.mxu0 %v1295
        %2604 = vmatpush1.bf16.msra.mxu0 %v1294
        %2605 = vmatprep.subr.bf16.mxu0 %v1297
        %2606 = vmatpush1.bf16.msra.mxu0 %v1296
        %2607 = vmatprep.subr.bf16.mxu0 %v1299
        %2608 = vmatpush1.bf16.msra.mxu0 %v1298
        %2609 = vmatprep.subr.bf16.mxu0 %v1301
        %2610 = vmatpush1.bf16.msra.mxu0 %v1300
        %2611 = vmatprep.subr.bf16.mxu0 %v1303
        %2612 = vmatpush1.bf16.msra.mxu0 %v1302
        %2613 = vmatprep.mubr.bf16.mxu0 %v1770
        %2614 = vmatmul.mubr.bf16.gmra.mrb[0].mxu0 %v1768
        %v2615 = vpop.f32.mrb[0].mxu0
        %v2616 = vadd.f32 %v2575, %v2615
        %v2617 = vpop.f32.mrb[0].mxu0
        %v2618 = vadd.f32 %v2577, %v2617
        %v2619 = vpop.f32.mrb[0].mxu0
        %v2620 = vpop.f32.mrb[0].mxu0
        %2621 = vdwg.mxu0
        %2622 = vmatprep.subr.bf16.mxu0 %v1305
        %2623 = vmatpush1.bf16.msra.mxu0 %v1304
        %2624 = vmatprep.subr.bf16.mxu0 %v1307
        %2625 = vmatpush1.bf16.msra.mxu0 %v1306
        %2626 = vmatprep.subr.bf16.mxu0 %v1309
        %2627 = vmatpush1.bf16.msra.mxu0 %v1308
        %2628 = vmatprep.subr.bf16.mxu0 %v1311
        %2629 = vmatpush1.bf16.msra.mxu0 %v1310
        %2630 = vmatprep.subr.bf16.mxu0 %v1313
        %2631 = vmatpush1.bf16.msra.mxu0 %v1312
        %2632 = vmatprep.subr.bf16.mxu0 %v1315
        %2633 = vmatpush1.bf16.msra.mxu0 %v1314
        %2634 = vmatprep.subr.bf16.mxu0 %v1317
        %2635 = vmatpush1.bf16.msra.mxu0 %v1316
        %2636 = vmatprep.subr.bf16.mxu0 %v1319
        %2637 = vmatpush1.bf16.msra.mxu0 %v1318
        %2638 = vmatprep.subr.bf16.mxu0 %v1321
        %2639 = vmatpush1.bf16.msra.mxu0 %v1320
        %2640 = vmatprep.subr.bf16.mxu0 %v1323
        %2641 = vmatpush1.bf16.msra.mxu0 %v1322
        %2642 = vmatprep.subr.bf16.mxu0 %v1325
        %2643 = vmatpush1.bf16.msra.mxu0 %v1324
        %2644 = vmatprep.subr.bf16.mxu0 %v1327
        %2645 = vmatpush1.bf16.msra.mxu0 %v1326
        %2646 = vmatprep.subr.bf16.mxu0 %v1329
        %2647 = vmatpush1.bf16.msra.mxu0 %v1328
        %2648 = vmatprep.subr.bf16.mxu0 %v1331
        %2649 = vmatpush1.bf16.msra.mxu0 %v1330
        %2650 = vmatprep.subr.bf16.mxu0 %v1333
        %2651 = vmatpush1.bf16.msra.mxu0 %v1332
        %2652 = vmatprep.subr.bf16.mxu0 %v1335
        %2653 = vmatpush1.bf16.msra.mxu0 %v1334
        %2654 = vmatprep.mubr.bf16.mxu0 %v1767
        %2655 = vmatmul.mubr.bf16.gmra.mrb[0].mxu0 %v1753
        %v2656 = vpop.f32.mrb[0].mxu0
        %v2657 = vadd.f32 %v2616, %v2656
        %v2658 = vpop.f32.mrb[0].mxu0
        %v2659 = vadd.f32 %v2618, %v2658
        %v2660 = vpop.f32.mrb[0].mxu0
        %v2661 = vpop.f32.mrb[0].mxu0
        %2662 = vdwg.mxu0
        %2663 = vmatprep.subr.bf16.mxu0 %v1337
        %2664 = vmatpush1.bf16.msra.mxu0 %v1336
        %2665 = vmatprep.subr.bf16.mxu0 %v1339
        %2666 = vmatpush1.bf16.msra.mxu0 %v1338
        %2667 = vmatprep.subr.bf16.mxu0 %v1341
        %2668 = vmatpush1.bf16.msra.mxu0 %v1340
        %2669 = vmatprep.subr.bf16.mxu0 %v1343
        %2670 = vmatpush1.bf16.msra.mxu0 %v1342
        %2671 = vmatprep.subr.bf16.mxu0 %v1345
        %2672 = vmatpush1.bf16.msra.mxu0 %v1344
        %2673 = vmatprep.subr.bf16.mxu0 %v1347
        %2674 = vmatpush1.bf16.msra.mxu0 %v1346
        %2675 = vmatprep.subr.bf16.mxu0 %v1349
        %2676 = vmatpush1.bf16.msra.mxu0 %v1348
        %2677 = vmatprep.subr.bf16.mxu0 %v1351
        %2678 = vmatpush1.bf16.msra.mxu0 %v1350
        %2679 = vmatprep.subr.bf16.mxu0 %v1353
        %2680 = vmatpush1.bf16.msra.mxu0 %v1352
        %2681 = vmatprep.subr.bf16.mxu0 %v1355
        %2682 = vmatpush1.bf16.msra.mxu0 %v1354
        %2683 = vmatprep.subr.bf16.mxu0 %v1357
        %2684 = vmatpush1.bf16.msra.mxu0 %v1356
        %2685 = vmatprep.subr.bf16.mxu0 %v1359
        %2686 = vmatpush1.bf16.msra.mxu0 %v1358
        %2687 = vmatprep.subr.bf16.mxu0 %v1361
        %2688 = vmatpush1.bf16.msra.mxu0 %v1360
        %2689 = vmatprep.subr.bf16.mxu0 %v1363
        %2690 = vmatpush1.bf16.msra.mxu0 %v1362
        %2691 = vmatprep.subr.bf16.mxu0 %v1365
        %2692 = vmatpush1.bf16.msra.mxu0 %v1364
        %2693 = vmatprep.subr.bf16.mxu0 %v1367
        %2694 = vmatpush1.bf16.msra.mxu0 %v1366
        %2695 = vmatprep.mubr.bf16.mxu0 %v1771
        %2696 = vmatmul.mubr.bf16.gmra.mrb[0].mxu0 %v1769
        %v2697 = vpop.f32.mrb[0].mxu0
        %v2698 = vadd.f32 %v2657, %v2697
        %v2699 = vpop.f32.mrb[0].mxu0
        %v2700 = vadd.f32 %v2659, %v2699
        %v2701 = vpop.f32.mrb[0].mxu0
        %v2702 = vpop.f32.mrb[0].mxu0
        %2703 = vdwg.mxu0
        %2704 = vmatprep.subr.bf16.mxu0 %v1369
        %2705 = vmatpush1.bf16.msra.mxu0 %v1368
        %2706 = vmatprep.subr.bf16.mxu0 %v1371
        %2707 = vmatpush1.bf16.msra.mxu0 %v1370
        %2708 = vmatprep.subr.bf16.mxu0 %v1373
        %2709 = vmatpush1.bf16.msra.mxu0 %v1372
        %2710 = vmatprep.subr.bf16.mxu0 %v1375
        %2711 = vmatpush1.bf16.msra.mxu0 %v1374
        %2712 = vmatprep.subr.bf16.mxu0 %v1377
        %2713 = vmatpush1.bf16.msra.mxu0 %v1376
        %2714 = vmatprep.subr.bf16.mxu0 %v1379
        %2715 = vmatpush1.bf16.msra.mxu0 %v1378
        %2716 = vmatprep.subr.bf16.mxu0 %v1381
        %2717 = vmatpush1.bf16.msra.mxu0 %v1380
        %2718 = vmatprep.subr.bf16.mxu0 %v1383
        %2719 = vmatpush1.bf16.msra.mxu0 %v1382
        %2720 = vmatprep.subr.bf16.mxu0 %v1385
        %2721 = vmatpush1.bf16.msra.mxu0 %v1384
        %2722 = vmatprep.subr.bf16.mxu0 %v1387
        %2723 = vmatpush1.bf16.msra.mxu0 %v1386
        %2724 = vmatprep.subr.bf16.mxu0 %v1389
        %2725 = vmatpush1.bf16.msra.mxu0 %v1388
        %2726 = vmatprep.subr.bf16.mxu0 %v1391
        %2727 = vmatpush1.bf16.msra.mxu0 %v1390
        %2728 = vmatprep.subr.bf16.mxu0 %v1393
        %2729 = vmatpush1.bf16.msra.mxu0 %v1392
        %2730 = vmatprep.subr.bf16.mxu0 %v1395
        %2731 = vmatpush1.bf16.msra.mxu0 %v1394
        %2732 = vmatprep.subr.bf16.mxu0 %v1397
        %2733 = vmatpush1.bf16.msra.mxu0 %v1396
        %2734 = vmatprep.subr.bf16.mxu0 %v1399
        %2735 = vmatpush1.bf16.msra.mxu0 %v1398
        %2736 = vmatprep.mubr.bf16.mxu0 %v1809
        %2737 = vmatmul.mubr.bf16.gmra.mrb[0].mxu0 %v1795
        %v2738 = vpop.f32.mrb[0].mxu0
        %v2739 = vadd.f32 %v2698, %v2738
        %v2740 = vpop.f32.mrb[0].mxu0
        %v2741 = vadd.f32 %v2700, %v2740
        %v2742 = vpop.f32.mrb[0].mxu0
        %v2743 = vpop.f32.mrb[0].mxu0
        %2744 = vdwg.mxu0
        %2745 = vmatprep.subr.bf16.mxu0 %v1401
        %2746 = vmatpush1.bf16.msra.mxu0 %v1400
        %2747 = vmatprep.subr.bf16.mxu0 %v1403
        %2748 = vmatpush1.bf16.msra.mxu0 %v1402
        %2749 = vmatprep.subr.bf16.mxu0 %v1405
        %2750 = vmatpush1.bf16.msra.mxu0 %v1404
        %2751 = vmatprep.subr.bf16.mxu0 %v1407
        %2752 = vmatpush1.bf16.msra.mxu0 %v1406
        %2753 = vmatprep.subr.bf16.mxu0 %v1409
        %2754 = vmatpush1.bf16.msra.mxu0 %v1408
        %2755 = vmatprep.subr.bf16.mxu0 %v1411
        %2756 = vmatpush1.bf16.msra.mxu0 %v1410
        %2757 = vmatprep.subr.bf16.mxu0 %v1413
        %2758 = vmatpush1.bf16.msra.mxu0 %v1412
        %2759 = vmatprep.subr.bf16.mxu0 %v1415
        %2760 = vmatpush1.bf16.msra.mxu0 %v1414
        %2761 = vmatprep.subr.bf16.mxu0 %v1417
        %2762 = vmatpush1.bf16.msra.mxu0 %v1416
        %2763 = vmatprep.subr.bf16.mxu0 %v1419
        %2764 = vmatpush1.bf16.msra.mxu0 %v1418
        %2765 = vmatprep.subr.bf16.mxu0 %v1421
        %2766 = vmatpush1.bf16.msra.mxu0 %v1420
        %2767 = vmatprep.subr.bf16.mxu0 %v1423
        %2768 = vmatpush1.bf16.msra.mxu0 %v1422
        %2769 = vmatprep.subr.bf16.mxu0 %v1425
        %2770 = vmatpush1.bf16.msra.mxu0 %v1424
        %2771 = vmatprep.subr.bf16.mxu0 %v1427
        %2772 = vmatpush1.bf16.msra.mxu0 %v1426
        %2773 = vmatprep.subr.bf16.mxu0 %v1429
        %2774 = vmatpush1.bf16.msra.mxu0 %v1428
        %2775 = vmatprep.subr.bf16.mxu0 %v1431
        %2776 = vmatpush1.bf16.msra.mxu0 %v1430
        %2777 = vmatprep.mubr.bf16.mxu0 %v1819
        %2778 = vmatmul.mubr.bf16.gmra.mrb[0].mxu0 %v1817
        %v2779 = vpop.f32.mrb[0].mxu0
        %v2780 = vadd.f32 %v2739, %v2779
        %v2781 = vpop.f32.mrb[0].mxu0
        %v2782 = vadd.f32 %v2741, %v2781
        %v2783 = vpop.f32.mrb[0].mxu0
        %v2784 = vpop.f32.mrb[0].mxu0
        %2785 = vdwg.mxu0
        %2786 = vmatprep.subr.bf16.mxu0 %v1433
        %2787 = vmatpush1.bf16.msra.mxu0 %v1432
        %2788 = vmatprep.subr.bf16.mxu0 %v1435
        %2789 = vmatpush1.bf16.msra.mxu0 %v1434
        %2790 = vmatprep.subr.bf16.mxu0 %v1437
        %2791 = vmatpush1.bf16.msra.mxu0 %v1436
        %2792 = vmatprep.subr.bf16.mxu0 %v1439
        %2793 = vmatpush1.bf16.msra.mxu0 %v1438
        %2794 = vmatprep.subr.bf16.mxu0 %v1441
        %2795 = vmatpush1.bf16.msra.mxu0 %v1440
        %2796 = vmatprep.subr.bf16.mxu0 %v1443
        %2797 = vmatpush1.bf16.msra.mxu0 %v1442
        %2798 = vmatprep.subr.bf16.mxu0 %v1445
        %2799 = vmatpush1.bf16.msra.mxu0 %v1444
        %2800 = vmatprep.subr.bf16.mxu0 %v1447
        %2801 = vmatpush1.bf16.msra.mxu0 %v1446
        %2802 = vmatprep.subr.bf16.mxu0 %v1449
        %2803 = vmatpush1.bf16.msra.mxu0 %v1448
        %2804 = vmatprep.subr.bf16.mxu0 %v1451
        %2805 = vmatpush1.bf16.msra.mxu0 %v1450
        %2806 = vmatprep.subr.bf16.mxu0 %v1453
        %2807 = vmatpush1.bf16.msra.mxu0 %v1452
        %2808 = vmatprep.subr.bf16.mxu0 %v1455
        %2809 = vmatpush1.bf16.msra.mxu0 %v1454
        %2810 = vmatprep.subr.bf16.mxu0 %v1457
        %2811 = vmatpush1.bf16.msra.mxu0 %v1456
        %2812 = vmatprep.subr.bf16.mxu0 %v1459
        %2813 = vmatpush1.bf16.msra.mxu0 %v1458
        %2814 = vmatprep.subr.bf16.mxu0 %v1461
        %2815 = vmatpush1.bf16.msra.mxu0 %v1460
        %2816 = vmatprep.subr.bf16.mxu0 %v1463
        %2817 = vmatpush1.bf16.msra.mxu0 %v1462
        %2818 = vmatprep.mubr.bf16.mxu0 %v1816
        %2819 = vmatmul.mubr.bf16.gmra.mrb[0].mxu0 %v1802
        %v2820 = vpop.f32.mrb[0].mxu0
        %v2821 = vadd.f32 %v2780, %v2820
        %v2822 = vpop.f32.mrb[0].mxu0
        %v2823 = vadd.f32 %v2782, %v2822
        %v2824 = vpop.f32.mrb[0].mxu0
        %v2825 = vpop.f32.mrb[0].mxu0
        %2826 = vdwg.mxu0
        %2827 = vmatprep.subr.bf16.mxu0 %v1465
        %2828 = vmatpush1.bf16.msra.mxu0 %v1464
        %2829 = vmatprep.subr.bf16.mxu0 %v1467
        %2830 = vmatpush1.bf16.msra.mxu0 %v1466
        %2831 = vmatprep.subr.bf16.mxu0 %v1469
        %2832 = vmatpush1.bf16.msra.mxu0 %v1468
        %2833 = vmatprep.subr.bf16.mxu0 %v1471
        %2834 = vmatpush1.bf16.msra.mxu0 %v1470
        %2835 = vmatprep.subr.bf16.mxu0 %v1473
        %2836 = vmatpush1.bf16.msra.mxu0 %v1472
        %2837 = vmatprep.subr.bf16.mxu0 %v1475
        %2838 = vmatpush1.bf16.msra.mxu0 %v1474
        %2839 = vmatprep.subr.bf16.mxu0 %v1477
        %2840 = vmatpush1.bf16.msra.mxu0 %v1476
        %2841 = vmatprep.subr.bf16.mxu0 %v1479
        %2842 = vmatpush1.bf16.msra.mxu0 %v1478
        %2843 = vmatprep.subr.bf16.mxu0 %v1481
        %2844 = vmatpush1.bf16.msra.mxu0 %v1480
        %2845 = vmatprep.subr.bf16.mxu0 %v1483
        %2846 = vmatpush1.bf16.msra.mxu0 %v1482
        %2847 = vmatprep.subr.bf16.mxu0 %v1485
        %2848 = vmatpush1.bf16.msra.mxu0 %v1484
        %2849 = vmatprep.subr.bf16.mxu0 %v1487
        %2850 = vmatpush1.bf16.msra.mxu0 %v1486
        %2851 = vmatprep.subr.bf16.mxu0 %v1489
        %2852 = vmatpush1.bf16.msra.mxu0 %v1488
        %2853 = vmatprep.subr.bf16.mxu0 %v1491
        %2854 = vmatpush1.bf16.msra.mxu0 %v1490
        %2855 = vmatprep.subr.bf16.mxu0 %v1493
        %2856 = vmatpush1.bf16.msra.mxu0 %v1492
        %2857 = vmatprep.subr.bf16.mxu0 %v1495
        %2858 = vmatpush1.bf16.msra.mxu0 %v1494
        %2859 = vmatprep.mubr.bf16.mxu0 %v1820
        %2860 = vmatmul.mubr.bf16.gmra.mrb[0].mxu0 %v1818
        %v2861 = vpop.f32.mrb[0].mxu0
        %v2862 = vadd.f32 %v2821, %v2861
        %v2863 = vpop.f32.mrb[0].mxu0
        %v2864 = vadd.f32 %v2823, %v2863
        %v2865 = vpop.f32.mrb[0].mxu0
        %v2866 = vpop.f32.mrb[0].mxu0
        %2867 = vdwg.mxu0
        %2868 = vmatprep.subr.bf16.mxu0 %v1497
        %2869 = vmatpush1.bf16.msra.mxu0 %v1496
        %2870 = vmatprep.subr.bf16.mxu0 %v1499
        %2871 = vmatpush1.bf16.msra.mxu0 %v1498
        %2872 = vmatprep.subr.bf16.mxu0 %v1501
        %2873 = vmatpush1.bf16.msra.mxu0 %v1500
        %2874 = vmatprep.subr.bf16.mxu0 %v1503
        %2875 = vmatpush1.bf16.msra.mxu0 %v1502
        %2876 = vmatprep.subr.bf16.mxu0 %v1505
        %2877 = vmatpush1.bf16.msra.mxu0 %v1504
        %2878 = vmatprep.subr.bf16.mxu0 %v1507
        %2879 = vmatpush1.bf16.msra.mxu0 %v1506
        %2880 = vmatprep.subr.bf16.mxu0 %v1509
        %2881 = vmatpush1.bf16.msra.mxu0 %v1508
        %2882 = vmatprep.subr.bf16.mxu0 %v1511
        %2883 = vmatpush1.bf16.msra.mxu0 %v1510
        %2884 = vmatprep.subr.bf16.mxu0 0
        %2885 = vmatpush1.bf16.msra.mxu0 0
        %2886 = vmatprep.subr.bf16.mxu0 0
        %2887 = vmatpush1.bf16.msra.mxu0 0
        %2888 = vmatprep.subr.bf16.mxu0 0
        %2889 = vmatpush1.bf16.msra.mxu0 0
        %2890 = vmatprep.subr.bf16.mxu0 0
        %2891 = vmatpush1.bf16.msra.mxu0 0
        %2892 = vmatprep.subr.bf16.mxu0 0
        %2893 = vmatpush1.bf16.msra.mxu0 0
        %2894 = vmatprep.subr.bf16.mxu0 0
        %2895 = vmatpush1.bf16.msra.mxu0 0
        %2896 = vmatprep.subr.bf16.mxu0 0
        %2897 = vmatpush1.bf16.msra.mxu0 0
        %2898 = vmatprep.subr.bf16.mxu0 0
        %2899 = vmatpush1.bf16.msra.mxu0 0
        %2900 = vmatprep.mubr.bf16.mxu0 0
        %2901 = vmatmul.mubr.bf16.gmra.mrb[0].mxu0 %v1834
        %v2902 = vpop.f32.mrb[0].mxu0
        %v2903 = vadd.f32 %v2862, %v2902
        %v2904 = vpop.f32.mrb[0].mxu0
        %v2905 = vadd.f32 %v2864, %v2904
        %v2906 = vpop.f32.mrb[0].mxu0
        %v2907 = vpop.f32.mrb[0].mxu0
        %2908 = vdwg.mxu0
        %v2911 = vcombine.low %v2903, %v2905
        %v2913 = vunpack.c.l.s4 1983009808
        %v2914 = vunpack.c.0.s8 %v2913
        %v2915 = vlaneseq
        %v2916 = vshrl.u32 %v2915, 7
        %v2917 = vsub.s32 %v2914, %v2916
        %v2918 = vrot.slane %v2911, %v2917
        %v2920 = vadd.f32 %v1512, %v2918
        %2921 = vst [vmem:[#allocation2] sm:$0xf] %v2920
        %p2922 = scmp.eq.s32.totalorder %s22, 3
        // Predicated region
        $region69: #{clock_hour_minute.1} parent=43 // pred_check
          %p2923 = pneg %p2922
        $region70: #{clock_hour_minute.1} parent=43 // pred_check_branch
          %2925 = sbr.rel (%p2923) target = $region72
        $region71: #{clock_hour_minute.1} parent=43 // pred_region
          %v2926 = vld [vmem:[#allocation2] sm:$0xf]
          %v2927 = vld [vmem:[#allocation5] sm:$0x3]
          %v2929 = vlaneseq
          %v2930 = vshrl.u32 %v2929, 7
          %v2931 = vsub.s32 0, %v2930
          %v2932 = vrot.slane %v2927, %v2931
          %v2933 = vlaneseq
          %v2934 = vshrl.u32 %v2933, 7
          %v2935 = vsub.s32 1, %v2934
          %v2936 = vrot.slane %v2927, %v2935
          %v2937 = vcombine.low %v2932, %v2936
          %v2939 = vunpack.c.l.s4 1983009808
          %v2940 = vunpack.c.0.s8 %v2939
          %v2941 = vlaneseq
          %v2942 = vshrl.u32 %v2941, 7
          %v2943 = vsub.s32 %v2940, %v2942
          %v2944 = vrot.slane %v2937, %v2943
          %v2946 = vmul.f32 %v2926, %v2944
          %v2947 = vld [vmem:[#allocation7] sm:$0x3]
          %v2949 = vlaneseq
          %v2950 = vshrl.u32 %v2949, 7
          %v2951 = vsub.s32 0, %v2950
          %v2952 = vrot.slane %v2947, %v2951
          %v2953 = vlaneseq
          %v2954 = vshrl.u32 %v2953, 7
          %v2955 = vsub.s32 1, %v2954
          %v2956 = vrot.slane %v2947, %v2955
          %v2957 = vcombine.low %v2952, %v2956
          %v2959 = vunpack.c.l.s4 1983009808
          %v2960 = vunpack.c.0.s8 %v2959
          %v2961 = vlaneseq
          %v2962 = vshrl.u32 %v2961, 7
          %v2963 = vsub.s32 %v2960, %v2962
          %v2964 = vrot.slane %v2957, %v2963
          %v2966 = vadd.f32 %v2946, %v2964
          %v2967 = vmax.f32 %v2966, 0.0
          %v2968 = vld [vmem:[#allocation8] sm:$0xff]
          %v2969 = vld [vmem:[#allocation8 + $0x8] sm:$0xff]
          %v2970 = vld [vmem:[#allocation8 + $0x10] sm:$0xff]
          %v2971 = vld [vmem:[#allocation8 + $0x18] sm:$0xff]
          %v2972 = vld [vmem:[#allocation8 + $0x20] sm:$0xff]
          %v2973 = vld [vmem:[#allocation8 + $0x28] sm:$0xff]
          %v2974 = vld [vmem:[#allocation8 + $0x30] sm:$0xff]
          %v2975 = vld [vmem:[#allocation8 + $0x38] sm:$0xff]
          %v2976 = vld [vmem:[#allocation8 + $0x40] sm:$0xff]
          %v2977 = vld [vmem:[#allocation8 + $0x48] sm:$0xff]
          %v2978 = vld [vmem:[#allocation8 + $0x50] sm:$0xff]
          %v2979 = vld [vmem:[#allocation8 + $0x58] sm:$0xff]
          %v2980 = vld [vmem:[#allocation8 + $0x60] sm:$0xff]
          %v2981 = vld [vmem:[#allocation8 + $0x68] sm:$0xff]
          %v2982 = vld [vmem:[#allocation8 + $0x70] sm:$0xff]
          %v2983 = vld [vmem:[#allocation8 + $0x78] sm:$0xff]
          %v2984 = vld [vmem:[#allocation8 + $0x80] sm:$0xff]
          %v2985 = vld [vmem:[#allocation8 + $0x88] sm:$0xff]
          %v2986 = vld [vmem:[#allocation8 + $0x90] sm:$0xff]
          %v2987 = vld [vmem:[#allocation8 + $0x98] sm:$0xff]
          %v2988 = vld [vmem:[#allocation8 + $0xa0] sm:$0xff]
          %v2989 = vld [vmem:[#allocation8 + $0xa8] sm:$0xff]
          %v2990 = vld [vmem:[#allocation8 + $0xb0] sm:$0xff]
          %v2991 = vld [vmem:[#allocation8 + $0xb8] sm:$0xff]
          %v2992 = vld [vmem:[#allocation8 + $0xc0] sm:$0xff]
          %v2993 = vld [vmem:[#allocation8 + $0xc8] sm:$0xff]
          %v2994 = vld [vmem:[#allocation8 + $0xd0] sm:$0xff]
          %v2995 = vld [vmem:[#allocation8 + $0xd8] sm:$0xff]
          %v2996 = vld [vmem:[#allocation8 + $0xe0] sm:$0xff]
          %v2997 = vld [vmem:[#allocation8 + $0xe8] sm:$0xff]
          %v2998 = vld [vmem:[#allocation8 + $0xf0] sm:$0xff]
          %v2999 = vld [vmem:[#allocation8 + $0xf8] sm:$0xff]
          %v3000 = vld [vmem:[#allocation10] sm:$0x1]
          %v3002 = vlaneseq
          %v3003 = vshrl.u32 %v3002, 7
          %v3004 = vsub.s32 0, %v3003
          %v3005 = vrot.slane %v3000, %v3004
          %v3009 = vunpack.c.l.s4 1983009808
          %v3010 = vunpack.c.0.s8 %v3009
          %v3011 = vlaneseq
          %v3012 = vshrl.u32 %v3011, 7
          %v3013 = vsub.s32 %v3010, %v3012
          %v3014 = vrot.slane %v2967, %v3013
          %v3015 = vcombine.high %v3014, %v3014
          %3018 = vmatprep.subr.mxu0 0.0
          %3019 = vmatpush1.msra.mxu0 %v2968
          %3020 = vmatprep.subr.mxu0 0.0
          %3021 = vmatpush1.msra.mxu0 %v2969
          %3022 = vmatprep.subr.mxu0 0.0
          %3023 = vmatpush1.msra.mxu0 %v2970
          %3024 = vmatprep.subr.mxu0 0.0
          %3025 = vmatpush1.msra.mxu0 %v2971
          %3026 = vmatprep.subr.mxu0 0.0
          %3027 = vmatpush1.msra.mxu0 %v2972
          %3028 = vmatprep.subr.mxu0 0.0
          %3029 = vmatpush1.msra.mxu0 %v2973
          %3030 = vmatprep.subr.mxu0 0.0
          %3031 = vmatpush1.msra.mxu0 %v2974
          %3032 = vmatprep.subr.mxu0 0.0
          %3033 = vmatpush1.msra.mxu0 %v2975
          %3034 = vmatprep.subr.mxu0 0.0
          %3035 = vmatpush1.msra.mxu0 %v2976
          %3036 = vmatprep.subr.mxu0 0.0
          %3037 = vmatpush1.msra.mxu0 %v2977
          %3038 = vmatprep.subr.mxu0 0.0
          %3039 = vmatpush1.msra.mxu0 %v2978
          %3040 = vmatprep.subr.mxu0 0.0
          %3041 = vmatpush1.msra.mxu0 %v2979
          %3042 = vmatprep.subr.mxu0 0.0
          %3043 = vmatpush1.msra.mxu0 %v2980
          %3044 = vmatprep.subr.mxu0 0.0
          %3045 = vmatpush1.msra.mxu0 %v2981
          %3046 = vmatprep.subr.mxu0 0.0
          %3047 = vmatpush1.msra.mxu0 %v2982
          %3048 = vmatprep.subr.mxu0 0.0
          %3049 = vmatpush1.msra.mxu0 %v2983
          %3050 = vmatprep.subr.mxu0 0.0
          %3051 = vmatpush1.msra.mxu0 %v2984
          %3052 = vmatprep.subr.mxu0 0.0
          %3053 = vmatpush1.msra.mxu0 %v2985
          %3054 = vmatprep.subr.mxu0 0.0
          %3055 = vmatpush1.msra.mxu0 %v2986
          %3056 = vmatprep.subr.mxu0 0.0
          %3057 = vmatpush1.msra.mxu0 %v2987
          %3058 = vmatprep.subr.mxu0 0.0
          %3059 = vmatpush1.msra.mxu0 %v2988
          %3060 = vmatprep.subr.mxu0 0.0
          %3061 = vmatpush1.msra.mxu0 %v2989
          %3062 = vmatprep.subr.mxu0 0.0
          %3063 = vmatpush1.msra.mxu0 %v2990
          %3064 = vmatprep.subr.mxu0 0.0
          %3065 = vmatpush1.msra.mxu0 %v2991
          %3066 = vmatprep.subr.mxu0 0.0
          %3067 = vmatpush1.msra.mxu0 %v2992
          %3068 = vmatprep.subr.mxu0 0.0
          %3069 = vmatpush1.msra.mxu0 %v2993
          %3070 = vmatprep.subr.mxu0 0.0
          %3071 = vmatpush1.msra.mxu0 %v2994
          %3072 = vmatprep.subr.mxu0 0.0
          %3073 = vmatpush1.msra.mxu0 %v2995
          %3074 = vmatprep.subr.mxu0 0.0
          %3075 = vmatpush1.msra.mxu0 %v2996
          %3076 = vmatprep.subr.mxu0 0.0
          %3077 = vmatpush1.msra.mxu0 %v2997
          %3078 = vmatprep.subr.mxu0 0.0
          %3079 = vmatpush1.msra.mxu0 %v2998
          %3080 = vmatprep.subr.mxu0 0.0
          %3081 = vmatpush1.msra.mxu0 %v2999
          %3082 = vmatprep.mubr.f32.mxu0 %v3015
          %3083 = vmatmul.mubr.f32.gmra.mrb[0].mxu0 %v3014
          %v3084 = vpop.f32.mrb[0].mxu0
          %v3085 = vadd.f32 %v3005, %v3084
          %v3086 = vpop.f32.mrb[0].mxu0
          %3087 = vdwg.mxu0
          %v3088 = vand.u32 2147483647, %v2967
          %v3091 = vunpack.c.l.s4 1983009808
          %v3092 = vunpack.c.0.s8 %v3091
          %v3093 = vlaneseq
          %v3094 = vshrl.u32 %v3093, 7
          %v3095 = vsub.s32 %v3092, %v3094
          %v3096 = vrot.slane %v3088, %v3095
          %v3097 = vcombine.high %v3096, %v3096
          %vm3100 = vcmask 1041408
          %v3101 = vsel %vm3100, %v3096, 0.0
          %v3102 = vsel %vm3100, %v3097, 0.0
          %v3103 = vadd.f32 %v3101, %v3102
          %3104 = vadd.xlane.f32.xlu0 %v3103
          %v3105 = vpop.xlane.xlu0 %3104
          %v3106 = vrot.slane %v3105, 4
          %v3107 = vadd.f32 %v3105, %v3106
          %v3108 = vrot.slane %v3107, 2
          %v3109 = vadd.f32 %v3107, %v3108
          %v3110 = vrot.slane %v3109, 1
          %v3111 = vadd.f32 %v3109, %v3110
          %s3112 = vtos %v3111
          %v3113 = vand.u32 2147483647, %v3085
          %v3114 = vsel %vm3100, %v3113, 0.0
          %3115 = vadd.xlane.f32.xlu0 %v3114
          %v3116 = vpop.xlane.xlu0 %3115
          %v3117 = vrot.slane %v3116, 4
          %v3118 = vadd.f32 %v3116, %v3117
          %v3119 = vrot.slane %v3118, 2
          %v3120 = vadd.f32 %v3118, %v3119
          %v3121 = vrot.slane %v3120, 1
          %v3122 = vadd.f32 %v3120, %v3121
          %s3123 = vtos %v3122
          %s3124 = sadd.f32 %s3112, %s3123
          %s3125 = smul.f32 %s3124, 0.0019455253
          %v3126 = vlaneseq
          %v3127 = vand.u32 %v3126, 127
          %vm3128 = vcmp.eq.s32.totalorder %v3127, 13
          %v3129 = vstv %s3125
          %v3130 = vsel %vm3128, %v3129, %v3085
          %3131 = vst [vmem:[%s6] sm:$0x3] %v3130
        $region72: #{clock_hour_minute.1} parent=43 // pred_fallthru
          _
        // Predicated region
        $region73: #{clock_hour_minute.1} parent=43 // pred_check
          %p3132 = pneg %p171
        $region74: #{clock_hour_minute.1} parent=43 // pred_check_branch
          %3134 = sbr.rel (%p3132) target = $region76
        $region75: #{clock_hour_minute.1} parent=43 // pred_region
          _
        $region76: #{clock_hour_minute.1} parent=43 // pred_fallthru
          _
        // Predicated region
        $region77: #{clock_hour_minute.1} parent=43 // pred_check
          %p3135 = pneg %p171
        $region78: #{clock_hour_minute.1} parent=43 // pred_check_branch
          %3137 = sbr.rel (%p3135) target = $region80
        $region79: #{clock_hour_minute.1} parent=43 // pred_region
          _
        $region80: #{clock_hour_minute.1} parent=43 // pred_fallthru
          _
      $region44: #{clock_hour_minute.1} parent=5 // pred_fallthru
        _
      %p3138 = scmp.le.s32.totalorder 2, %s17
      // Predicated region
      $region81: #{clock_hour_minute.1} parent=5 // pred_check
        %p3139 = pneg %p3138
      $region82: #{clock_hour_minute.1} parent=5 // pred_check_branch
        %3141 = sbr.rel (%p3139) target = $region84
      $region83: #{clock_hour_minute.1} parent=5 // pred_region
        %s3142 = ssub.s32 %s17, 2
      $region84: #{clock_hour_minute.1} parent=5 // pred_fallthru
        _
    $region6: #{clock_hour_minute.1} parent=1 // loop_footer
      %s21 = sadd.s32 1, %s17
    $region7: #{clock_hour_minute.1} parent=1 // loop_footer_branch
      %16 = sbr.rel target = $region3
    $region8: #{clock_hour_minute.1} parent=1 // loop_exit
      _
    %3143 = vsyncpa [#allocation4], 1
    %s3144 = scalar_lea.sflag [#allocation4], 1
    %3145 = vsyncpa %s3144, 1
    %3146 = vsyncpa [#allocation6], 1
    %3147 = vsyncpa [#allocation9], 1

</llo_original>
